<compile_context>
chip_gen: v5e
topology: v5e:2x2
jax: 0.10.0
libtpu: 0.0.40
codegen_flags: <defaults>
</compile_context>

<pallas_src>
import functools
import math

import jax
import jax.numpy as jnp
from jax.experimental import pallas as pl
from jax.experimental.pallas import tpu as pltpu


def _round_up(x, m):
    return (x + m - 1) // m * m


def _resolve_act(name):
    if hasattr(jnp, name):
        return getattr(jnp, name)
    if hasattr(jax.nn, name):
        return getattr(jax.nn, name)
    raise ValueError(f"unsupported activation: {name!r}")


# -----------------------------------------------------------------------------
# Kernel
# -----------------------------------------------------------------------------
def _nn1_kernel(x_ref, rffT_ref, w_ref, b_ref, woutT_ref, bout_ref, o_ref, *,
                act, n_layers, d_hidden, d_hidden_pad, matmul_dtype, encode):
    if encode:
        # Random-Fourier-feature encoding fused into the kernel (f32 phases).
        x = x_ref[...].astype(jnp.float32)                          # (tm, Dip)
        proj = (2.0 * math.pi) * jnp.dot(
            x, rffT_ref[...], preferred_element_type=jnp.float32)   # (tm, E)
        pieces = [jnp.cos(proj), jnp.sin(proj)]
        if d_hidden_pad > d_hidden:
            pieces.append(jnp.zeros(
                (proj.shape[0], d_hidden_pad - d_hidden), jnp.float32))
        h = jnp.concatenate(pieces, axis=-1)                        # (tm, Hp)
    else:
        h = x_ref[...].astype(jnp.float32)                          # (tm, Hp)

    # Hidden layers: bf16 (or f32) MXU operands, f32 accumulation, f32 act.
    for l in range(n_layers):                                       # static unroll
        acc = jnp.dot(h.astype(matmul_dtype), w_ref[l],
                      preferred_element_type=jnp.float32)           # (tm, Hp) f32
        h = act(acc + b_ref[l])                                     # bias (1, Hp)

    # Output head straight into a lane-dense (tm, Dp) block.
    y = jnp.dot(h.astype(matmul_dtype), woutT_ref[...],
                preferred_element_type=jnp.float32) + bout_ref[...]
    o_ref[...] = y.astype(o_ref.dtype)


# -----------------------------------------------------------------------------
# Wrapper
# -----------------------------------------------------------------------------
def nn1_forward(x, params, *, act_fn="tanh", tm=256,
                matmul_dtype=jnp.bfloat16, fuse_encoding=True, out_dtype=None):
    """NN1 forward.  x: (batch, d_in) float32."""
    B, d_in = x.shape
    rff_b = params["rff_b"]                 # (E, d_in), sampled N(0, sigma^2)
    ws = params["w"]                        # (L, H, H), torch (out, in) layout
    bs = params["b"]                        # (L, H)
    w_out = params["w_out"]                 # (d_out, H)
    b_out = params["b_out"]                 # (d_out,)

    E, d_in_w = rff_b.shape
    L, H, H2 = ws.shape
    d_out = w_out.shape[0]
    assert d_in_w == d_in and H2 == H and 2 * E == H

    act = _resolve_act(act_fn)
    out_dtype = out_dtype or x.dtype

    # ---- lane-dense feature padding (multiples of 128 on the lane axis) ----
    Hp = _round_up(H, 128)                  # hidden width inside the kernel
    Dp = _round_up(d_out, 128)              # output width inside the kernel

    w_stack = jnp.zeros((L, Hp, Hp), matmul_dtype).at[:, :H, :H].set(
        jnp.transpose(ws, (0, 2, 1)).astype(matmul_dtype))          # stacked W^T
    b_stack = jnp.zeros((L, 1, Hp), jnp.float32).at[:, 0, :H].set(
        bs.astype(jnp.float32))
    w_outT = jnp.zeros((Hp, Dp), matmul_dtype).at[:H, :d_out].set(
        w_out.T.astype(matmul_dtype))
    b_out_p = jnp.zeros((1, Dp), jnp.float32).at[0, :d_out].set(
        b_out.astype(jnp.float32))

    # ---- batch tiling: large row tile for the MXU M dim, pad the remainder ----
    tm = max(8, min(tm, _round_up(B, 8)))
    tm = _round_up(tm, 8)
    B_pad = _round_up(B, tm)
    # NOTE(v7x): with 2 TensorCores, keep B/tm >= 2 (ideally even) at real
    # batch sizes so the ("parallel",) batch grid occupies both cores.

    if fuse_encoding:
        Dip = _round_up(d_in, 8)            # pad the tiny coord dim for clean tiles
        x_in = jnp.pad(x.astype(jnp.float32),
                       ((0, B_pad - B), (0, Dip - d_in)))
        rff_in = jnp.zeros((Dip, E), jnp.float32).at[:d_in, :].set(
            rff_b.T.astype(jnp.float32))
        x_spec = pl.BlockSpec((tm, Dip), lambda i: (i, 0))
    else:
        # Fallback: RFF encoding done by XLA, kernel runs only the MLP stack.
        proj = 2.0 * jnp.pi * jnp.dot(x.astype(jnp.float32), rff_b.T)
        h0 = jnp.concatenate([jnp.cos(proj), jnp.sin(proj)], axis=-1)
        x_in = jnp.pad(h0, ((0, B_pad - B), (0, Hp - H)))
        rff_in = jnp.zeros((8, E), jnp.float32)      # unused placeholder
        x_spec = pl.BlockSpec((tm, Hp), lambda i: (i, 0))

    def _const_spec(shape):
        return pl.BlockSpec(shape, lambda i, _s=shape: (0,) * len(_s))

    kernel = functools.partial(
        _nn1_kernel, act=act, n_layers=L, d_hidden=H, d_hidden_pad=Hp,
        matmul_dtype=matmul_dtype, encode=fuse_encoding)

    # Explicit VMEM budget: weights stay on one block (constant index_map) but
    # the pipeline still double-buffers inputs; leave headroom for row tiles
    # plus the f32 intermediates the body materializes.
    wbytes = jnp.dtype(matmul_dtype).itemsize
    est = (2 * tm * x_in.shape[1] * 4 + 2 * tm * Dp * 4
           + 2 * (L * Hp * Hp + Hp * Dp) * wbytes
           + 2 * (rff_in.size + L * Hp + Dp) * 4
           + 4 * tm * Hp * 4)
    vmem_limit = int(min(64 * 2 ** 20, max(32 * 2 ** 20, 2 * est)))

    y_pad = pl.pallas_call(
        kernel,
        out_shape=jax.ShapeDtypeStruct((B_pad, Dp), out_dtype),
        grid_spec=pltpu.PrefetchScalarGridSpec(
            num_scalar_prefetch=0,
            grid=(B_pad // tm,),
            in_specs=[x_spec,
                      _const_spec(rff_in.shape),
                      _const_spec((L, Hp, Hp)),
                      _const_spec((L, 1, Hp)),
                      _const_spec((Hp, Dp)),
                      _const_spec((1, Dp))],
            out_specs=pl.BlockSpec((tm, Dp), lambda i: (i, 0)),
        ),
        compiler_params=pltpu.CompilerParams(
            dimension_semantics=("parallel",),
            vmem_limit_bytes=vmem_limit),
    )(x_in, rff_in, w_stack, b_stack, w_outT, b_out_p)

    return y_pad[:B, :d_out]


# -----------------------------------------------------------------------------
# Init (mirrors NN1.__init__) and pure-JAX reference
# -----------------------------------------------------------------------------
def init_nn1_params(key, neurons_per_layer, n_layers, rff_std):
    """Weights ~ N(0, 1/d_hidden), biases = 0, GaussianEncoding B ~ N(0, sigma^2)."""
    d_in, d_hidden, d_out = (int(v) for v in neurons_per_layer)
    assert d_hidden % 2 == 0
    k_rff, k_w, k_out = jax.random.split(key, 3)
    std = math.sqrt(1.0 / d_hidden)
    wkeys = jax.random.split(k_w, n_layers)
    w = jnp.stack([jax.random.normal(k, (d_hidden, d_hidden), jnp.float32) * std
                   for k in wkeys])
    return {
        "rff_b": jax.random.normal(k_rff, (d_hidden // 2, d_in),
                                   jnp.float32) * rff_std,
        "w": w,
        "b": jnp.zeros((n_layers, d_hidden), jnp.float32),
        "w_out": jax.random.normal(k_out, (d_out, d_hidden), jnp.float32) * std,
        "b_out": jnp.zeros((d_out,), jnp.float32),
    }


def nn1_forward_ref(x, params, act_fn="tanh"):
    act = _resolve_act(act_fn)
    hi = jax.lax.Precision.HIGHEST
    proj = 2.0 * jnp.pi * jnp.dot(x, params["rff_b"].T, precision=hi)
    h = jnp.concatenate([jnp.cos(proj), jnp.sin(proj)], axis=-1)
    for l in range(params["w"].shape[0]):
        h = act(jnp.dot(h, params["w"][l].T, precision=hi) + params["b"][l])
    return jnp.dot(h, params["w_out"].T, precision=hi) + params["b_out"]


if __name__ == "__main__":
    key = jax.random.PRNGKey(0)
    k_x, k_p, kb1, kb2 = jax.random.split(key, 4)

    # Small 2-D coordinate MLP: d_in=2, d_hidden=128 (already lane-dense),
    # d_out=3, 3 hidden layers, tanh activation.
    d_in, d_hidden, d_out = 2, 128, 3
    n_layers, rff_std, act_fn = 3, 1.0, "tanh"
    batch = 100                       # not a multiple of 8 -> exercises padding

    params = init_nn1_params(k_p, (d_in, d_hidden, d_out), n_layers, rff_std)
    # NN1 zero-initializes biases; use small random ones so the bias path in
    # the kernel is actually exercised by the correctness check.
    params["b"] = 0.1 * jax.random.normal(kb1, params["b"].shape, jnp.float32)
    params["b_out"] = 0.1 * jax.random.normal(kb2, params["b_out"].shape,
                                              jnp.float32)

    x = jax.random.normal(k_x, (batch, d_in), jnp.float32)

    try:
        y = jax.block_until_ready(nn1_forward(x, params, act_fn=act_fn))
    except Exception:
        # TODO(synk): if in-kernel sin/cos lowering is unavailable on this
        # toolchain, fall back to XLA-side RFF encoding + Pallas MLP stack.
        y = jax.block_until_ready(
            nn1_forward(x, params, act_fn=act_fn, fuse_encoding=False))

    ref = nn1_forward_ref(x, params, act_fn=act_fn)
    assert y.shape == (batch, d_out)
    err = jnp.max(jnp.abs(y - ref))
    # bf16 MXU operands with f32 accumulation -> small drift vs f32 reference.
    assert jnp.allclose(y, ref, atol=5e-2, rtol=5e-2), f"max abs err {err}"

    print("KERNEL_OK")
</pallas_src>

<mosaic_0001>
module attributes {stable_mosaic.version = 11 : i64} {
  func.func @_nn1_kernel(%arg0: i32, %arg1: memref<104x8xf32, #tpu.memory_space<vmem>>, %arg2: memref<8x64xf32, #tpu.memory_space<vmem>>, %arg3: memref<3x128x128xbf16, #tpu.memory_space<vmem>>, %arg4: memref<3x1x128xf32, #tpu.memory_space<vmem>>, %arg5: memref<128x128xbf16, #tpu.memory_space<vmem>>, %arg6: memref<1x128xf32, #tpu.memory_space<vmem>>, %arg7: memref<104x128xf32, #tpu.memory_space<vmem>>) attributes {dimension_semantics = [#tpu.dimension_semantics<parallel>], iteration_bounds = array<i64: 1>, scalar_prefetch = 0 : i64, scratch_operands = 0 : i64, tpu.core_type = #tpu.core_type<tc>, window_params = [{transform_indices = @transform_0, window_bounds = array<i64: 104, 8>}, {pipeline_mode = #tpu.pipeline_mode<synchronous>, transform_indices = @transform_1, window_bounds = array<i64: 8, 64>}, {pipeline_mode = #tpu.pipeline_mode<synchronous>, transform_indices = @transform_2, window_bounds = array<i64: 3, 128, 128>}, {pipeline_mode = #tpu.pipeline_mode<synchronous>, transform_indices = @transform_3, window_bounds = array<i64: 3, 1, 128>}, {pipeline_mode = #tpu.pipeline_mode<synchronous>, transform_indices = @transform_4, window_bounds = array<i64: 128, 128>}, {pipeline_mode = #tpu.pipeline_mode<synchronous>, transform_indices = @transform_5, window_bounds = array<i64: 1, 128>}, {transform_indices = @transform_6, window_bounds = array<i64: 104, 128>}]} {
    %c0 = arith.constant 0 : index
    %c0_0 = arith.constant 0 : index
    %0 = vector.load %arg1[%c0, %c0_0] : memref<104x8xf32, #tpu.memory_space<vmem>>, vector<104x8xf32>
    %c0_1 = arith.constant 0 : index
    %c0_2 = arith.constant 0 : index
    %1 = vector.load %arg2[%c0_1, %c0_2] : memref<8x64xf32, #tpu.memory_space<vmem>>, vector<8x64xf32>
    %cst = arith.constant dense<0.000000e+00> : vector<104x64xf32>
    %2 = tpu.matmul %0, %1, %cst {dimension_numbers = #tpu.dot_dimension_numbers<[1], [0], [0], [1], [0, 0, 1, 1], [], []>} : vector<104x8xf32>, vector<8x64xf32>, vector<104x64xf32> -> vector<104x64xf32>
    %cst_3 = arith.constant 6.28318548 : f32
    %3 = vector.broadcast %cst_3 : f32 to vector<104x64xf32>
    %4 = arith.mulf %3, %2 : vector<104x64xf32>
    %5 = math.cos %4 : vector<104x64xf32>
    %6 = math.sin %4 : vector<104x64xf32>
    %7 = tpu.concatenate %5, %6 in 1 : vector<104x64xf32>, vector<104x64xf32> -> vector<104x128xf32>
    %8 = arith.truncf %7 : vector<104x128xf32> to vector<104x128xbf16>
    %c0_4 = arith.constant 0 : index
    %c0_5 = arith.constant 0 : index
    %c0_6 = arith.constant 0 : index
    %9 = vector.load %arg3[%c0_4, %c0_5, %c0_6] : memref<3x128x128xbf16, #tpu.memory_space<vmem>>, vector<1x128x128xbf16>
    %10 = vector.shape_cast %9 : vector<1x128x128xbf16> to vector<128x128xbf16>
    %cst_7 = arith.constant dense<0.000000e+00> : vector<104x128xf32>
    %11 = tpu.matmul %8, %10, %cst_7 {dimension_numbers = #tpu.dot_dimension_numbers<[1], [0], [0], [1], [0, 0, 1, 1], [], []>} : vector<104x128xbf16>, vector<128x128xbf16>, vector<104x128xf32> -> vector<104x128xf32>
    %c0_8 = arith.constant 0 : index
    %c0_9 = arith.constant 0 : index
    %c0_10 = arith.constant 0 : index
    %12 = vector.load %arg4[%c0_8, %c0_9, %c0_10] : memref<3x1x128xf32, #tpu.memory_space<vmem>>, vector<1x1x128xf32>
    %13 = vector.shape_cast %12 : vector<1x1x128xf32> to vector<1x128xf32>
    %14 = vector.broadcast %13 : vector<1x128xf32> to vector<104x128xf32>
    %15 = arith.addf %11, %14 : vector<104x128xf32>
    %16 = math.tanh %15 : vector<104x128xf32>
    %17 = arith.truncf %16 : vector<104x128xf32> to vector<104x128xbf16>
    %c1 = arith.constant 1 : index
    %c0_11 = arith.constant 0 : index
    %c0_12 = arith.constant 0 : index
    %18 = vector.load %arg3[%c1, %c0_11, %c0_12] : memref<3x128x128xbf16, #tpu.memory_space<vmem>>, vector<1x128x128xbf16>
    %19 = vector.shape_cast %18 : vector<1x128x128xbf16> to vector<128x128xbf16>
    %cst_13 = arith.constant dense<0.000000e+00> : vector<104x128xf32>
    %20 = tpu.matmul %17, %19, %cst_13 {dimension_numbers = #tpu.dot_dimension_numbers<[1], [0], [0], [1], [0, 0, 1, 1], [], []>} : vector<104x128xbf16>, vector<128x128xbf16>, vector<104x128xf32> -> vector<104x128xf32>
    %c1_14 = arith.constant 1 : index
    %c0_15 = arith.constant 0 : index
    %c0_16 = arith.constant 0 : index
    %21 = vector.load %arg4[%c1_14, %c0_15, %c0_16] : memref<3x1x128xf32, #tpu.memory_space<vmem>>, vector<1x1x128xf32>
    %22 = vector.shape_cast %21 : vector<1x1x128xf32> to vector<1x128xf32>
    %23 = vector.broadcast %22 : vector<1x128xf32> to vector<104x128xf32>
    %24 = arith.addf %20, %23 : vector<104x128xf32>
    %25 = math.tanh %24 : vector<104x128xf32>
    %26 = arith.truncf %25 : vector<104x128xf32> to vector<104x128xbf16>
    %c2 = arith.constant 2 : index
    %c0_17 = arith.constant 0 : index
    %c0_18 = arith.constant 0 : index
    %27 = vector.load %arg3[%c2, %c0_17, %c0_18] : memref<3x128x128xbf16, #tpu.memory_space<vmem>>, vector<1x128x128xbf16>
    %28 = vector.shape_cast %27 : vector<1x128x128xbf16> to vector<128x128xbf16>
    %cst_19 = arith.constant dense<0.000000e+00> : vector<104x128xf32>
    %29 = tpu.matmul %26, %28, %cst_19 {dimension_numbers = #tpu.dot_dimension_numbers<[1], [0], [0], [1], [0, 0, 1, 1], [], []>} : vector<104x128xbf16>, vector<128x128xbf16>, vector<104x128xf32> -> vector<104x128xf32>
    %c2_20 = arith.constant 2 : index
    %c0_21 = arith.constant 0 : index
    %c0_22 = arith.constant 0 : index
    %30 = vector.load %arg4[%c2_20, %c0_21, %c0_22] : memref<3x1x128xf32, #tpu.memory_space<vmem>>, vector<1x1x128xf32>
    %31 = vector.shape_cast %30 : vector<1x1x128xf32> to vector<1x128xf32>
    %32 = vector.broadcast %31 : vector<1x128xf32> to vector<104x128xf32>
    %33 = arith.addf %29, %32 : vector<104x128xf32>
    %34 = math.tanh %33 : vector<104x128xf32>
    %35 = arith.truncf %34 : vector<104x128xf32> to vector<104x128xbf16>
    %c0_23 = arith.constant 0 : index
    %c0_24 = arith.constant 0 : index
    %36 = vector.load %arg5[%c0_23, %c0_24] : memref<128x128xbf16, #tpu.memory_space<vmem>>, vector<128x128xbf16>
    %cst_25 = arith.constant dense<0.000000e+00> : vector<104x128xf32>
    %37 = tpu.matmul %35, %36, %cst_25 {dimension_numbers = #tpu.dot_dimension_numbers<[1], [0], [0], [1], [0, 0, 1, 1], [], []>} : vector<104x128xbf16>, vector<128x128xbf16>, vector<104x128xf32> -> vector<104x128xf32>
    %c0_26 = arith.constant 0 : index
    %c0_27 = arith.constant 0 : index
    %38 = vector.load %arg6[%c0_26, %c0_27] : memref<1x128xf32, #tpu.memory_space<vmem>>, vector<1x128xf32>
    %39 = vector.broadcast %38 : vector<1x128xf32> to vector<104x128xf32>
    %40 = arith.addf %37, %39 : vector<104x128xf32>
    %c0_28 = arith.constant 0 : index
    %c0_29 = arith.constant 0 : index
    %41 = vector.load %arg7[%c0_28, %c0_29] : memref<104x128xf32, #tpu.memory_space<vmem>>, vector<104x128xf32>
    tpu.vector_store %arg7[%c0_28, %c0_29], %40 {strides = array<i32>} : memref<104x128xf32, #tpu.memory_space<vmem>>, vector<104x128xf32>,
    return
  }
  func.func @transform_0(%arg0: i32) -> (i32, i32) {
    %c0_i32 = arith.constant 0 : i32
    %c0_i32_0 = arith.constant 0 : i32
    return %arg0, %c0_i32 : i32, i32
  }
  func.func @transform_1(%arg0: i32) -> (i32, i32) {
    %c0_i32 = arith.constant 0 : i32
    %c0_i32_0 = arith.constant 0 : i32
    %c0_i32_1 = arith.constant 0 : i32
    return %c0_i32, %c0_i32_0 : i32, i32
  }
  func.func @transform_2(%arg0: i32) -> (i32, i32, i32) {
    %c0_i32 = arith.constant 0 : i32
    %c0_i32_0 = arith.constant 0 : i32
    %c0_i32_1 = arith.constant 0 : i32
    %c0_i32_2 = arith.constant 0 : i32
    return %c0_i32, %c0_i32_0, %c0_i32_1 : i32, i32, i32
  }
  func.func @transform_3(%arg0: i32) -> (i32, i32, i32) {
    %c0_i32 = arith.constant 0 : i32
    %c0_i32_0 = arith.constant 0 : i32
    %c0_i32_1 = arith.constant 0 : i32
    %c0_i32_2 = arith.constant 0 : i32
    return %c0_i32, %c0_i32_0, %c0_i32_1 : i32, i32, i32
  }
  func.func @transform_4(%arg0: i32) -> (i32, i32) {
    %c0_i32 = arith.constant 0 : i32
    %c0_i32_0 = arith.constant 0 : i32
    %c0_i32_1 = arith.constant 0 : i32
    return %c0_i32, %c0_i32_0 : i32, i32
  }
  func.func @transform_5(%arg0: i32) -> (i32, i32) {
    %c0_i32 = arith.constant 0 : i32
    %c0_i32_0 = arith.constant 0 : i32
    %c0_i32_1 = arith.constant 0 : i32
    return %c0_i32, %c0_i32_0 : i32, i32
  }
  func.func @transform_6(%arg0: i32) -> (i32, i32) {
    %c0_i32 = arith.constant 0 : i32
    %c0_i32_0 = arith.constant 0 : i32
    return %arg0, %c0_i32 : i32, i32
  }
}

module attributes {stable_mosaic.version = 11 : i64} {
  func.func @_nn1_kernel(%arg0: i32, %arg1: memref<104x128xf32, #tpu.memory_space<vmem>>, %arg2: memref<8x64xf32, #tpu.memory_space<vmem>>, %arg3: memref<3x128x128xbf16, #tpu.memory_space<vmem>>, %arg4: memref<3x1x128xf32, #tpu.memory_space<vmem>>, %arg5: memref<128x128xbf16, #tpu.memory_space<vmem>>, %arg6: memref<1x128xf32, #tpu.memory_space<vmem>>, %arg7: memref<104x128xf32, #tpu.memory_space<vmem>>) attributes {dimension_semantics = [#tpu.dimension_semantics<parallel>], iteration_bounds = array<i64: 1>, scalar_prefetch = 0 : i64, scratch_operands = 0 : i64, tpu.core_type = #tpu.core_type<tc>, window_params = [{transform_indices = @transform_0, window_bounds = array<i64: 104, 128>}, {pipeline_mode = #tpu.pipeline_mode<synchronous>, transform_indices = @transform_1, window_bounds = array<i64: 8, 64>}, {pipeline_mode = #tpu.pipeline_mode<synchronous>, transform_indices = @transform_2, window_bounds = array<i64: 3, 128, 128>}, {pipeline_mode = #tpu.pipeline_mode<synchronous>, transform_indices = @transform_3, window_bounds = array<i64: 3, 1, 128>}, {pipeline_mode = #tpu.pipeline_mode<synchronous>, transform_indices = @transform_4, window_bounds = array<i64: 128, 128>}, {pipeline_mode = #tpu.pipeline_mode<synchronous>, transform_indices = @transform_5, window_bounds = array<i64: 1, 128>}, {transform_indices = @transform_6, window_bounds = array<i64: 104, 128>}]} {
    %c0 = arith.constant 0 : index
    %c0_0 = arith.constant 0 : index
    %0 = vector.load %arg1[%c0, %c0_0] : memref<104x128xf32, #tpu.memory_space<vmem>>, vector<104x128xf32>
    %1 = arith.truncf %0 : vector<104x128xf32> to vector<104x128xbf16>
    %c0_1 = arith.constant 0 : index
    %c0_2 = arith.constant 0 : index
    %c0_3 = arith.constant 0 : index
    %2 = vector.load %arg3[%c0_1, %c0_2, %c0_3] : memref<3x128x128xbf16, #tpu.memory_space<vmem>>, vector<1x128x128xbf16>
    %3 = vector.shape_cast %2 : vector<1x128x128xbf16> to vector<128x128xbf16>
    %cst = arith.constant dense<0.000000e+00> : vector<104x128xf32>
    %4 = tpu.matmul %1, %3, %cst {dimension_numbers = #tpu.dot_dimension_numbers<[1], [0], [0], [1], [0, 0, 1, 1], [], []>} : vector<104x128xbf16>, vector<128x128xbf16>, vector<104x128xf32> -> vector<104x128xf32>
    %c0_4 = arith.constant 0 : index
    %c0_5 = arith.constant 0 : index
    %c0_6 = arith.constant 0 : index
    %5 = vector.load %arg4[%c0_4, %c0_5, %c0_6] : memref<3x1x128xf32, #tpu.memory_space<vmem>>, vector<1x1x128xf32>
    %6 = vector.shape_cast %5 : vector<1x1x128xf32> to vector<1x128xf32>
    %7 = vector.broadcast %6 : vector<1x128xf32> to vector<104x128xf32>
    %8 = arith.addf %4, %7 : vector<104x128xf32>
    %9 = math.tanh %8 : vector<104x128xf32>
    %10 = arith.truncf %9 : vector<104x128xf32> to vector<104x128xbf16>
    %c1 = arith.constant 1 : index
    %c0_7 = arith.constant 0 : index
    %c0_8 = arith.constant 0 : index
    %11 = vector.load %arg3[%c1, %c0_7, %c0_8] : memref<3x128x128xbf16, #tpu.memory_space<vmem>>, vector<1x128x128xbf16>
    %12 = vector.shape_cast %11 : vector<1x128x128xbf16> to vector<128x128xbf16>
    %cst_9 = arith.constant dense<0.000000e+00> : vector<104x128xf32>
    %13 = tpu.matmul %10, %12, %cst_9 {dimension_numbers = #tpu.dot_dimension_numbers<[1], [0], [0], [1], [0, 0, 1, 1], [], []>} : vector<104x128xbf16>, vector<128x128xbf16>, vector<104x128xf32> -> vector<104x128xf32>
    %c1_10 = arith.constant 1 : index
    %c0_11 = arith.constant 0 : index
    %c0_12 = arith.constant 0 : index
    %14 = vector.load %arg4[%c1_10, %c0_11, %c0_12] : memref<3x1x128xf32, #tpu.memory_space<vmem>>, vector<1x1x128xf32>
    %15 = vector.shape_cast %14 : vector<1x1x128xf32> to vector<1x128xf32>
    %16 = vector.broadcast %15 : vector<1x128xf32> to vector<104x128xf32>
    %17 = arith.addf %13, %16 : vector<104x128xf32>
    %18 = math.tanh %17 : vector<104x128xf32>
    %19 = arith.truncf %18 : vector<104x128xf32> to vector<104x128xbf16>
    %c2 = arith.constant 2 : index
    %c0_13 = arith.constant 0 : index
    %c0_14 = arith.constant 0 : index
    %20 = vector.load %arg3[%c2, %c0_13, %c0_14] : memref<3x128x128xbf16, #tpu.memory_space<vmem>>, vector<1x128x128xbf16>
    %21 = vector.shape_cast %20 : vector<1x128x128xbf16> to vector<128x128xbf16>
    %cst_15 = arith.constant dense<0.000000e+00> : vector<104x128xf32>
    %22 = tpu.matmul %19, %21, %cst_15 {dimension_numbers = #tpu.dot_dimension_numbers<[1], [0], [0], [1], [0, 0, 1, 1], [], []>} : vector<104x128xbf16>, vector<128x128xbf16>, vector<104x128xf32> -> vector<104x128xf32>
    %c2_16 = arith.constant 2 : index
    %c0_17 = arith.constant 0 : index
    %c0_18 = arith.constant 0 : index
    %23 = vector.load %arg4[%c2_16, %c0_17, %c0_18] : memref<3x1x128xf32, #tpu.memory_space<vmem>>, vector<1x1x128xf32>
    %24 = vector.shape_cast %23 : vector<1x1x128xf32> to vector<1x128xf32>
    %25 = vector.broadcast %24 : vector<1x128xf32> to vector<104x128xf32>
    %26 = arith.addf %22, %25 : vector<104x128xf32>
    %27 = math.tanh %26 : vector<104x128xf32>
    %28 = arith.truncf %27 : vector<104x128xf32> to vector<104x128xbf16>
    %c0_19 = arith.constant 0 : index
    %c0_20 = arith.constant 0 : index
    %29 = vector.load %arg5[%c0_19, %c0_20] : memref<128x128xbf16, #tpu.memory_space<vmem>>, vector<128x128xbf16>
    %cst_21 = arith.constant dense<0.000000e+00> : vector<104x128xf32>
    %30 = tpu.matmul %28, %29, %cst_21 {dimension_numbers = #tpu.dot_dimension_numbers<[1], [0], [0], [1], [0, 0, 1, 1], [], []>} : vector<104x128xbf16>, vector<128x128xbf16>, vector<104x128xf32> -> vector<104x128xf32>
    %c0_22 = arith.constant 0 : index
    %c0_23 = arith.constant 0 : index
    %31 = vector.load %arg6[%c0_22, %c0_23] : memref<1x128xf32, #tpu.memory_space<vmem>>, vector<1x128xf32>
    %32 = vector.broadcast %31 : vector<1x128xf32> to vector<104x128xf32>
    %33 = arith.addf %30, %32 : vector<104x128xf32>
    %c0_24 = arith.constant 0 : index
    %c0_25 = arith.constant 0 : index
    %34 = vector.load %arg7[%c0_24, %c0_25] : memref<104x128xf32, #tpu.memory_space<vmem>>, vector<104x128xf32>
    tpu.vector_store %arg7[%c0_24, %c0_25], %33 {strides = array<i32>} : memref<104x128xf32, #tpu.memory_space<vmem>>, vector<104x128xf32>,
    return
  }
  func.func @transform_0(%arg0: i32) -> (i32, i32) {
    %c0_i32 = arith.constant 0 : i32
    %c0_i32_0 = arith.constant 0 : i32
    return %arg0, %c0_i32 : i32, i32
  }
  func.func @transform_1(%arg0: i32) -> (i32, i32) {
    %c0_i32 = arith.constant 0 : i32
    %c0_i32_0 = arith.constant 0 : i32
    %c0_i32_1 = arith.constant 0 : i32
    return %c0_i32, %c0_i32_0 : i32, i32
  }
  func.func @transform_2(%arg0: i32) -> (i32, i32, i32) {
    %c0_i32 = arith.constant 0 : i32
    %c0_i32_0 = arith.constant 0 : i32
    %c0_i32_1 = arith.constant 0 : i32
    %c0_i32_2 = arith.constant 0 : i32
    return %c0_i32, %c0_i32_0, %c0_i32_1 : i32, i32, i32
  }
  func.func @transform_3(%arg0: i32) -> (i32, i32, i32) {
    %c0_i32 = arith.constant 0 : i32
    %c0_i32_0 = arith.constant 0 : i32
    %c0_i32_1 = arith.constant 0 : i32
    %c0_i32_2 = arith.constant 0 : i32
    return %c0_i32, %c0_i32_0, %c0_i32_1 : i32, i32, i32
  }
  func.func @transform_4(%arg0: i32) -> (i32, i32) {
    %c0_i32 = arith.constant 0 : i32
    %c0_i32_0 = arith.constant 0 : i32
    %c0_i32_1 = arith.constant 0 : i32
    return %c0_i32, %c0_i32_0 : i32, i32
  }
  func.func @transform_5(%arg0: i32) -> (i32, i32) {
    %c0_i32 = arith.constant 0 : i32
    %c0_i32_0 = arith.constant 0 : i32
    %c0_i32_1 = arith.constant 0 : i32
    return %c0_i32, %c0_i32_0 : i32, i32
  }
  func.func @transform_6(%arg0: i32) -> (i32, i32) {
    %c0_i32 = arith.constant 0 : i32
    %c0_i32_0 = arith.constant 0 : i32
    return %arg0, %c0_i32 : i32, i32
  }
}

</mosaic_0001>

<llo_original>
// kernel: tpu_custom_call.1
$region0: #{tpu_custom_call.1}
  #allocation0 [shape = 'u32[]', space=smem, size = 0x4, offset = 0x4, fixed_abs, tag = 'smem constant byte address 0x4 - core index']
  #allocation1 [shape = 'u32[72,128]{1,0:T(1,128)}', space=vmem, size = 0x9000, scoped, tag = 'internal scratch']
  %s0 = inlined_call_operand.vmem [shape: f32[104,8], index: 0, kind: input, shape index: {}]
  %s1 = inlined_call_operand.vmem [shape: f32[8,64], index: 1, kind: input, shape index: {}]
  %s2 = inlined_call_operand.hbm [shape: bf16[3,128,128], index: 2, kind: input, shape index: {}]
  %s3 = inlined_call_operand.vmem [shape: f32[3,1,128], index: 3, kind: input, shape index: {}]
  %s4 = inlined_call_operand.vmem [shape: bf16[128,128], index: 4, kind: input, shape index: {}]
  %s5 = inlined_call_operand.vmem [shape: f32[1,128], index: 5, kind: input, shape index: {}]
  %s6 = inlined_call_operand.hbm [shape: f32[104,128], index: 6, kind: output, shape index: {}]
  %s7 = sld [smem:[#allocation0]]
  $region38: #{tpu_custom_call.1} parent=0
    _
  %s9 = ssub.s32 1, %s7
  %s10 = scalar_select 0, %s9, %s7
  $region1: #{tpu_custom_call.1} parent=0
    #allocation2 [shape = 'u8[98304]{0}', space=vmem, size = 0x18000, scoped, tag = 'input window, operand 2, single buffered']
    #allocation3 [shape = 's32[1]{0}', space=sflag, size = 0x4, scoped, tag = 'scoped memory for tpu_custom_call.1']
    #allocation4 [shape = 's32[1]{0}', space=sflag, size = 0x4, scoped, tag = 'scoped memory for tpu_custom_call.1']
    #allocation5 [shape = 'u8[53248]{0}', space=vmem, size = 0xd000, scoped, tag = 'output window, operand 0, single buffered']
    %11 = vsyncpa [#allocation3], 0
    %12 = vsyncpa [#allocation4], 0
    // Predicated region
    $region2: #{tpu_custom_call.1} parent=1 // pred_check
      _
    $region3: #{tpu_custom_call.1} parent=1 // pred_check_branch
      %14 = sbr.rel (0) target = $region5
    $region4: #{tpu_custom_call.1} parent=1 // pred_region
      _
    $region5: #{tpu_custom_call.1} parent=1 // pred_fallthru
      _
    // Predicated region
    $region6: #{tpu_custom_call.1} parent=1 // pred_check
      _
    $region7: #{tpu_custom_call.1} parent=1 // pred_check_branch
      %16 = sbr.rel (0) target = $region9
    $region8: #{tpu_custom_call.1} parent=1 // pred_region
      _
    $region9: #{tpu_custom_call.1} parent=1 // pred_fallthru
      _
    // Predicated region
    $region10: #{tpu_custom_call.1} parent=1 // pred_check
      _
    $region11: #{tpu_custom_call.1} parent=1 // pred_check_branch
      %18 = sbr.rel (0) target = $region13
    $region12: #{tpu_custom_call.1} parent=1 // pred_region
      %20 = vsyncadd [#allocation3], 0
      %s21 = sshll.u32 %s2, 4
      %s22 = int_to_ptr.hbm [resolvable:$true] %s21
      %s23 = sshll.u32 [#allocation2], 4
      %s24 = int_to_ptr.vmem [resolvable:$true] %s23
      %29 = dma.hbm_to_vmem [thread:$0]  %s22, 3072, %s24, [#allocation3], 64, 64, 4
    $region13: #{tpu_custom_call.1} parent=1 // pred_fallthru
      _
    // Predicated region
    $region14: #{tpu_custom_call.1} parent=1 // pred_check
      _
    $region15: #{tpu_custom_call.1} parent=1 // pred_check_branch
      %31 = sbr.rel (0) target = $region17
    $region16: #{tpu_custom_call.1} parent=1 // pred_region
      _
    $region17: #{tpu_custom_call.1} parent=1 // pred_fallthru
      _
    // Predicated region
    $region18: #{tpu_custom_call.1} parent=1 // pred_check
      _
    $region19: #{tpu_custom_call.1} parent=1 // pred_check_branch
      %33 = sbr.rel (0) target = $region21
    $region20: #{tpu_custom_call.1} parent=1 // pred_region
      _
    $region21: #{tpu_custom_call.1} parent=1 // pred_fallthru
      _
    // Predicated region
    $region22: #{tpu_custom_call.1} parent=1 // pred_check
      _
    $region23: #{tpu_custom_call.1} parent=1 // pred_check_branch
      %35 = sbr.rel (0) target = $region25
    $region24: #{tpu_custom_call.1} parent=1 // pred_region
      _
    $region25: #{tpu_custom_call.1} parent=1 // pred_fallthru
      _
    // Predicated region
    $region26: #{tpu_custom_call.1} parent=1 // pred_check
      _
    $region27: #{tpu_custom_call.1} parent=1 // pred_check_branch
      %37 = sbr.rel (0) target = $region29
    $region28: #{tpu_custom_call.1} parent=1 // pred_region
      %39 = dma.done [#allocation3], 3072
    $region29: #{tpu_custom_call.1} parent=1 // pred_fallthru
      _
    %v40 = vld [vmem:[%s0] sm:$0xff]
    %v41 = vld [vmem:[%s0 + $0x8] sm:$0xff]
    %v42 = vld [vmem:[%s0 + $0x10] sm:$0xff]
    %v43 = vld [vmem:[%s0 + $0x18] sm:$0xff]
    %v44 = vld [vmem:[%s0 + $0x20] sm:$0xff]
    %v45 = vld [vmem:[%s0 + $0x28] sm:$0xff]
    %v46 = vld [vmem:[%s0 + $0x30] sm:$0xff]
    %v47 = vld [vmem:[%s0 + $0x38] sm:$0xff]
    %v48 = vld [vmem:[%s0 + $0x40] sm:$0xff]
    %v49 = vld [vmem:[%s0 + $0x48] sm:$0xff]
    %v50 = vld [vmem:[%s0 + $0x50] sm:$0xff]
    %v51 = vld [vmem:[%s0 + $0x58] sm:$0xff]
    %v52 = vld [vmem:[%s0 + $0x60] sm:$0xff]
    %v53 = vld [vmem:[%s1] sm:$0xff]
    %vm54 = vcmask 64512
    %v56 = vsel %vm54, %v40, 0
    %v59 = vsel %vm54, %v41, 0
    %v62 = vsel %vm54, %v42, 0
    %v65 = vsel %vm54, %v43, 0
    %v68 = vsel %vm54, %v44, 0
    %v71 = vsel %vm54, %v45, 0
    %v74 = vsel %vm54, %v46, 0
    %v77 = vsel %vm54, %v47, 0
    %v80 = vsel %vm54, %v48, 0
    %v83 = vsel %vm54, %v49, 0
    %v86 = vsel %vm54, %v50, 0
    %v89 = vsel %vm54, %v51, 0
    %v92 = vsel %vm54, %v52, 0
    %94 = vmatpush.msra.mxu0 0.0
    %95 = vmatpush.msra.mxu0 0.0
    %96 = vmatpush.msra.mxu0 0.0
    %97 = vmatpush.msra.mxu0 0.0
    %98 = vmatpush.msra.mxu0 0.0
    %99 = vmatpush.msra.mxu0 0.0
    %100 = vmatpush.msra.mxu0 0.0
    %101 = vmatpush.msra.mxu0 0.0
    %102 = vmatpush.msra.mxu0 0.0
    %103 = vmatpush.msra.mxu0 0.0
    %104 = vmatpush.msra.mxu0 0.0
    %105 = vmatpush.msra.mxu0 0.0
    %106 = vmatpush.msra.mxu0 0.0
    %107 = vmatpush.msra.mxu0 0.0
    %108 = vmatpush.msra.mxu0 0.0
    %109 = vmatpush.msra.mxu0 %v53
    %110 = vmatmul.f32.gmra.mxu0 %v56
    %v111 = vpop.f32.mrf.mxu0
    %v112 = vadd.f32 0.0, %v111
    %113 = vmatmul.f32.gmra.mxu0 %v59
    %v114 = vpop.f32.mrf.mxu0
    %v115 = vadd.f32 0.0, %v114
    %116 = vmatmul.f32.gmra.mxu0 %v62
    %v117 = vpop.f32.mrf.mxu0
    %v118 = vadd.f32 0.0, %v117
    %119 = vmatmul.f32.gmra.mxu0 %v65
    %v120 = vpop.f32.mrf.mxu0
    %v121 = vadd.f32 0.0, %v120
    %122 = vmatmul.f32.gmra.mxu0 %v68
    %v123 = vpop.f32.mrf.mxu0
    %v124 = vadd.f32 0.0, %v123
    %125 = vmatmul.f32.gmra.mxu0 %v71
    %v126 = vpop.f32.mrf.mxu0
    %v127 = vadd.f32 0.0, %v126
    %128 = vmatmul.f32.gmra.mxu0 %v74
    %v129 = vpop.f32.mrf.mxu0
    %v130 = vadd.f32 0.0, %v129
    %131 = vmatmul.f32.gmra.mxu0 %v77
    %v132 = vpop.f32.mrf.mxu0
    %v133 = vadd.f32 0.0, %v132
    %134 = vmatmul.f32.gmra.mxu0 %v80
    %v135 = vpop.f32.mrf.mxu0
    %v136 = vadd.f32 0.0, %v135
    %137 = vmatmul.f32.gmra.mxu0 %v83
    %v138 = vpop.f32.mrf.mxu0
    %v139 = vadd.f32 0.0, %v138
    %140 = vmatmul.f32.gmra.mxu0 %v86
    %v141 = vpop.f32.mrf.mxu0
    %v142 = vadd.f32 0.0, %v141
    %143 = vmatmul.f32.gmra.mxu0 %v89
    %v144 = vpop.f32.mrf.mxu0
    %v145 = vadd.f32 0.0, %v144
    %146 = vmatmul.f32.gmra.mxu0 %v92
    %v147 = vpop.f32.mrf.mxu0
    %v148 = vadd.f32 0.0, %v147
    %149 = vdwg.mxu0
    %v150 = vmul.f32 %v112, 6.2831855
    %v151 = vmul.f32 %v115, 6.2831855
    %v152 = vmul.f32 %v118, 6.2831855
    %v153 = vmul.f32 %v121, 6.2831855
    %v154 = vmul.f32 %v124, 6.2831855
    %v155 = vmul.f32 %v127, 6.2831855
    %v156 = vmul.f32 %v130, 6.2831855
    %v157 = vmul.f32 %v133, 6.2831855
    %v158 = vmul.f32 %v136, 6.2831855
    %v159 = vmul.f32 %v139, 6.2831855
    %v160 = vmul.f32 %v142, 6.2831855
    %v161 = vmul.f32 %v145, 6.2831855
    %v162 = vmul.f32 %v148, 6.2831855
    %v163 = vand.u32 2147483647, %v150
    %vm164 = vcmp.le.f32.partialorder %v163, 0.7853982
    %vm165 = vcmp.lt.s32.totalorder %v150, 0
    %v166 = vand.u32 %v150, 2139095040
    %v167 = vshrl.u32 %v166, 23
    %v168 = vsub.s32 %v167, 127
    %v169 = vand.u32 2147483647, %v150
    %v170 = vand.u32 %v169, 8388607
    %v171 = vor.u32 %v170, 8388608
    %v172 = vsub.s32 0, %v171
    %v173 = vadd.s32 %v168, 1
    %vm174 = vcmp.gt.s32.totalorder %v173, 0
    %v175 = vsel %vm174, %v173, 0
    %v176 = vshrl.u32 %v175, 5
    %v177 = vand.u32 %v175, 31
    %v178 = vsub.s32 32, %v177
    %v179 = vshrl.u32 683565275, %v178
    %v180 = vshll.u32 683565275, %v177
    %v181 = vshrl.u32 2475754826, %v178
    %v182 = vor.u32 %v180, %v181
    %v183 = vshll.u32 2475754826, %v177
    %v184 = vshrl.u32 2131351028, %v178
    %v185 = vor.u32 %v183, %v184
    %v186 = vshll.u32 2131351028, %v177
    %v187 = vshrl.u32 2102212464, %v178
    %v188 = vor.u32 %v186, %v187
    %v189 = vshll.u32 2102212464, %v177
    %v190 = vshrl.u32 920167782, %v178
    %v191 = vor.u32 %v189, %v190
    %v192 = vshll.u32 920167782, %v177
    %v193 = vshrl.u32 1326507024, %v178
    %v194 = vor.u32 %v192, %v193
    %vm195 = vcmp.lt.s32.totalorder %v176, 1
    %vm196 = vcmp.lt.s32.totalorder %v176, 2
    %vm197 = vcmp.lt.s32.totalorder %v176, 3
    %vm198 = vcmp.lt.s32.totalorder %v176, 4
    %v199 = vsel %vm195, %v179, %v182
    %v200 = vsel %vm198, %v188, 2102212464
    %v201 = vsel %vm197, %v185, %v200
    %v202 = vsel %vm196, %v199, %v201
    %v203 = vsel %vm195, %v182, %v185
    %v204 = vsel %vm198, %v191, 920167782
    %v205 = vsel %vm197, %v188, %v204
    %v206 = vsel %vm196, %v203, %v205
    %v207 = vsel %vm195, %v185, %v188
    %v208 = vsel %vm198, %v194, 1326507024
    %v209 = vsel %vm197, %v191, %v208
    %v210 = vsel %vm196, %v207, %v209
    %v211 = vshll.u32 %v171, 8
    %v212 = vand.u32 %v211, 65535
    %v213 = vshrl.u32 %v211, 16
    %v214 = vand.u32 %v210, 65535
    %v215 = vshrl.u32 %v210, 16
    %v216 = vmul.u32 %v212, %v214
    %v217 = vmul.u32 %v212, %v215
    %v218 = vmul.u32 %v213, %v214
    %v219 = vmul.u32 %v213, %v215
    %v220 = vshll.u32 %v217, 16
    %v221 = vshrl.u32 %v217, 16
    %v222 = vshll.u32 %v218, 16
    %v223 = vshrl.u32 %v218, 16
    %vm224 = vc.u32 %v216, %v220
    %v225 = vsel %vm224, 1, 0
    %v226 = vadd.s32 %v216, %v220
    %v227 = vadd.s32 %v219, %v225
    %vm228 = vc.u32 %v226, %v222
    %v229 = vsel %vm228, 1, 0
    %v230 = vadd.s32 %v226, %v222
    %v231 = vadd.s32 %v227, %v229
    %v232 = vadd.s32 %v231, %v221
    %v233 = vadd.s32 %v232, %v223
    %v234 = vand.u32 %v211, 65535
    %v235 = vshrl.u32 %v211, 16
    %v236 = vand.u32 %v206, 65535
    %v237 = vshrl.u32 %v206, 16
    %v238 = vmul.u32 %v234, %v236
    %v239 = vmul.u32 %v234, %v237
    %v240 = vmul.u32 %v235, %v236
    %v241 = vmul.u32 %v235, %v237
    %v242 = vshll.u32 %v239, 16
    %v243 = vshrl.u32 %v239, 16
    %v244 = vshll.u32 %v240, 16
    %v245 = vshrl.u32 %v240, 16
    %vm246 = vc.u32 %v238, %v242
    %v247 = vsel %vm246, 1, 0
    %v248 = vadd.s32 %v238, %v242
    %v249 = vadd.s32 %v241, %v247
    %vm250 = vc.u32 %v248, %v244
    %v251 = vsel %vm250, 1, 0
    %v252 = vadd.s32 %v248, %v244
    %v253 = vadd.s32 %v249, %v251
    %v254 = vadd.s32 %v253, %v243
    %v255 = vadd.s32 %v254, %v245
    %v256 = vmul.u32 %v211, %v202
    %v257 = vadd.s32 %v233, %v252
    %vm258 = vc.u32 %v233, %v252
    %v259 = vadd.s32 %v255, 1
    %v260 = vsel %vm258, %v259, %v255
    %v261 = vadd.s32 %v256, %v260
    %v262 = vadd.s32 %v261, 536870912
    %v263 = vshrl.u32 %v262, 30
    %v264 = vshll.u32 %v263, 30
    %v265 = vsub.s32 %v261, %v264
    %vm266 = vcmp.lt.s32.totalorder %v265, 0
    %v267 = vsub.s32 0, %v265
    %v268 = vsel %vm266, %v267, %v265
    %v269 = vclz %v268
    %v270 = vsub.s32 %v269, 2
    %vm271 = vcmp.gt.s32.totalorder 0, %v270
    %v272 = vsel %vm271, 0, %v270
    %v273 = vsub.s32 32, %v272
    %v274 = vshll.u32 %v265, %v272
    %v275 = vshrl.u32 %v257, %v273
    %v276 = vor.u32 %v274, %v275
    %v277 = vsub.s32 4294967266, %v272
    %v278 = vadd.s32 %v277, 127
    %v279 = vshll.u32 %v278, 23
    %v280 = vor.u32 4788187, %v279
    %v281 = vand.u32 2147483647, %v280
    %v283 = vcvt.s32.f32 %v276
    %v284 = vmul.f32 %v283, %v281
    %v285 = vxor.u32 %v284, 2147483648
    %v286 = vsel %vm165, %v285, %v284
    %v287 = vsub.s32 4, %v263
    %v288 = vsel %vm165, %v287, %v263
    %v289 = vsel %vm164, %v150, %v286
    %v290 = vsel %vm164, 0, %v288
    %v291 = vmul.f32 %v289, %v289
    %v292 = vmul.f32 %v291, -0.001358992
    %v293 = vadd.f32 %v292, 0.041655596
    %v294 = vmul.f32 %v291, %v293
    %v295 = vadd.f32 %v294, -0.4999988
    %v296 = vmul.f32 %v291, %v295
    %v297 = vadd.f32 1.0, %v296
    %v298 = vmul.f32 %v289, %v289
    %v299 = vmul.f32 %v298, -0.00019511016
    %v300 = vadd.f32 %v299, 0.008332121
    %v301 = vmul.f32 %v298, %v300
    %v302 = vadd.f32 %v301, -0.16666654
    %v303 = vmul.f32 %v298, %v302
    %v304 = vadd.f32 %v303, 1.0
    %v305 = vmul.f32 %v304, %v289
    %vm306 = vweird.f32 %v150
    %v307 = vand.u32 %v290, 3
    %vm308 = vcmp.lt.s32.totalorder %v307, 2
    %vm309 = vcmp.eq.s32.totalorder %v307, 0
    %v310 = vxor.u32 %v305, 2147483648
    %v311 = vsel %vm309, %v297, %v310
    %vm312 = vcmp.eq.s32.totalorder %v307, 2
    %v313 = vxor.u32 %v297, 2147483648
    %v314 = vsel %vm312, %v313, %v305
    %v315 = vsel %vm308, %v311, %v314
    %v316 = vsel %vm306, nan, %v315
    %v317 = vand.u32 2147483647, %v151
    %vm318 = vcmp.le.f32.partialorder %v317, 0.7853982
    %vm319 = vcmp.lt.s32.totalorder %v151, 0
    %v320 = vand.u32 %v151, 2139095040
    %v321 = vshrl.u32 %v320, 23
    %v322 = vsub.s32 %v321, 127
    %v323 = vand.u32 2147483647, %v151
    %v324 = vand.u32 %v323, 8388607
    %v325 = vor.u32 %v324, 8388608
    %v326 = vsub.s32 0, %v325
    %v327 = vadd.s32 %v322, 1
    %vm328 = vcmp.gt.s32.totalorder %v327, 0
    %v329 = vsel %vm328, %v327, 0
    %v330 = vshrl.u32 %v329, 5
    %v331 = vand.u32 %v329, 31
    %v332 = vsub.s32 32, %v331
    %v333 = vshrl.u32 683565275, %v332
    %v334 = vshll.u32 683565275, %v331
    %v335 = vshrl.u32 2475754826, %v332
    %v336 = vor.u32 %v334, %v335
    %v337 = vshll.u32 2475754826, %v331
    %v338 = vshrl.u32 2131351028, %v332
    %v339 = vor.u32 %v337, %v338
    %v340 = vshll.u32 2131351028, %v331
    %v341 = vshrl.u32 2102212464, %v332
    %v342 = vor.u32 %v340, %v341
    %v343 = vshll.u32 2102212464, %v331
    %v344 = vshrl.u32 920167782, %v332
    %v345 = vor.u32 %v343, %v344
    %v346 = vshll.u32 920167782, %v331
    %v347 = vshrl.u32 1326507024, %v332
    %v348 = vor.u32 %v346, %v347
    %vm349 = vcmp.lt.s32.totalorder %v330, 1
    %vm350 = vcmp.lt.s32.totalorder %v330, 2
    %vm351 = vcmp.lt.s32.totalorder %v330, 3
    %vm352 = vcmp.lt.s32.totalorder %v330, 4
    %v353 = vsel %vm349, %v333, %v336
    %v354 = vsel %vm352, %v342, 2102212464
    %v355 = vsel %vm351, %v339, %v354
    %v356 = vsel %vm350, %v353, %v355
    %v357 = vsel %vm349, %v336, %v339
    %v358 = vsel %vm352, %v345, 920167782
    %v359 = vsel %vm351, %v342, %v358
    %v360 = vsel %vm350, %v357, %v359
    %v361 = vsel %vm349, %v339, %v342
    %v362 = vsel %vm352, %v348, 1326507024
    %v363 = vsel %vm351, %v345, %v362
    %v364 = vsel %vm350, %v361, %v363
    %v365 = vshll.u32 %v325, 8
    %v366 = vand.u32 %v365, 65535
    %v367 = vshrl.u32 %v365, 16
    %v368 = vand.u32 %v364, 65535
    %v369 = vshrl.u32 %v364, 16
    %v370 = vmul.u32 %v366, %v368
    %v371 = vmul.u32 %v366, %v369
    %v372 = vmul.u32 %v367, %v368
    %v373 = vmul.u32 %v367, %v369
    %v374 = vshll.u32 %v371, 16
    %v375 = vshrl.u32 %v371, 16
    %v376 = vshll.u32 %v372, 16
    %v377 = vshrl.u32 %v372, 16
    %vm378 = vc.u32 %v370, %v374
    %v379 = vsel %vm378, 1, 0
    %v380 = vadd.s32 %v370, %v374
    %v381 = vadd.s32 %v373, %v379
    %vm382 = vc.u32 %v380, %v376
    %v383 = vsel %vm382, 1, 0
    %v384 = vadd.s32 %v380, %v376
    %v385 = vadd.s32 %v381, %v383
    %v386 = vadd.s32 %v385, %v375
    %v387 = vadd.s32 %v386, %v377
    %v388 = vand.u32 %v365, 65535
    %v389 = vshrl.u32 %v365, 16
    %v390 = vand.u32 %v360, 65535
    %v391 = vshrl.u32 %v360, 16
    %v392 = vmul.u32 %v388, %v390
    %v393 = vmul.u32 %v388, %v391
    %v394 = vmul.u32 %v389, %v390
    %v395 = vmul.u32 %v389, %v391
    %v396 = vshll.u32 %v393, 16
    %v397 = vshrl.u32 %v393, 16
    %v398 = vshll.u32 %v394, 16
    %v399 = vshrl.u32 %v394, 16
    %vm400 = vc.u32 %v392, %v396
    %v401 = vsel %vm400, 1, 0
    %v402 = vadd.s32 %v392, %v396
    %v403 = vadd.s32 %v395, %v401
    %vm404 = vc.u32 %v402, %v398
    %v405 = vsel %vm404, 1, 0
    %v406 = vadd.s32 %v402, %v398
    %v407 = vadd.s32 %v403, %v405
    %v408 = vadd.s32 %v407, %v397
    %v409 = vadd.s32 %v408, %v399
    %v410 = vmul.u32 %v365, %v356
    %v411 = vadd.s32 %v387, %v406
    %vm412 = vc.u32 %v387, %v406
    %v413 = vadd.s32 %v409, 1
    %v414 = vsel %vm412, %v413, %v409
    %v415 = vadd.s32 %v410, %v414
    %v416 = vadd.s32 %v415, 536870912
    %v417 = vshrl.u32 %v416, 30
    %v418 = vshll.u32 %v417, 30
    %v419 = vsub.s32 %v415, %v418
    %vm420 = vcmp.lt.s32.totalorder %v419, 0
    %v421 = vsub.s32 0, %v419
    %v422 = vsel %vm420, %v421, %v419
    %v423 = vclz %v422
    %v424 = vsub.s32 %v423, 2
    %vm425 = vcmp.gt.s32.totalorder 0, %v424
    %v426 = vsel %vm425, 0, %v424
    %v427 = vsub.s32 32, %v426
    %v428 = vshll.u32 %v419, %v426
    %v429 = vshrl.u32 %v411, %v427
    %v430 = vor.u32 %v428, %v429
    %v431 = vsub.s32 4294967266, %v426
    %v432 = vadd.s32 %v431, 127
    %v433 = vshll.u32 %v432, 23
    %v434 = vor.u32 4788187, %v433
    %v435 = vand.u32 2147483647, %v434
    %v437 = vcvt.s32.f32 %v430
    %v438 = vmul.f32 %v437, %v435
    %v439 = vxor.u32 %v438, 2147483648
    %v440 = vsel %vm319, %v439, %v438
    %v441 = vsub.s32 4, %v417
    %v442 = vsel %vm319, %v441, %v417
    %v443 = vsel %vm318, %v151, %v440
    %v444 = vsel %vm318, 0, %v442
    %v445 = vmul.f32 %v443, %v443
    %v446 = vmul.f32 %v445, -0.001358992
    %v447 = vadd.f32 %v446, 0.041655596
    %v448 = vmul.f32 %v445, %v447
    %v449 = vadd.f32 %v448, -0.4999988
    %v450 = vmul.f32 %v445, %v449
    %v451 = vadd.f32 1.0, %v450
    %v452 = vmul.f32 %v443, %v443
    %v453 = vmul.f32 %v452, -0.00019511016
    %v454 = vadd.f32 %v453, 0.008332121
    %v455 = vmul.f32 %v452, %v454
    %v456 = vadd.f32 %v455, -0.16666654
    %v457 = vmul.f32 %v452, %v456
    %v458 = vadd.f32 %v457, 1.0
    %v459 = vmul.f32 %v458, %v443
    %vm460 = vweird.f32 %v151
    %v461 = vand.u32 %v444, 3
    %vm462 = vcmp.lt.s32.totalorder %v461, 2
    %vm463 = vcmp.eq.s32.totalorder %v461, 0
    %v464 = vxor.u32 %v459, 2147483648
    %v465 = vsel %vm463, %v451, %v464
    %vm466 = vcmp.eq.s32.totalorder %v461, 2
    %v467 = vxor.u32 %v451, 2147483648
    %v468 = vsel %vm466, %v467, %v459
    %v469 = vsel %vm462, %v465, %v468
    %v470 = vsel %vm460, nan, %v469
    %v471 = vand.u32 2147483647, %v152
    %vm472 = vcmp.le.f32.partialorder %v471, 0.7853982
    %vm473 = vcmp.lt.s32.totalorder %v152, 0
    %v474 = vand.u32 %v152, 2139095040
    %v475 = vshrl.u32 %v474, 23
    %v476 = vsub.s32 %v475, 127
    %v477 = vand.u32 2147483647, %v152
    %v478 = vand.u32 %v477, 8388607
    %v479 = vor.u32 %v478, 8388608
    %v480 = vsub.s32 0, %v479
    %v481 = vadd.s32 %v476, 1
    %vm482 = vcmp.gt.s32.totalorder %v481, 0
    %v483 = vsel %vm482, %v481, 0
    %v484 = vshrl.u32 %v483, 5
    %v485 = vand.u32 %v483, 31
    %v486 = vsub.s32 32, %v485
    %v487 = vshrl.u32 683565275, %v486
    %v488 = vshll.u32 683565275, %v485
    %v489 = vshrl.u32 2475754826, %v486
    %v490 = vor.u32 %v488, %v489
    %v491 = vshll.u32 2475754826, %v485
    %v492 = vshrl.u32 2131351028, %v486
    %v493 = vor.u32 %v491, %v492
    %v494 = vshll.u32 2131351028, %v485
    %v495 = vshrl.u32 2102212464, %v486
    %v496 = vor.u32 %v494, %v495
    %v497 = vshll.u32 2102212464, %v485
    %v498 = vshrl.u32 920167782, %v486
    %v499 = vor.u32 %v497, %v498
    %v500 = vshll.u32 920167782, %v485
    %v501 = vshrl.u32 1326507024, %v486
    %v502 = vor.u32 %v500, %v501
    %vm503 = vcmp.lt.s32.totalorder %v484, 1
    %vm504 = vcmp.lt.s32.totalorder %v484, 2
    %vm505 = vcmp.lt.s32.totalorder %v484, 3
    %vm506 = vcmp.lt.s32.totalorder %v484, 4
    %v507 = vsel %vm503, %v487, %v490
    %v508 = vsel %vm506, %v496, 2102212464
    %v509 = vsel %vm505, %v493, %v508
    %v510 = vsel %vm504, %v507, %v509
    %v511 = vsel %vm503, %v490, %v493
    %v512 = vsel %vm506, %v499, 920167782
    %v513 = vsel %vm505, %v496, %v512
    %v514 = vsel %vm504, %v511, %v513
    %v515 = vsel %vm503, %v493, %v496
    %v516 = vsel %vm506, %v502, 1326507024
    %v517 = vsel %vm505, %v499, %v516
    %v518 = vsel %vm504, %v515, %v517
    %v519 = vshll.u32 %v479, 8
    %v520 = vand.u32 %v519, 65535
    %v521 = vshrl.u32 %v519, 16
    %v522 = vand.u32 %v518, 65535
    %v523 = vshrl.u32 %v518, 16
    %v524 = vmul.u32 %v520, %v522
    %v525 = vmul.u32 %v520, %v523
    %v526 = vmul.u32 %v521, %v522
    %v527 = vmul.u32 %v521, %v523
    %v528 = vshll.u32 %v525, 16
    %v529 = vshrl.u32 %v525, 16
    %v530 = vshll.u32 %v526, 16
    %v531 = vshrl.u32 %v526, 16
    %vm532 = vc.u32 %v524, %v528
    %v533 = vsel %vm532, 1, 0
    %v534 = vadd.s32 %v524, %v528
    %v535 = vadd.s32 %v527, %v533
    %vm536 = vc.u32 %v534, %v530
    %v537 = vsel %vm536, 1, 0
    %v538 = vadd.s32 %v534, %v530
    %v539 = vadd.s32 %v535, %v537
    %v540 = vadd.s32 %v539, %v529
    %v541 = vadd.s32 %v540, %v531
    %v542 = vand.u32 %v519, 65535
    %v543 = vshrl.u32 %v519, 16
    %v544 = vand.u32 %v514, 65535
    %v545 = vshrl.u32 %v514, 16
    %v546 = vmul.u32 %v542, %v544
    %v547 = vmul.u32 %v542, %v545
    %v548 = vmul.u32 %v543, %v544
    %v549 = vmul.u32 %v543, %v545
    %v550 = vshll.u32 %v547, 16
    %v551 = vshrl.u32 %v547, 16
    %v552 = vshll.u32 %v548, 16
    %v553 = vshrl.u32 %v548, 16
    %vm554 = vc.u32 %v546, %v550
    %v555 = vsel %vm554, 1, 0
    %v556 = vadd.s32 %v546, %v550
    %v557 = vadd.s32 %v549, %v555
    %vm558 = vc.u32 %v556, %v552
    %v559 = vsel %vm558, 1, 0
    %v560 = vadd.s32 %v556, %v552
    %v561 = vadd.s32 %v557, %v559
    %v562 = vadd.s32 %v561, %v551
    %v563 = vadd.s32 %v562, %v553
    %v564 = vmul.u32 %v519, %v510
    %v565 = vadd.s32 %v541, %v560
    %vm566 = vc.u32 %v541, %v560
    %v567 = vadd.s32 %v563, 1
    %v568 = vsel %vm566, %v567, %v563
    %v569 = vadd.s32 %v564, %v568
    %v570 = vadd.s32 %v569, 536870912
    %v571 = vshrl.u32 %v570, 30
    %v572 = vshll.u32 %v571, 30
    %v573 = vsub.s32 %v569, %v572
    %vm574 = vcmp.lt.s32.totalorder %v573, 0
    %v575 = vsub.s32 0, %v573
    %v576 = vsel %vm574, %v575, %v573
    %v577 = vclz %v576
    %v578 = vsub.s32 %v577, 2
    %vm579 = vcmp.gt.s32.totalorder 0, %v578
    %v580 = vsel %vm579, 0, %v578
    %v581 = vsub.s32 32, %v580
    %v582 = vshll.u32 %v573, %v580
    %v583 = vshrl.u32 %v565, %v581
    %v584 = vor.u32 %v582, %v583
    %v585 = vsub.s32 4294967266, %v580
    %v586 = vadd.s32 %v585, 127
    %v587 = vshll.u32 %v586, 23
    %v588 = vor.u32 4788187, %v587
    %v589 = vand.u32 2147483647, %v588
    %v591 = vcvt.s32.f32 %v584
    %v592 = vmul.f32 %v591, %v589
    %v593 = vxor.u32 %v592, 2147483648
    %v594 = vsel %vm473, %v593, %v592
    %v595 = vsub.s32 4, %v571
    %v596 = vsel %vm473, %v595, %v571
    %v597 = vsel %vm472, %v152, %v594
    %v598 = vsel %vm472, 0, %v596
    %v599 = vmul.f32 %v597, %v597
    %v600 = vmul.f32 %v599, -0.001358992
    %v601 = vadd.f32 %v600, 0.041655596
    %v602 = vmul.f32 %v599, %v601
    %v603 = vadd.f32 %v602, -0.4999988
    %v604 = vmul.f32 %v599, %v603
    %v605 = vadd.f32 1.0, %v604
    %v606 = vmul.f32 %v597, %v597
    %v607 = vmul.f32 %v606, -0.00019511016
    %v608 = vadd.f32 %v607, 0.008332121
    %v609 = vmul.f32 %v606, %v608
    %v610 = vadd.f32 %v609, -0.16666654
    %v611 = vmul.f32 %v606, %v610
    %v612 = vadd.f32 %v611, 1.0
    %v613 = vmul.f32 %v612, %v597
    %vm614 = vweird.f32 %v152
    %v615 = vand.u32 %v598, 3
    %vm616 = vcmp.lt.s32.totalorder %v615, 2
    %vm617 = vcmp.eq.s32.totalorder %v615, 0
    %v618 = vxor.u32 %v613, 2147483648
    %v619 = vsel %vm617, %v605, %v618
    %vm620 = vcmp.eq.s32.totalorder %v615, 2
    %v621 = vxor.u32 %v605, 2147483648
    %v622 = vsel %vm620, %v621, %v613
    %v623 = vsel %vm616, %v619, %v622
    %v624 = vsel %vm614, nan, %v623
    %v625 = vand.u32 2147483647, %v153
    %vm626 = vcmp.le.f32.partialorder %v625, 0.7853982
    %vm627 = vcmp.lt.s32.totalorder %v153, 0
    %v628 = vand.u32 %v153, 2139095040
    %v629 = vshrl.u32 %v628, 23
    %v630 = vsub.s32 %v629, 127
    %v631 = vand.u32 2147483647, %v153
    %v632 = vand.u32 %v631, 8388607
    %v633 = vor.u32 %v632, 8388608
    %v634 = vsub.s32 0, %v633
    %v635 = vadd.s32 %v630, 1
    %vm636 = vcmp.gt.s32.totalorder %v635, 0
    %v637 = vsel %vm636, %v635, 0
    %v638 = vshrl.u32 %v637, 5
    %v639 = vand.u32 %v637, 31
    %v640 = vsub.s32 32, %v639
    %v641 = vshrl.u32 683565275, %v640
    %v642 = vshll.u32 683565275, %v639
    %v643 = vshrl.u32 2475754826, %v640
    %v644 = vor.u32 %v642, %v643
    %v645 = vshll.u32 2475754826, %v639
    %v646 = vshrl.u32 2131351028, %v640
    %v647 = vor.u32 %v645, %v646
    %v648 = vshll.u32 2131351028, %v639
    %v649 = vshrl.u32 2102212464, %v640
    %v650 = vor.u32 %v648, %v649
    %v651 = vshll.u32 2102212464, %v639
    %v652 = vshrl.u32 920167782, %v640
    %v653 = vor.u32 %v651, %v652
    %v654 = vshll.u32 920167782, %v639
    %v655 = vshrl.u32 1326507024, %v640
    %v656 = vor.u32 %v654, %v655
    %vm657 = vcmp.lt.s32.totalorder %v638, 1
    %vm658 = vcmp.lt.s32.totalorder %v638, 2
    %vm659 = vcmp.lt.s32.totalorder %v638, 3
    %vm660 = vcmp.lt.s32.totalorder %v638, 4
    %v661 = vsel %vm657, %v641, %v644
    %v662 = vsel %vm660, %v650, 2102212464
    %v663 = vsel %vm659, %v647, %v662
    %v664 = vsel %vm658, %v661, %v663
    %v665 = vsel %vm657, %v644, %v647
    %v666 = vsel %vm660, %v653, 920167782
    %v667 = vsel %vm659, %v650, %v666
    %v668 = vsel %vm658, %v665, %v667
    %v669 = vsel %vm657, %v647, %v650
    %v670 = vsel %vm660, %v656, 1326507024
    %v671 = vsel %vm659, %v653, %v670
    %v672 = vsel %vm658, %v669, %v671
    %v673 = vshll.u32 %v633, 8
    %v674 = vand.u32 %v673, 65535
    %v675 = vshrl.u32 %v673, 16
    %v676 = vand.u32 %v672, 65535
    %v677 = vshrl.u32 %v672, 16
    %v678 = vmul.u32 %v674, %v676
    %v679 = vmul.u32 %v674, %v677
    %v680 = vmul.u32 %v675, %v676
    %v681 = vmul.u32 %v675, %v677
    %v682 = vshll.u32 %v679, 16
    %v683 = vshrl.u32 %v679, 16
    %v684 = vshll.u32 %v680, 16
    %v685 = vshrl.u32 %v680, 16
    %vm686 = vc.u32 %v678, %v682
    %v687 = vsel %vm686, 1, 0
    %v688 = vadd.s32 %v678, %v682
    %v689 = vadd.s32 %v681, %v687
    %vm690 = vc.u32 %v688, %v684
    %v691 = vsel %vm690, 1, 0
    %v692 = vadd.s32 %v688, %v684
    %v693 = vadd.s32 %v689, %v691
    %v694 = vadd.s32 %v693, %v683
    %v695 = vadd.s32 %v694, %v685
    %v696 = vand.u32 %v673, 65535
    %v697 = vshrl.u32 %v673, 16
    %v698 = vand.u32 %v668, 65535
    %v699 = vshrl.u32 %v668, 16
    %v700 = vmul.u32 %v696, %v698
    %v701 = vmul.u32 %v696, %v699
    %v702 = vmul.u32 %v697, %v698
    %v703 = vmul.u32 %v697, %v699
    %v704 = vshll.u32 %v701, 16
    %v705 = vshrl.u32 %v701, 16
    %v706 = vshll.u32 %v702, 16
    %v707 = vshrl.u32 %v702, 16
    %vm708 = vc.u32 %v700, %v704
    %v709 = vsel %vm708, 1, 0
    %v710 = vadd.s32 %v700, %v704
    %v711 = vadd.s32 %v703, %v709
    %vm712 = vc.u32 %v710, %v706
    %v713 = vsel %vm712, 1, 0
    %v714 = vadd.s32 %v710, %v706
    %v715 = vadd.s32 %v711, %v713
    %v716 = vadd.s32 %v715, %v705
    %v717 = vadd.s32 %v716, %v707
    %v718 = vmul.u32 %v673, %v664
    %v719 = vadd.s32 %v695, %v714
    %vm720 = vc.u32 %v695, %v714
    %v721 = vadd.s32 %v717, 1
    %v722 = vsel %vm720, %v721, %v717
    %v723 = vadd.s32 %v718, %v722
    %v724 = vadd.s32 %v723, 536870912
    %v725 = vshrl.u32 %v724, 30
    %v726 = vshll.u32 %v725, 30
    %v727 = vsub.s32 %v723, %v726
    %vm728 = vcmp.lt.s32.totalorder %v727, 0
    %v729 = vsub.s32 0, %v727
    %v730 = vsel %vm728, %v729, %v727
    %v731 = vclz %v730
    %v732 = vsub.s32 %v731, 2
    %vm733 = vcmp.gt.s32.totalorder 0, %v732
    %v734 = vsel %vm733, 0, %v732
    %v735 = vsub.s32 32, %v734
    %v736 = vshll.u32 %v727, %v734
    %v737 = vshrl.u32 %v719, %v735
    %v738 = vor.u32 %v736, %v737
    %v739 = vsub.s32 4294967266, %v734
    %v740 = vadd.s32 %v739, 127
    %v741 = vshll.u32 %v740, 23
    %v742 = vor.u32 4788187, %v741
    %v743 = vand.u32 2147483647, %v742
    %v745 = vcvt.s32.f32 %v738
    %v746 = vmul.f32 %v745, %v743
    %v747 = vxor.u32 %v746, 2147483648
    %v748 = vsel %vm627, %v747, %v746
    %v749 = vsub.s32 4, %v725
    %v750 = vsel %vm627, %v749, %v725
    %v751 = vsel %vm626, %v153, %v748
    %v752 = vsel %vm626, 0, %v750
    %v753 = vmul.f32 %v751, %v751
    %v754 = vmul.f32 %v753, -0.001358992
    %v755 = vadd.f32 %v754, 0.041655596
    %v756 = vmul.f32 %v753, %v755
    %v757 = vadd.f32 %v756, -0.4999988
    %v758 = vmul.f32 %v753, %v757
    %v759 = vadd.f32 1.0, %v758
    %v760 = vmul.f32 %v751, %v751
    %v761 = vmul.f32 %v760, -0.00019511016
    %v762 = vadd.f32 %v761, 0.008332121
    %v763 = vmul.f32 %v760, %v762
    %v764 = vadd.f32 %v763, -0.16666654
    %v765 = vmul.f32 %v760, %v764
    %v766 = vadd.f32 %v765, 1.0
    %v767 = vmul.f32 %v766, %v751
    %vm768 = vweird.f32 %v153
    %v769 = vand.u32 %v752, 3
    %vm770 = vcmp.lt.s32.totalorder %v769, 2
    %vm771 = vcmp.eq.s32.totalorder %v769, 0
    %v772 = vxor.u32 %v767, 2147483648
    %v773 = vsel %vm771, %v759, %v772
    %vm774 = vcmp.eq.s32.totalorder %v769, 2
    %v775 = vxor.u32 %v759, 2147483648
    %v776 = vsel %vm774, %v775, %v767
    %v777 = vsel %vm770, %v773, %v776
    %v778 = vsel %vm768, nan, %v777
    %v779 = vand.u32 2147483647, %v154
    %vm780 = vcmp.le.f32.partialorder %v779, 0.7853982
    %vm781 = vcmp.lt.s32.totalorder %v154, 0
    %v782 = vand.u32 %v154, 2139095040
    %v783 = vshrl.u32 %v782, 23
    %v784 = vsub.s32 %v783, 127
    %v785 = vand.u32 2147483647, %v154
    %v786 = vand.u32 %v785, 8388607
    %v787 = vor.u32 %v786, 8388608
    %v788 = vsub.s32 0, %v787
    %v789 = vadd.s32 %v784, 1
    %vm790 = vcmp.gt.s32.totalorder %v789, 0
    %v791 = vsel %vm790, %v789, 0
    %v792 = vshrl.u32 %v791, 5
    %v793 = vand.u32 %v791, 31
    %v794 = vsub.s32 32, %v793
    %v795 = vshrl.u32 683565275, %v794
    %v796 = vshll.u32 683565275, %v793
    %v797 = vshrl.u32 2475754826, %v794
    %v798 = vor.u32 %v796, %v797
    %v799 = vshll.u32 2475754826, %v793
    %v800 = vshrl.u32 2131351028, %v794
    %v801 = vor.u32 %v799, %v800
    %v802 = vshll.u32 2131351028, %v793
    %v803 = vshrl.u32 2102212464, %v794
    %v804 = vor.u32 %v802, %v803
    %v805 = vshll.u32 2102212464, %v793
    %v806 = vshrl.u32 920167782, %v794
    %v807 = vor.u32 %v805, %v806
    %v808 = vshll.u32 920167782, %v793
    %v809 = vshrl.u32 1326507024, %v794
    %v810 = vor.u32 %v808, %v809
    %vm811 = vcmp.lt.s32.totalorder %v792, 1
    %vm812 = vcmp.lt.s32.totalorder %v792, 2
    %vm813 = vcmp.lt.s32.totalorder %v792, 3
    %vm814 = vcmp.lt.s32.totalorder %v792, 4
    %v815 = vsel %vm811, %v795, %v798
    %v816 = vsel %vm814, %v804, 2102212464
    %v817 = vsel %vm813, %v801, %v816
    %v818 = vsel %vm812, %v815, %v817
    %v819 = vsel %vm811, %v798, %v801
    %v820 = vsel %vm814, %v807, 920167782
    %v821 = vsel %vm813, %v804, %v820
    %v822 = vsel %vm812, %v819, %v821
    %v823 = vsel %vm811, %v801, %v804
    %v824 = vsel %vm814, %v810, 1326507024
    %v825 = vsel %vm813, %v807, %v824
    %v826 = vsel %vm812, %v823, %v825
    %v827 = vshll.u32 %v787, 8
    %v828 = vand.u32 %v827, 65535
    %v829 = vshrl.u32 %v827, 16
    %v830 = vand.u32 %v826, 65535
    %v831 = vshrl.u32 %v826, 16
    %v832 = vmul.u32 %v828, %v830
    %v833 = vmul.u32 %v828, %v831
    %v834 = vmul.u32 %v829, %v830
    %v835 = vmul.u32 %v829, %v831
    %v836 = vshll.u32 %v833, 16
    %v837 = vshrl.u32 %v833, 16
    %v838 = vshll.u32 %v834, 16
    %v839 = vshrl.u32 %v834, 16
    %vm840 = vc.u32 %v832, %v836
    %v841 = vsel %vm840, 1, 0
    %v842 = vadd.s32 %v832, %v836
    %v843 = vadd.s32 %v835, %v841
    %vm844 = vc.u32 %v842, %v838
    %v845 = vsel %vm844, 1, 0
    %v846 = vadd.s32 %v842, %v838
    %v847 = vadd.s32 %v843, %v845
    %v848 = vadd.s32 %v847, %v837
    %v849 = vadd.s32 %v848, %v839
    %v850 = vand.u32 %v827, 65535
    %v851 = vshrl.u32 %v827, 16
    %v852 = vand.u32 %v822, 65535
    %v853 = vshrl.u32 %v822, 16
    %v854 = vmul.u32 %v850, %v852
    %v855 = vmul.u32 %v850, %v853
    %v856 = vmul.u32 %v851, %v852
    %v857 = vmul.u32 %v851, %v853
    %v858 = vshll.u32 %v855, 16
    %v859 = vshrl.u32 %v855, 16
    %v860 = vshll.u32 %v856, 16
    %v861 = vshrl.u32 %v856, 16
    %vm862 = vc.u32 %v854, %v858
    %v863 = vsel %vm862, 1, 0
    %v864 = vadd.s32 %v854, %v858
    %v865 = vadd.s32 %v857, %v863
    %vm866 = vc.u32 %v864, %v860
    %v867 = vsel %vm866, 1, 0
    %v868 = vadd.s32 %v864, %v860
    %v869 = vadd.s32 %v865, %v867
    %v870 = vadd.s32 %v869, %v859
    %v871 = vadd.s32 %v870, %v861
    %v872 = vmul.u32 %v827, %v818
    %v873 = vadd.s32 %v849, %v868
    %vm874 = vc.u32 %v849, %v868
    %v875 = vadd.s32 %v871, 1
    %v876 = vsel %vm874, %v875, %v871
    %v877 = vadd.s32 %v872, %v876
    %v878 = vadd.s32 %v877, 536870912
    %v879 = vshrl.u32 %v878, 30
    %v880 = vshll.u32 %v879, 30
    %v881 = vsub.s32 %v877, %v880
    %vm882 = vcmp.lt.s32.totalorder %v881, 0
    %v883 = vsub.s32 0, %v881
    %v884 = vsel %vm882, %v883, %v881
    %v885 = vclz %v884
    %v886 = vsub.s32 %v885, 2
    %vm887 = vcmp.gt.s32.totalorder 0, %v886
    %v888 = vsel %vm887, 0, %v886
    %v889 = vsub.s32 32, %v888
    %v890 = vshll.u32 %v881, %v888
    %v891 = vshrl.u32 %v873, %v889
    %v892 = vor.u32 %v890, %v891
    %v893 = vsub.s32 4294967266, %v888
    %v894 = vadd.s32 %v893, 127
    %v895 = vshll.u32 %v894, 23
    %v896 = vor.u32 4788187, %v895
    %v897 = vand.u32 2147483647, %v896
    %v899 = vcvt.s32.f32 %v892
    %v900 = vmul.f32 %v899, %v897
    %v901 = vxor.u32 %v900, 2147483648
    %v902 = vsel %vm781, %v901, %v900
    %v903 = vsub.s32 4, %v879
    %v904 = vsel %vm781, %v903, %v879
    %v905 = vsel %vm780, %v154, %v902
    %v906 = vsel %vm780, 0, %v904
    %v907 = vmul.f32 %v905, %v905
    %v908 = vmul.f32 %v907, -0.001358992
    %v909 = vadd.f32 %v908, 0.041655596
    %v910 = vmul.f32 %v907, %v909
    %v911 = vadd.f32 %v910, -0.4999988
    %v912 = vmul.f32 %v907, %v911
    %v913 = vadd.f32 1.0, %v912
    %v914 = vmul.f32 %v905, %v905
    %v915 = vmul.f32 %v914, -0.00019511016
    %v916 = vadd.f32 %v915, 0.008332121
    %v917 = vmul.f32 %v914, %v916
    %v918 = vadd.f32 %v917, -0.16666654
    %v919 = vmul.f32 %v914, %v918
    %v920 = vadd.f32 %v919, 1.0
    %v921 = vmul.f32 %v920, %v905
    %vm922 = vweird.f32 %v154
    %v923 = vand.u32 %v906, 3
    %vm924 = vcmp.lt.s32.totalorder %v923, 2
    %vm925 = vcmp.eq.s32.totalorder %v923, 0
    %v926 = vxor.u32 %v921, 2147483648
    %v927 = vsel %vm925, %v913, %v926
    %vm928 = vcmp.eq.s32.totalorder %v923, 2
    %v929 = vxor.u32 %v913, 2147483648
    %v930 = vsel %vm928, %v929, %v921
    %v931 = vsel %vm924, %v927, %v930
    %v932 = vsel %vm922, nan, %v931
    %v933 = vand.u32 2147483647, %v155
    %vm934 = vcmp.le.f32.partialorder %v933, 0.7853982
    %vm935 = vcmp.lt.s32.totalorder %v155, 0
    %v936 = vand.u32 %v155, 2139095040
    %v937 = vshrl.u32 %v936, 23
    %v938 = vsub.s32 %v937, 127
    %v939 = vand.u32 2147483647, %v155
    %v940 = vand.u32 %v939, 8388607
    %v941 = vor.u32 %v940, 8388608
    %v942 = vsub.s32 0, %v941
    %v943 = vadd.s32 %v938, 1
    %vm944 = vcmp.gt.s32.totalorder %v943, 0
    %v945 = vsel %vm944, %v943, 0
    %v946 = vshrl.u32 %v945, 5
    %v947 = vand.u32 %v945, 31
    %v948 = vsub.s32 32, %v947
    %v949 = vshrl.u32 683565275, %v948
    %v950 = vshll.u32 683565275, %v947
    %v951 = vshrl.u32 2475754826, %v948
    %v952 = vor.u32 %v950, %v951
    %v953 = vshll.u32 2475754826, %v947
    %v954 = vshrl.u32 2131351028, %v948
    %v955 = vor.u32 %v953, %v954
    %v956 = vshll.u32 2131351028, %v947
    %v957 = vshrl.u32 2102212464, %v948
    %v958 = vor.u32 %v956, %v957
    %v959 = vshll.u32 2102212464, %v947
    %v960 = vshrl.u32 920167782, %v948
    %v961 = vor.u32 %v959, %v960
    %v962 = vshll.u32 920167782, %v947
    %v963 = vshrl.u32 1326507024, %v948
    %v964 = vor.u32 %v962, %v963
    %vm965 = vcmp.lt.s32.totalorder %v946, 1
    %vm966 = vcmp.lt.s32.totalorder %v946, 2
    %vm967 = vcmp.lt.s32.totalorder %v946, 3
    %vm968 = vcmp.lt.s32.totalorder %v946, 4
    %v969 = vsel %vm965, %v949, %v952
    %v970 = vsel %vm968, %v958, 2102212464
    %v971 = vsel %vm967, %v955, %v970
    %v972 = vsel %vm966, %v969, %v971
    %v973 = vsel %vm965, %v952, %v955
    %v974 = vsel %vm968, %v961, 920167782
    %v975 = vsel %vm967, %v958, %v974
    %v976 = vsel %vm966, %v973, %v975
    %v977 = vsel %vm965, %v955, %v958
    %v978 = vsel %vm968, %v964, 1326507024
    %v979 = vsel %vm967, %v961, %v978
    %v980 = vsel %vm966, %v977, %v979
    %v981 = vshll.u32 %v941, 8
    %v982 = vand.u32 %v981, 65535
    %v983 = vshrl.u32 %v981, 16
    %v984 = vand.u32 %v980, 65535
    %v985 = vshrl.u32 %v980, 16
    %v986 = vmul.u32 %v982, %v984
    %v987 = vmul.u32 %v982, %v985
    %v988 = vmul.u32 %v983, %v984
    %v989 = vmul.u32 %v983, %v985
    %v990 = vshll.u32 %v987, 16
    %v991 = vshrl.u32 %v987, 16
    %v992 = vshll.u32 %v988, 16
    %v993 = vshrl.u32 %v988, 16
    %vm994 = vc.u32 %v986, %v990
    %v995 = vsel %vm994, 1, 0
    %v996 = vadd.s32 %v986, %v990
    %v997 = vadd.s32 %v989, %v995
    %vm998 = vc.u32 %v996, %v992
    %v999 = vsel %vm998, 1, 0
    %v1000 = vadd.s32 %v996, %v992
    %v1001 = vadd.s32 %v997, %v999
    %v1002 = vadd.s32 %v1001, %v991
    %v1003 = vadd.s32 %v1002, %v993
    %v1004 = vand.u32 %v981, 65535
    %v1005 = vshrl.u32 %v981, 16
    %v1006 = vand.u32 %v976, 65535
    %v1007 = vshrl.u32 %v976, 16
    %v1008 = vmul.u32 %v1004, %v1006
    %v1009 = vmul.u32 %v1004, %v1007
    %v1010 = vmul.u32 %v1005, %v1006
    %v1011 = vmul.u32 %v1005, %v1007
    %v1012 = vshll.u32 %v1009, 16
    %v1013 = vshrl.u32 %v1009, 16
    %v1014 = vshll.u32 %v1010, 16
    %v1015 = vshrl.u32 %v1010, 16
    %vm1016 = vc.u32 %v1008, %v1012
    %v1017 = vsel %vm1016, 1, 0
    %v1018 = vadd.s32 %v1008, %v1012
    %v1019 = vadd.s32 %v1011, %v1017
    %vm1020 = vc.u32 %v1018, %v1014
    %v1021 = vsel %vm1020, 1, 0
    %v1022 = vadd.s32 %v1018, %v1014
    %v1023 = vadd.s32 %v1019, %v1021
    %v1024 = vadd.s32 %v1023, %v1013
    %v1025 = vadd.s32 %v1024, %v1015
    %v1026 = vmul.u32 %v981, %v972
    %v1027 = vadd.s32 %v1003, %v1022
    %vm1028 = vc.u32 %v1003, %v1022
    %v1029 = vadd.s32 %v1025, 1
    %v1030 = vsel %vm1028, %v1029, %v1025
    %v1031 = vadd.s32 %v1026, %v1030
    %v1032 = vadd.s32 %v1031, 536870912
    %v1033 = vshrl.u32 %v1032, 30
    %v1034 = vshll.u32 %v1033, 30
    %v1035 = vsub.s32 %v1031, %v1034
    %vm1036 = vcmp.lt.s32.totalorder %v1035, 0
    %v1037 = vsub.s32 0, %v1035
    %v1038 = vsel %vm1036, %v1037, %v1035
    %v1039 = vclz %v1038
    %v1040 = vsub.s32 %v1039, 2
    %vm1041 = vcmp.gt.s32.totalorder 0, %v1040
    %v1042 = vsel %vm1041, 0, %v1040
    %v1043 = vsub.s32 32, %v1042
    %v1044 = vshll.u32 %v1035, %v1042
    %v1045 = vshrl.u32 %v1027, %v1043
    %v1046 = vor.u32 %v1044, %v1045
    %v1047 = vsub.s32 4294967266, %v1042
    %v1048 = vadd.s32 %v1047, 127
    %v1049 = vshll.u32 %v1048, 23
    %v1050 = vor.u32 4788187, %v1049
    %v1051 = vand.u32 2147483647, %v1050
    %v1053 = vcvt.s32.f32 %v1046
    %v1054 = vmul.f32 %v1053, %v1051
    %v1055 = vxor.u32 %v1054, 2147483648
    %v1056 = vsel %vm935, %v1055, %v1054
    %v1057 = vsub.s32 4, %v1033
    %v1058 = vsel %vm935, %v1057, %v1033
    %v1059 = vsel %vm934, %v155, %v1056
    %v1060 = vsel %vm934, 0, %v1058
    %v1061 = vmul.f32 %v1059, %v1059
    %v1062 = vmul.f32 %v1061, -0.001358992
    %v1063 = vadd.f32 %v1062, 0.041655596
    %v1064 = vmul.f32 %v1061, %v1063
    %v1065 = vadd.f32 %v1064, -0.4999988
    %v1066 = vmul.f32 %v1061, %v1065
    %v1067 = vadd.f32 1.0, %v1066
    %v1068 = vmul.f32 %v1059, %v1059
    %v1069 = vmul.f32 %v1068, -0.00019511016
    %v1070 = vadd.f32 %v1069, 0.008332121
    %v1071 = vmul.f32 %v1068, %v1070
    %v1072 = vadd.f32 %v1071, -0.16666654
    %v1073 = vmul.f32 %v1068, %v1072
    %v1074 = vadd.f32 %v1073, 1.0
    %v1075 = vmul.f32 %v1074, %v1059
    %vm1076 = vweird.f32 %v155
    %v1077 = vand.u32 %v1060, 3
    %vm1078 = vcmp.lt.s32.totalorder %v1077, 2
    %vm1079 = vcmp.eq.s32.totalorder %v1077, 0
    %v1080 = vxor.u32 %v1075, 2147483648
    %v1081 = vsel %vm1079, %v1067, %v1080
    %vm1082 = vcmp.eq.s32.totalorder %v1077, 2
    %v1083 = vxor.u32 %v1067, 2147483648
    %v1084 = vsel %vm1082, %v1083, %v1075
    %v1085 = vsel %vm1078, %v1081, %v1084
    %v1086 = vsel %vm1076, nan, %v1085
    %v1087 = vand.u32 2147483647, %v156
    %vm1088 = vcmp.le.f32.partialorder %v1087, 0.7853982
    %vm1089 = vcmp.lt.s32.totalorder %v156, 0
    %v1090 = vand.u32 %v156, 2139095040
    %v1091 = vshrl.u32 %v1090, 23
    %v1092 = vsub.s32 %v1091, 127
    %v1093 = vand.u32 2147483647, %v156
    %v1094 = vand.u32 %v1093, 8388607
    %v1095 = vor.u32 %v1094, 8388608
    %v1096 = vsub.s32 0, %v1095
    %v1097 = vadd.s32 %v1092, 1
    %vm1098 = vcmp.gt.s32.totalorder %v1097, 0
    %v1099 = vsel %vm1098, %v1097, 0
    %v1100 = vshrl.u32 %v1099, 5
    %v1101 = vand.u32 %v1099, 31
    %v1102 = vsub.s32 32, %v1101
    %v1103 = vshrl.u32 683565275, %v1102
    %v1104 = vshll.u32 683565275, %v1101
    %v1105 = vshrl.u32 2475754826, %v1102
    %v1106 = vor.u32 %v1104, %v1105
    %v1107 = vshll.u32 2475754826, %v1101
    %v1108 = vshrl.u32 2131351028, %v1102
    %v1109 = vor.u32 %v1107, %v1108
    %v1110 = vshll.u32 2131351028, %v1101
    %v1111 = vshrl.u32 2102212464, %v1102
    %v1112 = vor.u32 %v1110, %v1111
    %v1113 = vshll.u32 2102212464, %v1101
    %v1114 = vshrl.u32 920167782, %v1102
    %v1115 = vor.u32 %v1113, %v1114
    %v1116 = vshll.u32 920167782, %v1101
    %v1117 = vshrl.u32 1326507024, %v1102
    %v1118 = vor.u32 %v1116, %v1117
    %vm1119 = vcmp.lt.s32.totalorder %v1100, 1
    %vm1120 = vcmp.lt.s32.totalorder %v1100, 2
    %vm1121 = vcmp.lt.s32.totalorder %v1100, 3
    %vm1122 = vcmp.lt.s32.totalorder %v1100, 4
    %v1123 = vsel %vm1119, %v1103, %v1106
    %v1124 = vsel %vm1122, %v1112, 2102212464
    %v1125 = vsel %vm1121, %v1109, %v1124
    %v1126 = vsel %vm1120, %v1123, %v1125
    %v1127 = vsel %vm1119, %v1106, %v1109
    %v1128 = vsel %vm1122, %v1115, 920167782
    %v1129 = vsel %vm1121, %v1112, %v1128
    %v1130 = vsel %vm1120, %v1127, %v1129
    %v1131 = vsel %vm1119, %v1109, %v1112
    %v1132 = vsel %vm1122, %v1118, 1326507024
    %v1133 = vsel %vm1121, %v1115, %v1132
    %v1134 = vsel %vm1120, %v1131, %v1133
    %v1135 = vshll.u32 %v1095, 8
    %v1136 = vand.u32 %v1135, 65535
    %v1137 = vshrl.u32 %v1135, 16
    %v1138 = vand.u32 %v1134, 65535
    %v1139 = vshrl.u32 %v1134, 16
    %v1140 = vmul.u32 %v1136, %v1138
    %v1141 = vmul.u32 %v1136, %v1139
    %v1142 = vmul.u32 %v1137, %v1138
    %v1143 = vmul.u32 %v1137, %v1139
    %v1144 = vshll.u32 %v1141, 16
    %v1145 = vshrl.u32 %v1141, 16
    %v1146 = vshll.u32 %v1142, 16
    %v1147 = vshrl.u32 %v1142, 16
    %vm1148 = vc.u32 %v1140, %v1144
    %v1149 = vsel %vm1148, 1, 0
    %v1150 = vadd.s32 %v1140, %v1144
    %v1151 = vadd.s32 %v1143, %v1149
    %vm1152 = vc.u32 %v1150, %v1146
    %v1153 = vsel %vm1152, 1, 0
    %v1154 = vadd.s32 %v1150, %v1146
    %v1155 = vadd.s32 %v1151, %v1153
    %v1156 = vadd.s32 %v1155, %v1145
    %v1157 = vadd.s32 %v1156, %v1147
    %v1158 = vand.u32 %v1135, 65535
    %v1159 = vshrl.u32 %v1135, 16
    %v1160 = vand.u32 %v1130, 65535
    %v1161 = vshrl.u32 %v1130, 16
    %v1162 = vmul.u32 %v1158, %v1160
    %v1163 = vmul.u32 %v1158, %v1161
    %v1164 = vmul.u32 %v1159, %v1160
    %v1165 = vmul.u32 %v1159, %v1161
    %v1166 = vshll.u32 %v1163, 16
    %v1167 = vshrl.u32 %v1163, 16
    %v1168 = vshll.u32 %v1164, 16
    %v1169 = vshrl.u32 %v1164, 16
    %vm1170 = vc.u32 %v1162, %v1166
    %v1171 = vsel %vm1170, 1, 0
    %v1172 = vadd.s32 %v1162, %v1166
    %v1173 = vadd.s32 %v1165, %v1171
    %vm1174 = vc.u32 %v1172, %v1168
    %v1175 = vsel %vm1174, 1, 0
    %v1176 = vadd.s32 %v1172, %v1168
    %v1177 = vadd.s32 %v1173, %v1175
    %v1178 = vadd.s32 %v1177, %v1167
    %v1179 = vadd.s32 %v1178, %v1169
    %v1180 = vmul.u32 %v1135, %v1126
    %v1181 = vadd.s32 %v1157, %v1176
    %vm1182 = vc.u32 %v1157, %v1176
    %v1183 = vadd.s32 %v1179, 1
    %v1184 = vsel %vm1182, %v1183, %v1179
    %v1185 = vadd.s32 %v1180, %v1184
    %v1186 = vadd.s32 %v1185, 536870912
    %v1187 = vshrl.u32 %v1186, 30
    %v1188 = vshll.u32 %v1187, 30
    %v1189 = vsub.s32 %v1185, %v1188
    %vm1190 = vcmp.lt.s32.totalorder %v1189, 0
    %v1191 = vsub.s32 0, %v1189
    %v1192 = vsel %vm1190, %v1191, %v1189
    %v1193 = vclz %v1192
    %v1194 = vsub.s32 %v1193, 2
    %vm1195 = vcmp.gt.s32.totalorder 0, %v1194
    %v1196 = vsel %vm1195, 0, %v1194
    %v1197 = vsub.s32 32, %v1196
    %v1198 = vshll.u32 %v1189, %v1196
    %v1199 = vshrl.u32 %v1181, %v1197
    %v1200 = vor.u32 %v1198, %v1199
    %v1201 = vsub.s32 4294967266, %v1196
    %v1202 = vadd.s32 %v1201, 127
    %v1203 = vshll.u32 %v1202, 23
    %v1204 = vor.u32 4788187, %v1203
    %v1205 = vand.u32 2147483647, %v1204
    %v1207 = vcvt.s32.f32 %v1200
    %v1208 = vmul.f32 %v1207, %v1205
    %v1209 = vxor.u32 %v1208, 2147483648
    %v1210 = vsel %vm1089, %v1209, %v1208
    %v1211 = vsub.s32 4, %v1187
    %v1212 = vsel %vm1089, %v1211, %v1187
    %v1213 = vsel %vm1088, %v156, %v1210
    %v1214 = vsel %vm1088, 0, %v1212
    %v1215 = vmul.f32 %v1213, %v1213
    %v1216 = vmul.f32 %v1215, -0.001358992
    %v1217 = vadd.f32 %v1216, 0.041655596
    %v1218 = vmul.f32 %v1215, %v1217
    %v1219 = vadd.f32 %v1218, -0.4999988
    %v1220 = vmul.f32 %v1215, %v1219
    %v1221 = vadd.f32 1.0, %v1220
    %v1222 = vmul.f32 %v1213, %v1213
    %v1223 = vmul.f32 %v1222, -0.00019511016
    %v1224 = vadd.f32 %v1223, 0.008332121
    %v1225 = vmul.f32 %v1222, %v1224
    %v1226 = vadd.f32 %v1225, -0.16666654
    %v1227 = vmul.f32 %v1222, %v1226
    %v1228 = vadd.f32 %v1227, 1.0
    %v1229 = vmul.f32 %v1228, %v1213
    %vm1230 = vweird.f32 %v156
    %v1231 = vand.u32 %v1214, 3
    %vm1232 = vcmp.lt.s32.totalorder %v1231, 2
    %vm1233 = vcmp.eq.s32.totalorder %v1231, 0
    %v1234 = vxor.u32 %v1229, 2147483648
    %v1235 = vsel %vm1233, %v1221, %v1234
    %vm1236 = vcmp.eq.s32.totalorder %v1231, 2
    %v1237 = vxor.u32 %v1221, 2147483648
    %v1238 = vsel %vm1236, %v1237, %v1229
    %v1239 = vsel %vm1232, %v1235, %v1238
    %v1240 = vsel %vm1230, nan, %v1239
    %v1241 = vand.u32 2147483647, %v157
    %vm1242 = vcmp.le.f32.partialorder %v1241, 0.7853982
    %vm1243 = vcmp.lt.s32.totalorder %v157, 0
    %v1244 = vand.u32 %v157, 2139095040
    %v1245 = vshrl.u32 %v1244, 23
    %v1246 = vsub.s32 %v1245, 127
    %v1247 = vand.u32 2147483647, %v157
    %v1248 = vand.u32 %v1247, 8388607
    %v1249 = vor.u32 %v1248, 8388608
    %v1250 = vsub.s32 0, %v1249
    %v1251 = vadd.s32 %v1246, 1
    %vm1252 = vcmp.gt.s32.totalorder %v1251, 0
    %v1253 = vsel %vm1252, %v1251, 0
    %v1254 = vshrl.u32 %v1253, 5
    %v1255 = vand.u32 %v1253, 31
    %v1256 = vsub.s32 32, %v1255
    %v1257 = vshrl.u32 683565275, %v1256
    %v1258 = vshll.u32 683565275, %v1255
    %v1259 = vshrl.u32 2475754826, %v1256
    %v1260 = vor.u32 %v1258, %v1259
    %v1261 = vshll.u32 2475754826, %v1255
    %v1262 = vshrl.u32 2131351028, %v1256
    %v1263 = vor.u32 %v1261, %v1262
    %v1264 = vshll.u32 2131351028, %v1255
    %v1265 = vshrl.u32 2102212464, %v1256
    %v1266 = vor.u32 %v1264, %v1265
    %v1267 = vshll.u32 2102212464, %v1255
    %v1268 = vshrl.u32 920167782, %v1256
    %v1269 = vor.u32 %v1267, %v1268
    %v1270 = vshll.u32 920167782, %v1255
    %v1271 = vshrl.u32 1326507024, %v1256
    %v1272 = vor.u32 %v1270, %v1271
    %vm1273 = vcmp.lt.s32.totalorder %v1254, 1
    %vm1274 = vcmp.lt.s32.totalorder %v1254, 2
    %vm1275 = vcmp.lt.s32.totalorder %v1254, 3
    %vm1276 = vcmp.lt.s32.totalorder %v1254, 4
    %v1277 = vsel %vm1273, %v1257, %v1260
    %v1278 = vsel %vm1276, %v1266, 2102212464
    %v1279 = vsel %vm1275, %v1263, %v1278
    %v1280 = vsel %vm1274, %v1277, %v1279
    %v1281 = vsel %vm1273, %v1260, %v1263
    %v1282 = vsel %vm1276, %v1269, 920167782
    %v1283 = vsel %vm1275, %v1266, %v1282
    %v1284 = vsel %vm1274, %v1281, %v1283
    %v1285 = vsel %vm1273, %v1263, %v1266
    %v1286 = vsel %vm1276, %v1272, 1326507024
    %v1287 = vsel %vm1275, %v1269, %v1286
    %v1288 = vsel %vm1274, %v1285, %v1287
    %v1289 = vshll.u32 %v1249, 8
    %v1290 = vand.u32 %v1289, 65535
    %v1291 = vshrl.u32 %v1289, 16
    %v1292 = vand.u32 %v1288, 65535
    %v1293 = vshrl.u32 %v1288, 16
    %v1294 = vmul.u32 %v1290, %v1292
    %v1295 = vmul.u32 %v1290, %v1293
    %v1296 = vmul.u32 %v1291, %v1292
    %v1297 = vmul.u32 %v1291, %v1293
    %v1298 = vshll.u32 %v1295, 16
    %v1299 = vshrl.u32 %v1295, 16
    %v1300 = vshll.u32 %v1296, 16
    %v1301 = vshrl.u32 %v1296, 16
    %vm1302 = vc.u32 %v1294, %v1298
    %v1303 = vsel %vm1302, 1, 0
    %v1304 = vadd.s32 %v1294, %v1298
    %v1305 = vadd.s32 %v1297, %v1303
    %vm1306 = vc.u32 %v1304, %v1300
    %v1307 = vsel %vm1306, 1, 0
    %v1308 = vadd.s32 %v1304, %v1300
    %v1309 = vadd.s32 %v1305, %v1307
    %v1310 = vadd.s32 %v1309, %v1299
    %v1311 = vadd.s32 %v1310, %v1301
    %v1312 = vand.u32 %v1289, 65535
    %v1313 = vshrl.u32 %v1289, 16
    %v1314 = vand.u32 %v1284, 65535
    %v1315 = vshrl.u32 %v1284, 16
    %v1316 = vmul.u32 %v1312, %v1314
    %v1317 = vmul.u32 %v1312, %v1315
    %v1318 = vmul.u32 %v1313, %v1314
    %v1319 = vmul.u32 %v1313, %v1315
    %v1320 = vshll.u32 %v1317, 16
    %v1321 = vshrl.u32 %v1317, 16
    %v1322 = vshll.u32 %v1318, 16
    %v1323 = vshrl.u32 %v1318, 16
    %vm1324 = vc.u32 %v1316, %v1320
    %v1325 = vsel %vm1324, 1, 0
    %v1326 = vadd.s32 %v1316, %v1320
    %v1327 = vadd.s32 %v1319, %v1325
    %vm1328 = vc.u32 %v1326, %v1322
    %v1329 = vsel %vm1328, 1, 0
    %v1330 = vadd.s32 %v1326, %v1322
    %v1331 = vadd.s32 %v1327, %v1329
    %v1332 = vadd.s32 %v1331, %v1321
    %v1333 = vadd.s32 %v1332, %v1323
    %v1334 = vmul.u32 %v1289, %v1280
    %v1335 = vadd.s32 %v1311, %v1330
    %vm1336 = vc.u32 %v1311, %v1330
    %v1337 = vadd.s32 %v1333, 1
    %v1338 = vsel %vm1336, %v1337, %v1333
    %v1339 = vadd.s32 %v1334, %v1338
    %v1340 = vadd.s32 %v1339, 536870912
    %v1341 = vshrl.u32 %v1340, 30
    %v1342 = vshll.u32 %v1341, 30
    %v1343 = vsub.s32 %v1339, %v1342
    %vm1344 = vcmp.lt.s32.totalorder %v1343, 0
    %v1345 = vsub.s32 0, %v1343
    %v1346 = vsel %vm1344, %v1345, %v1343
    %v1347 = vclz %v1346
    %v1348 = vsub.s32 %v1347, 2
    %vm1349 = vcmp.gt.s32.totalorder 0, %v1348
    %v1350 = vsel %vm1349, 0, %v1348
    %v1351 = vsub.s32 32, %v1350
    %v1352 = vshll.u32 %v1343, %v1350
    %v1353 = vshrl.u32 %v1335, %v1351
    %v1354 = vor.u32 %v1352, %v1353
    %v1355 = vsub.s32 4294967266, %v1350
    %v1356 = vadd.s32 %v1355, 127
    %v1357 = vshll.u32 %v1356, 23
    %v1358 = vor.u32 4788187, %v1357
    %v1359 = vand.u32 2147483647, %v1358
    %v1361 = vcvt.s32.f32 %v1354
    %v1362 = vmul.f32 %v1361, %v1359
    %v1363 = vxor.u32 %v1362, 2147483648
    %v1364 = vsel %vm1243, %v1363, %v1362
    %v1365 = vsub.s32 4, %v1341
    %v1366 = vsel %vm1243, %v1365, %v1341
    %v1367 = vsel %vm1242, %v157, %v1364
    %v1368 = vsel %vm1242, 0, %v1366
    %v1369 = vmul.f32 %v1367, %v1367
    %v1370 = vmul.f32 %v1369, -0.001358992
    %v1371 = vadd.f32 %v1370, 0.041655596
    %v1372 = vmul.f32 %v1369, %v1371
    %v1373 = vadd.f32 %v1372, -0.4999988
    %v1374 = vmul.f32 %v1369, %v1373
    %v1375 = vadd.f32 1.0, %v1374
    %v1376 = vmul.f32 %v1367, %v1367
    %v1377 = vmul.f32 %v1376, -0.00019511016
    %v1378 = vadd.f32 %v1377, 0.008332121
    %v1379 = vmul.f32 %v1376, %v1378
    %v1380 = vadd.f32 %v1379, -0.16666654
    %v1381 = vmul.f32 %v1376, %v1380
    %v1382 = vadd.f32 %v1381, 1.0
    %v1383 = vmul.f32 %v1382, %v1367
    %vm1384 = vweird.f32 %v157
    %v1385 = vand.u32 %v1368, 3
    %vm1386 = vcmp.lt.s32.totalorder %v1385, 2
    %vm1387 = vcmp.eq.s32.totalorder %v1385, 0
    %v1388 = vxor.u32 %v1383, 2147483648
    %v1389 = vsel %vm1387, %v1375, %v1388
    %vm1390 = vcmp.eq.s32.totalorder %v1385, 2
    %v1391 = vxor.u32 %v1375, 2147483648
    %v1392 = vsel %vm1390, %v1391, %v1383
    %v1393 = vsel %vm1386, %v1389, %v1392
    %v1394 = vsel %vm1384, nan, %v1393
    %v1395 = vand.u32 2147483647, %v158
    %vm1396 = vcmp.le.f32.partialorder %v1395, 0.7853982
    %vm1397 = vcmp.lt.s32.totalorder %v158, 0
    %v1398 = vand.u32 %v158, 2139095040
    %v1399 = vshrl.u32 %v1398, 23
    %v1400 = vsub.s32 %v1399, 127
    %v1401 = vand.u32 2147483647, %v158
    %v1402 = vand.u32 %v1401, 8388607
    %v1403 = vor.u32 %v1402, 8388608
    %v1404 = vsub.s32 0, %v1403
    %v1405 = vadd.s32 %v1400, 1
    %vm1406 = vcmp.gt.s32.totalorder %v1405, 0
    %v1407 = vsel %vm1406, %v1405, 0
    %v1408 = vshrl.u32 %v1407, 5
    %v1409 = vand.u32 %v1407, 31
    %v1410 = vsub.s32 32, %v1409
    %v1411 = vshrl.u32 683565275, %v1410
    %v1412 = vshll.u32 683565275, %v1409
    %v1413 = vshrl.u32 2475754826, %v1410
    %v1414 = vor.u32 %v1412, %v1413
    %v1415 = vshll.u32 2475754826, %v1409
    %v1416 = vshrl.u32 2131351028, %v1410
    %v1417 = vor.u32 %v1415, %v1416
    %v1418 = vshll.u32 2131351028, %v1409
    %v1419 = vshrl.u32 2102212464, %v1410
    %v1420 = vor.u32 %v1418, %v1419
    %v1421 = vshll.u32 2102212464, %v1409
    %v1422 = vshrl.u32 920167782, %v1410
    %v1423 = vor.u32 %v1421, %v1422
    %v1424 = vshll.u32 920167782, %v1409
    %v1425 = vshrl.u32 1326507024, %v1410
    %v1426 = vor.u32 %v1424, %v1425
    %vm1427 = vcmp.lt.s32.totalorder %v1408, 1
    %vm1428 = vcmp.lt.s32.totalorder %v1408, 2
    %vm1429 = vcmp.lt.s32.totalorder %v1408, 3
    %vm1430 = vcmp.lt.s32.totalorder %v1408, 4
    %v1431 = vsel %vm1427, %v1411, %v1414
    %v1432 = vsel %vm1430, %v1420, 2102212464
    %v1433 = vsel %vm1429, %v1417, %v1432
    %v1434 = vsel %vm1428, %v1431, %v1433
    %v1435 = vsel %vm1427, %v1414, %v1417
    %v1436 = vsel %vm1430, %v1423, 920167782
    %v1437 = vsel %vm1429, %v1420, %v1436
    %v1438 = vsel %vm1428, %v1435, %v1437
    %v1439 = vsel %vm1427, %v1417, %v1420
    %v1440 = vsel %vm1430, %v1426, 1326507024
    %v1441 = vsel %vm1429, %v1423, %v1440
    %v1442 = vsel %vm1428, %v1439, %v1441
    %v1443 = vshll.u32 %v1403, 8
    %v1444 = vand.u32 %v1443, 65535
    %v1445 = vshrl.u32 %v1443, 16
    %v1446 = vand.u32 %v1442, 65535
    %v1447 = vshrl.u32 %v1442, 16
    %v1448 = vmul.u32 %v1444, %v1446
    %v1449 = vmul.u32 %v1444, %v1447
    %v1450 = vmul.u32 %v1445, %v1446
    %v1451 = vmul.u32 %v1445, %v1447
    %v1452 = vshll.u32 %v1449, 16
    %v1453 = vshrl.u32 %v1449, 16
    %v1454 = vshll.u32 %v1450, 16
    %v1455 = vshrl.u32 %v1450, 16
    %vm1456 = vc.u32 %v1448, %v1452
    %v1457 = vsel %vm1456, 1, 0
    %v1458 = vadd.s32 %v1448, %v1452
    %v1459 = vadd.s32 %v1451, %v1457
    %vm1460 = vc.u32 %v1458, %v1454
    %v1461 = vsel %vm1460, 1, 0
    %v1462 = vadd.s32 %v1458, %v1454
    %v1463 = vadd.s32 %v1459, %v1461
    %v1464 = vadd.s32 %v1463, %v1453
    %v1465 = vadd.s32 %v1464, %v1455
    %v1466 = vand.u32 %v1443, 65535
    %v1467 = vshrl.u32 %v1443, 16
    %v1468 = vand.u32 %v1438, 65535
    %v1469 = vshrl.u32 %v1438, 16
    %v1470 = vmul.u32 %v1466, %v1468
    %v1471 = vmul.u32 %v1466, %v1469
    %v1472 = vmul.u32 %v1467, %v1468
    %v1473 = vmul.u32 %v1467, %v1469
    %v1474 = vshll.u32 %v1471, 16
    %v1475 = vshrl.u32 %v1471, 16
    %v1476 = vshll.u32 %v1472, 16
    %v1477 = vshrl.u32 %v1472, 16
    %vm1478 = vc.u32 %v1470, %v1474
    %v1479 = vsel %vm1478, 1, 0
    %v1480 = vadd.s32 %v1470, %v1474
    %v1481 = vadd.s32 %v1473, %v1479
    %vm1482 = vc.u32 %v1480, %v1476
    %v1483 = vsel %vm1482, 1, 0
    %v1484 = vadd.s32 %v1480, %v1476
    %v1485 = vadd.s32 %v1481, %v1483
    %v1486 = vadd.s32 %v1485, %v1475
    %v1487 = vadd.s32 %v1486, %v1477
    %v1488 = vmul.u32 %v1443, %v1434
    %v1489 = vadd.s32 %v1465, %v1484
    %vm1490 = vc.u32 %v1465, %v1484
    %v1491 = vadd.s32 %v1487, 1
    %v1492 = vsel %vm1490, %v1491, %v1487
    %v1493 = vadd.s32 %v1488, %v1492
    %v1494 = vadd.s32 %v1493, 536870912
    %v1495 = vshrl.u32 %v1494, 30
    %v1496 = vshll.u32 %v1495, 30
    %v1497 = vsub.s32 %v1493, %v1496
    %vm1498 = vcmp.lt.s32.totalorder %v1497, 0
    %v1499 = vsub.s32 0, %v1497
    %v1500 = vsel %vm1498, %v1499, %v1497
    %v1501 = vclz %v1500
    %v1502 = vsub.s32 %v1501, 2
    %vm1503 = vcmp.gt.s32.totalorder 0, %v1502
    %v1504 = vsel %vm1503, 0, %v1502
    %v1505 = vsub.s32 32, %v1504
    %v1506 = vshll.u32 %v1497, %v1504
    %v1507 = vshrl.u32 %v1489, %v1505
    %v1508 = vor.u32 %v1506, %v1507
    %v1509 = vsub.s32 4294967266, %v1504
    %v1510 = vadd.s32 %v1509, 127
    %v1511 = vshll.u32 %v1510, 23
    %v1512 = vor.u32 4788187, %v1511
    %v1513 = vand.u32 2147483647, %v1512
    %v1515 = vcvt.s32.f32 %v1508
    %v1516 = vmul.f32 %v1515, %v1513
    %v1517 = vxor.u32 %v1516, 2147483648
    %v1518 = vsel %vm1397, %v1517, %v1516
    %v1519 = vsub.s32 4, %v1495
    %v1520 = vsel %vm1397, %v1519, %v1495
    %v1521 = vsel %vm1396, %v158, %v1518
    %v1522 = vsel %vm1396, 0, %v1520
    %v1523 = vmul.f32 %v1521, %v1521
    %v1524 = vmul.f32 %v1523, -0.001358992
    %v1525 = vadd.f32 %v1524, 0.041655596
    %v1526 = vmul.f32 %v1523, %v1525
    %v1527 = vadd.f32 %v1526, -0.4999988
    %v1528 = vmul.f32 %v1523, %v1527
    %v1529 = vadd.f32 1.0, %v1528
    %v1530 = vmul.f32 %v1521, %v1521
    %v1531 = vmul.f32 %v1530, -0.00019511016
    %v1532 = vadd.f32 %v1531, 0.008332121
    %v1533 = vmul.f32 %v1530, %v1532
    %v1534 = vadd.f32 %v1533, -0.16666654
    %v1535 = vmul.f32 %v1530, %v1534
    %v1536 = vadd.f32 %v1535, 1.0
    %v1537 = vmul.f32 %v1536, %v1521
    %vm1538 = vweird.f32 %v158
    %v1539 = vand.u32 %v1522, 3
    %vm1540 = vcmp.lt.s32.totalorder %v1539, 2
    %vm1541 = vcmp.eq.s32.totalorder %v1539, 0
    %v1542 = vxor.u32 %v1537, 2147483648
    %v1543 = vsel %vm1541, %v1529, %v1542
    %vm1544 = vcmp.eq.s32.totalorder %v1539, 2
    %v1545 = vxor.u32 %v1529, 2147483648
    %v1546 = vsel %vm1544, %v1545, %v1537
    %v1547 = vsel %vm1540, %v1543, %v1546
    %v1548 = vsel %vm1538, nan, %v1547
    %v1549 = vand.u32 2147483647, %v159
    %vm1550 = vcmp.le.f32.partialorder %v1549, 0.7853982
    %vm1551 = vcmp.lt.s32.totalorder %v159, 0
    %v1552 = vand.u32 %v159, 2139095040
    %v1553 = vshrl.u32 %v1552, 23
    %v1554 = vsub.s32 %v1553, 127
    %v1555 = vand.u32 2147483647, %v159
    %v1556 = vand.u32 %v1555, 8388607
    %v1557 = vor.u32 %v1556, 8388608
    %v1558 = vsub.s32 0, %v1557
    %v1559 = vadd.s32 %v1554, 1
    %vm1560 = vcmp.gt.s32.totalorder %v1559, 0
    %v1561 = vsel %vm1560, %v1559, 0
    %v1562 = vshrl.u32 %v1561, 5
    %v1563 = vand.u32 %v1561, 31
    %v1564 = vsub.s32 32, %v1563
    %v1565 = vshrl.u32 683565275, %v1564
    %v1566 = vshll.u32 683565275, %v1563
    %v1567 = vshrl.u32 2475754826, %v1564
    %v1568 = vor.u32 %v1566, %v1567
    %v1569 = vshll.u32 2475754826, %v1563
    %v1570 = vshrl.u32 2131351028, %v1564
    %v1571 = vor.u32 %v1569, %v1570
    %v1572 = vshll.u32 2131351028, %v1563
    %v1573 = vshrl.u32 2102212464, %v1564
    %v1574 = vor.u32 %v1572, %v1573
    %v1575 = vshll.u32 2102212464, %v1563
    %v1576 = vshrl.u32 920167782, %v1564
    %v1577 = vor.u32 %v1575, %v1576
    %v1578 = vshll.u32 920167782, %v1563
    %v1579 = vshrl.u32 1326507024, %v1564
    %v1580 = vor.u32 %v1578, %v1579
    %vm1581 = vcmp.lt.s32.totalorder %v1562, 1
    %vm1582 = vcmp.lt.s32.totalorder %v1562, 2
    %vm1583 = vcmp.lt.s32.totalorder %v1562, 3
    %vm1584 = vcmp.lt.s32.totalorder %v1562, 4
    %v1585 = vsel %vm1581, %v1565, %v1568
    %v1586 = vsel %vm1584, %v1574, 2102212464
    %v1587 = vsel %vm1583, %v1571, %v1586
    %v1588 = vsel %vm1582, %v1585, %v1587
    %v1589 = vsel %vm1581, %v1568, %v1571
    %v1590 = vsel %vm1584, %v1577, 920167782
    %v1591 = vsel %vm1583, %v1574, %v1590
    %v1592 = vsel %vm1582, %v1589, %v1591
    %v1593 = vsel %vm1581, %v1571, %v1574
    %v1594 = vsel %vm1584, %v1580, 1326507024
    %v1595 = vsel %vm1583, %v1577, %v1594
    %v1596 = vsel %vm1582, %v1593, %v1595
    %v1597 = vshll.u32 %v1557, 8
    %v1598 = vand.u32 %v1597, 65535
    %v1599 = vshrl.u32 %v1597, 16
    %v1600 = vand.u32 %v1596, 65535
    %v1601 = vshrl.u32 %v1596, 16
    %v1602 = vmul.u32 %v1598, %v1600
    %v1603 = vmul.u32 %v1598, %v1601
    %v1604 = vmul.u32 %v1599, %v1600
    %v1605 = vmul.u32 %v1599, %v1601
    %v1606 = vshll.u32 %v1603, 16
    %v1607 = vshrl.u32 %v1603, 16
    %v1608 = vshll.u32 %v1604, 16
    %v1609 = vshrl.u32 %v1604, 16
    %vm1610 = vc.u32 %v1602, %v1606
    %v1611 = vsel %vm1610, 1, 0
    %v1612 = vadd.s32 %v1602, %v1606
    %v1613 = vadd.s32 %v1605, %v1611
    %vm1614 = vc.u32 %v1612, %v1608
    %v1615 = vsel %vm1614, 1, 0
    %v1616 = vadd.s32 %v1612, %v1608
    %v1617 = vadd.s32 %v1613, %v1615
    %v1618 = vadd.s32 %v1617, %v1607
    %v1619 = vadd.s32 %v1618, %v1609
    %v1620 = vand.u32 %v1597, 65535
    %v1621 = vshrl.u32 %v1597, 16
    %v1622 = vand.u32 %v1592, 65535
    %v1623 = vshrl.u32 %v1592, 16
    %v1624 = vmul.u32 %v1620, %v1622
    %v1625 = vmul.u32 %v1620, %v1623
    %v1626 = vmul.u32 %v1621, %v1622
    %v1627 = vmul.u32 %v1621, %v1623
    %v1628 = vshll.u32 %v1625, 16
    %v1629 = vshrl.u32 %v1625, 16
    %v1630 = vshll.u32 %v1626, 16
    %v1631 = vshrl.u32 %v1626, 16
    %vm1632 = vc.u32 %v1624, %v1628
    %v1633 = vsel %vm1632, 1, 0
    %v1634 = vadd.s32 %v1624, %v1628
    %v1635 = vadd.s32 %v1627, %v1633
    %vm1636 = vc.u32 %v1634, %v1630
    %v1637 = vsel %vm1636, 1, 0
    %v1638 = vadd.s32 %v1634, %v1630
    %v1639 = vadd.s32 %v1635, %v1637
    %v1640 = vadd.s32 %v1639, %v1629
    %v1641 = vadd.s32 %v1640, %v1631
    %v1642 = vmul.u32 %v1597, %v1588
    %v1643 = vadd.s32 %v1619, %v1638
    %vm1644 = vc.u32 %v1619, %v1638
    %v1645 = vadd.s32 %v1641, 1
    %v1646 = vsel %vm1644, %v1645, %v1641
    %v1647 = vadd.s32 %v1642, %v1646
    %v1648 = vadd.s32 %v1647, 536870912
    %v1649 = vshrl.u32 %v1648, 30
    %v1650 = vshll.u32 %v1649, 30
    %v1651 = vsub.s32 %v1647, %v1650
    %vm1652 = vcmp.lt.s32.totalorder %v1651, 0
    %v1653 = vsub.s32 0, %v1651
    %v1654 = vsel %vm1652, %v1653, %v1651
    %v1655 = vclz %v1654
    %v1656 = vsub.s32 %v1655, 2
    %vm1657 = vcmp.gt.s32.totalorder 0, %v1656
    %v1658 = vsel %vm1657, 0, %v1656
    %v1659 = vsub.s32 32, %v1658
    %v1660 = vshll.u32 %v1651, %v1658
    %v1661 = vshrl.u32 %v1643, %v1659
    %v1662 = vor.u32 %v1660, %v1661
    %v1663 = vsub.s32 4294967266, %v1658
    %v1664 = vadd.s32 %v1663, 127
    %v1665 = vshll.u32 %v1664, 23
    %v1666 = vor.u32 4788187, %v1665
    %v1667 = vand.u32 2147483647, %v1666
    %v1669 = vcvt.s32.f32 %v1662
    %v1670 = vmul.f32 %v1669, %v1667
    %v1671 = vxor.u32 %v1670, 2147483648
    %v1672 = vsel %vm1551, %v1671, %v1670
    %v1673 = vsub.s32 4, %v1649
    %v1674 = vsel %vm1551, %v1673, %v1649
    %v1675 = vsel %vm1550, %v159, %v1672
    %v1676 = vsel %vm1550, 0, %v1674
    %v1677 = vmul.f32 %v1675, %v1675
    %v1678 = vmul.f32 %v1677, -0.001358992
    %v1679 = vadd.f32 %v1678, 0.041655596
    %v1680 = vmul.f32 %v1677, %v1679
    %v1681 = vadd.f32 %v1680, -0.4999988
    %v1682 = vmul.f32 %v1677, %v1681
    %v1683 = vadd.f32 1.0, %v1682
    %v1684 = vmul.f32 %v1675, %v1675
    %v1685 = vmul.f32 %v1684, -0.00019511016
    %v1686 = vadd.f32 %v1685, 0.008332121
    %v1687 = vmul.f32 %v1684, %v1686
    %v1688 = vadd.f32 %v1687, -0.16666654
    %v1689 = vmul.f32 %v1684, %v1688
    %v1690 = vadd.f32 %v1689, 1.0
    %v1691 = vmul.f32 %v1690, %v1675
    %vm1692 = vweird.f32 %v159
    %v1693 = vand.u32 %v1676, 3
    %vm1694 = vcmp.lt.s32.totalorder %v1693, 2
    %vm1695 = vcmp.eq.s32.totalorder %v1693, 0
    %v1696 = vxor.u32 %v1691, 2147483648
    %v1697 = vsel %vm1695, %v1683, %v1696
    %vm1698 = vcmp.eq.s32.totalorder %v1693, 2
    %v1699 = vxor.u32 %v1683, 2147483648
    %v1700 = vsel %vm1698, %v1699, %v1691
    %v1701 = vsel %vm1694, %v1697, %v1700
    %v1702 = vsel %vm1692, nan, %v1701
    %v1703 = vand.u32 2147483647, %v160
    %vm1704 = vcmp.le.f32.partialorder %v1703, 0.7853982
    %vm1705 = vcmp.lt.s32.totalorder %v160, 0
    %v1706 = vand.u32 %v160, 2139095040
    %v1707 = vshrl.u32 %v1706, 23
    %v1708 = vsub.s32 %v1707, 127
    %v1709 = vand.u32 2147483647, %v160
    %v1710 = vand.u32 %v1709, 8388607
    %v1711 = vor.u32 %v1710, 8388608
    %v1712 = vsub.s32 0, %v1711
    %v1713 = vadd.s32 %v1708, 1
    %vm1714 = vcmp.gt.s32.totalorder %v1713, 0
    %v1715 = vsel %vm1714, %v1713, 0
    %v1716 = vshrl.u32 %v1715, 5
    %v1717 = vand.u32 %v1715, 31
    %v1718 = vsub.s32 32, %v1717
    %v1719 = vshrl.u32 683565275, %v1718
    %v1720 = vshll.u32 683565275, %v1717
    %v1721 = vshrl.u32 2475754826, %v1718
    %v1722 = vor.u32 %v1720, %v1721
    %v1723 = vshll.u32 2475754826, %v1717
    %v1724 = vshrl.u32 2131351028, %v1718
    %v1725 = vor.u32 %v1723, %v1724
    %v1726 = vshll.u32 2131351028, %v1717
    %v1727 = vshrl.u32 2102212464, %v1718
    %v1728 = vor.u32 %v1726, %v1727
    %v1729 = vshll.u32 2102212464, %v1717
    %v1730 = vshrl.u32 920167782, %v1718
    %v1731 = vor.u32 %v1729, %v1730
    %v1732 = vshll.u32 920167782, %v1717
    %v1733 = vshrl.u32 1326507024, %v1718
    %v1734 = vor.u32 %v1732, %v1733
    %vm1735 = vcmp.lt.s32.totalorder %v1716, 1
    %vm1736 = vcmp.lt.s32.totalorder %v1716, 2
    %vm1737 = vcmp.lt.s32.totalorder %v1716, 3
    %vm1738 = vcmp.lt.s32.totalorder %v1716, 4
    %v1739 = vsel %vm1735, %v1719, %v1722
    %v1740 = vsel %vm1738, %v1728, 2102212464
    %v1741 = vsel %vm1737, %v1725, %v1740
    %v1742 = vsel %vm1736, %v1739, %v1741
    %v1743 = vsel %vm1735, %v1722, %v1725
    %v1744 = vsel %vm1738, %v1731, 920167782
    %v1745 = vsel %vm1737, %v1728, %v1744
    %v1746 = vsel %vm1736, %v1743, %v1745
    %v1747 = vsel %vm1735, %v1725, %v1728
    %v1748 = vsel %vm1738, %v1734, 1326507024
    %v1749 = vsel %vm1737, %v1731, %v1748
    %v1750 = vsel %vm1736, %v1747, %v1749
    %v1751 = vshll.u32 %v1711, 8
    %v1752 = vand.u32 %v1751, 65535
    %v1753 = vshrl.u32 %v1751, 16
    %v1754 = vand.u32 %v1750, 65535
    %v1755 = vshrl.u32 %v1750, 16
    %v1756 = vmul.u32 %v1752, %v1754
    %v1757 = vmul.u32 %v1752, %v1755
    %v1758 = vmul.u32 %v1753, %v1754
    %v1759 = vmul.u32 %v1753, %v1755
    %v1760 = vshll.u32 %v1757, 16
    %v1761 = vshrl.u32 %v1757, 16
    %v1762 = vshll.u32 %v1758, 16
    %v1763 = vshrl.u32 %v1758, 16
    %vm1764 = vc.u32 %v1756, %v1760
    %v1765 = vsel %vm1764, 1, 0
    %v1766 = vadd.s32 %v1756, %v1760
    %v1767 = vadd.s32 %v1759, %v1765
    %vm1768 = vc.u32 %v1766, %v1762
    %v1769 = vsel %vm1768, 1, 0
    %v1770 = vadd.s32 %v1766, %v1762
    %v1771 = vadd.s32 %v1767, %v1769
    %v1772 = vadd.s32 %v1771, %v1761
    %v1773 = vadd.s32 %v1772, %v1763
    %v1774 = vand.u32 %v1751, 65535
    %v1775 = vshrl.u32 %v1751, 16
    %v1776 = vand.u32 %v1746, 65535
    %v1777 = vshrl.u32 %v1746, 16
    %v1778 = vmul.u32 %v1774, %v1776
    %v1779 = vmul.u32 %v1774, %v1777
    %v1780 = vmul.u32 %v1775, %v1776
    %v1781 = vmul.u32 %v1775, %v1777
    %v1782 = vshll.u32 %v1779, 16
    %v1783 = vshrl.u32 %v1779, 16
    %v1784 = vshll.u32 %v1780, 16
    %v1785 = vshrl.u32 %v1780, 16
    %vm1786 = vc.u32 %v1778, %v1782
    %v1787 = vsel %vm1786, 1, 0
    %v1788 = vadd.s32 %v1778, %v1782
    %v1789 = vadd.s32 %v1781, %v1787
    %vm1790 = vc.u32 %v1788, %v1784
    %v1791 = vsel %vm1790, 1, 0
    %v1792 = vadd.s32 %v1788, %v1784
    %v1793 = vadd.s32 %v1789, %v1791
    %v1794 = vadd.s32 %v1793, %v1783
    %v1795 = vadd.s32 %v1794, %v1785
    %v1796 = vmul.u32 %v1751, %v1742
    %v1797 = vadd.s32 %v1773, %v1792
    %vm1798 = vc.u32 %v1773, %v1792
    %v1799 = vadd.s32 %v1795, 1
    %v1800 = vsel %vm1798, %v1799, %v1795
    %v1801 = vadd.s32 %v1796, %v1800
    %v1802 = vadd.s32 %v1801, 536870912
    %v1803 = vshrl.u32 %v1802, 30
    %v1804 = vshll.u32 %v1803, 30
    %v1805 = vsub.s32 %v1801, %v1804
    %vm1806 = vcmp.lt.s32.totalorder %v1805, 0
    %v1807 = vsub.s32 0, %v1805
    %v1808 = vsel %vm1806, %v1807, %v1805
    %v1809 = vclz %v1808
    %v1810 = vsub.s32 %v1809, 2
    %vm1811 = vcmp.gt.s32.totalorder 0, %v1810
    %v1812 = vsel %vm1811, 0, %v1810
    %v1813 = vsub.s32 32, %v1812
    %v1814 = vshll.u32 %v1805, %v1812
    %v1815 = vshrl.u32 %v1797, %v1813
    %v1816 = vor.u32 %v1814, %v1815
    %v1817 = vsub.s32 4294967266, %v1812
    %v1818 = vadd.s32 %v1817, 127
    %v1819 = vshll.u32 %v1818, 23
    %v1820 = vor.u32 4788187, %v1819
    %v1821 = vand.u32 2147483647, %v1820
    %v1823 = vcvt.s32.f32 %v1816
    %v1824 = vmul.f32 %v1823, %v1821
    %v1825 = vxor.u32 %v1824, 2147483648
    %v1826 = vsel %vm1705, %v1825, %v1824
    %v1827 = vsub.s32 4, %v1803
    %v1828 = vsel %vm1705, %v1827, %v1803
    %v1829 = vsel %vm1704, %v160, %v1826
    %v1830 = vsel %vm1704, 0, %v1828
    %v1831 = vmul.f32 %v1829, %v1829
    %v1832 = vmul.f32 %v1831, -0.001358992
    %v1833 = vadd.f32 %v1832, 0.041655596
    %v1834 = vmul.f32 %v1831, %v1833
    %v1835 = vadd.f32 %v1834, -0.4999988
    %v1836 = vmul.f32 %v1831, %v1835
    %v1837 = vadd.f32 1.0, %v1836
    %v1838 = vmul.f32 %v1829, %v1829
    %v1839 = vmul.f32 %v1838, -0.00019511016
    %v1840 = vadd.f32 %v1839, 0.008332121
    %v1841 = vmul.f32 %v1838, %v1840
    %v1842 = vadd.f32 %v1841, -0.16666654
    %v1843 = vmul.f32 %v1838, %v1842
    %v1844 = vadd.f32 %v1843, 1.0
    %v1845 = vmul.f32 %v1844, %v1829
    %vm1846 = vweird.f32 %v160
    %v1847 = vand.u32 %v1830, 3
    %vm1848 = vcmp.lt.s32.totalorder %v1847, 2
    %vm1849 = vcmp.eq.s32.totalorder %v1847, 0
    %v1850 = vxor.u32 %v1845, 2147483648
    %v1851 = vsel %vm1849, %v1837, %v1850
    %vm1852 = vcmp.eq.s32.totalorder %v1847, 2
    %v1853 = vxor.u32 %v1837, 2147483648
    %v1854 = vsel %vm1852, %v1853, %v1845
    %v1855 = vsel %vm1848, %v1851, %v1854
    %v1856 = vsel %vm1846, nan, %v1855
    %v1857 = vand.u32 2147483647, %v161
    %vm1858 = vcmp.le.f32.partialorder %v1857, 0.7853982
    %vm1859 = vcmp.lt.s32.totalorder %v161, 0
    %v1860 = vand.u32 %v161, 2139095040
    %v1861 = vshrl.u32 %v1860, 23
    %v1862 = vsub.s32 %v1861, 127
    %v1863 = vand.u32 2147483647, %v161
    %v1864 = vand.u32 %v1863, 8388607
    %v1865 = vor.u32 %v1864, 8388608
    %v1866 = vsub.s32 0, %v1865
    %v1867 = vadd.s32 %v1862, 1
    %vm1868 = vcmp.gt.s32.totalorder %v1867, 0
    %v1869 = vsel %vm1868, %v1867, 0
    %v1870 = vshrl.u32 %v1869, 5
    %v1871 = vand.u32 %v1869, 31
    %v1872 = vsub.s32 32, %v1871
    %v1873 = vshrl.u32 683565275, %v1872
    %v1874 = vshll.u32 683565275, %v1871
    %v1875 = vshrl.u32 2475754826, %v1872
    %v1876 = vor.u32 %v1874, %v1875
    %v1877 = vshll.u32 2475754826, %v1871
    %v1878 = vshrl.u32 2131351028, %v1872
    %v1879 = vor.u32 %v1877, %v1878
    %v1880 = vshll.u32 2131351028, %v1871
    %v1881 = vshrl.u32 2102212464, %v1872
    %v1882 = vor.u32 %v1880, %v1881
    %v1883 = vshll.u32 2102212464, %v1871
    %v1884 = vshrl.u32 920167782, %v1872
    %v1885 = vor.u32 %v1883, %v1884
    %v1886 = vshll.u32 920167782, %v1871
    %v1887 = vshrl.u32 1326507024, %v1872
    %v1888 = vor.u32 %v1886, %v1887
    %vm1889 = vcmp.lt.s32.totalorder %v1870, 1
    %vm1890 = vcmp.lt.s32.totalorder %v1870, 2
    %vm1891 = vcmp.lt.s32.totalorder %v1870, 3
    %vm1892 = vcmp.lt.s32.totalorder %v1870, 4
    %v1893 = vsel %vm1889, %v1873, %v1876
    %v1894 = vsel %vm1892, %v1882, 2102212464
    %v1895 = vsel %vm1891, %v1879, %v1894
    %v1896 = vsel %vm1890, %v1893, %v1895
    %v1897 = vsel %vm1889, %v1876, %v1879
    %v1898 = vsel %vm1892, %v1885, 920167782
    %v1899 = vsel %vm1891, %v1882, %v1898
    %v1900 = vsel %vm1890, %v1897, %v1899
    %v1901 = vsel %vm1889, %v1879, %v1882
    %v1902 = vsel %vm1892, %v1888, 1326507024
    %v1903 = vsel %vm1891, %v1885, %v1902
    %v1904 = vsel %vm1890, %v1901, %v1903
    %v1905 = vshll.u32 %v1865, 8
    %v1906 = vand.u32 %v1905, 65535
    %v1907 = vshrl.u32 %v1905, 16
    %v1908 = vand.u32 %v1904, 65535
    %v1909 = vshrl.u32 %v1904, 16
    %v1910 = vmul.u32 %v1906, %v1908
    %v1911 = vmul.u32 %v1906, %v1909
    %v1912 = vmul.u32 %v1907, %v1908
    %v1913 = vmul.u32 %v1907, %v1909
    %v1914 = vshll.u32 %v1911, 16
    %v1915 = vshrl.u32 %v1911, 16
    %v1916 = vshll.u32 %v1912, 16
    %v1917 = vshrl.u32 %v1912, 16
    %vm1918 = vc.u32 %v1910, %v1914
    %v1919 = vsel %vm1918, 1, 0
    %v1920 = vadd.s32 %v1910, %v1914
    %v1921 = vadd.s32 %v1913, %v1919
    %vm1922 = vc.u32 %v1920, %v1916
    %v1923 = vsel %vm1922, 1, 0
    %v1924 = vadd.s32 %v1920, %v1916
    %v1925 = vadd.s32 %v1921, %v1923
    %v1926 = vadd.s32 %v1925, %v1915
    %v1927 = vadd.s32 %v1926, %v1917
    %v1928 = vand.u32 %v1905, 65535
    %v1929 = vshrl.u32 %v1905, 16
    %v1930 = vand.u32 %v1900, 65535
    %v1931 = vshrl.u32 %v1900, 16
    %v1932 = vmul.u32 %v1928, %v1930
    %v1933 = vmul.u32 %v1928, %v1931
    %v1934 = vmul.u32 %v1929, %v1930
    %v1935 = vmul.u32 %v1929, %v1931
    %v1936 = vshll.u32 %v1933, 16
    %v1937 = vshrl.u32 %v1933, 16
    %v1938 = vshll.u32 %v1934, 16
    %v1939 = vshrl.u32 %v1934, 16
    %vm1940 = vc.u32 %v1932, %v1936
    %v1941 = vsel %vm1940, 1, 0
    %v1942 = vadd.s32 %v1932, %v1936
    %v1943 = vadd.s32 %v1935, %v1941
    %vm1944 = vc.u32 %v1942, %v1938
    %v1945 = vsel %vm1944, 1, 0
    %v1946 = vadd.s32 %v1942, %v1938
    %v1947 = vadd.s32 %v1943, %v1945
    %v1948 = vadd.s32 %v1947, %v1937
    %v1949 = vadd.s32 %v1948, %v1939
    %v1950 = vmul.u32 %v1905, %v1896
    %v1951 = vadd.s32 %v1927, %v1946
    %vm1952 = vc.u32 %v1927, %v1946
    %v1953 = vadd.s32 %v1949, 1
    %v1954 = vsel %vm1952, %v1953, %v1949
    %v1955 = vadd.s32 %v1950, %v1954
    %v1956 = vadd.s32 %v1955, 536870912
    %v1957 = vshrl.u32 %v1956, 30
    %v1958 = vshll.u32 %v1957, 30
    %v1959 = vsub.s32 %v1955, %v1958
    %vm1960 = vcmp.lt.s32.totalorder %v1959, 0
    %v1961 = vsub.s32 0, %v1959
    %v1962 = vsel %vm1960, %v1961, %v1959
    %v1963 = vclz %v1962
    %v1964 = vsub.s32 %v1963, 2
    %vm1965 = vcmp.gt.s32.totalorder 0, %v1964
    %v1966 = vsel %vm1965, 0, %v1964
    %v1967 = vsub.s32 32, %v1966
    %v1968 = vshll.u32 %v1959, %v1966
    %v1969 = vshrl.u32 %v1951, %v1967
    %v1970 = vor.u32 %v1968, %v1969
    %v1971 = vsub.s32 4294967266, %v1966
    %v1972 = vadd.s32 %v1971, 127
    %v1973 = vshll.u32 %v1972, 23
    %v1974 = vor.u32 4788187, %v1973
    %v1975 = vand.u32 2147483647, %v1974
    %v1977 = vcvt.s32.f32 %v1970
    %v1978 = vmul.f32 %v1977, %v1975
    %v1979 = vxor.u32 %v1978, 2147483648
    %v1980 = vsel %vm1859, %v1979, %v1978
    %v1981 = vsub.s32 4, %v1957
    %v1982 = vsel %vm1859, %v1981, %v1957
    %v1983 = vsel %vm1858, %v161, %v1980
    %v1984 = vsel %vm1858, 0, %v1982
    %v1985 = vmul.f32 %v1983, %v1983
    %v1986 = vmul.f32 %v1985, -0.001358992
    %v1987 = vadd.f32 %v1986, 0.041655596
    %v1988 = vmul.f32 %v1985, %v1987
    %v1989 = vadd.f32 %v1988, -0.4999988
    %v1990 = vmul.f32 %v1985, %v1989
    %v1991 = vadd.f32 1.0, %v1990
    %v1992 = vmul.f32 %v1983, %v1983
    %v1993 = vmul.f32 %v1992, -0.00019511016
    %v1994 = vadd.f32 %v1993, 0.008332121
    %v1995 = vmul.f32 %v1992, %v1994
    %v1996 = vadd.f32 %v1995, -0.16666654
    %v1997 = vmul.f32 %v1992, %v1996
    %v1998 = vadd.f32 %v1997, 1.0
    %v1999 = vmul.f32 %v1998, %v1983
    %vm2000 = vweird.f32 %v161
    %v2001 = vand.u32 %v1984, 3
    %vm2002 = vcmp.lt.s32.totalorder %v2001, 2
    %vm2003 = vcmp.eq.s32.totalorder %v2001, 0
    %v2004 = vxor.u32 %v1999, 2147483648
    %v2005 = vsel %vm2003, %v1991, %v2004
    %vm2006 = vcmp.eq.s32.totalorder %v2001, 2
    %v2007 = vxor.u32 %v1991, 2147483648
    %v2008 = vsel %vm2006, %v2007, %v1999
    %v2009 = vsel %vm2002, %v2005, %v2008
    %v2010 = vsel %vm2000, nan, %v2009
    %v2011 = vand.u32 2147483647, %v162
    %vm2012 = vcmp.le.f32.partialorder %v2011, 0.7853982
    %vm2013 = vcmp.lt.s32.totalorder %v162, 0
    %v2014 = vand.u32 %v162, 2139095040
    %v2015 = vshrl.u32 %v2014, 23
    %v2016 = vsub.s32 %v2015, 127
    %v2017 = vand.u32 2147483647, %v162
    %v2018 = vand.u32 %v2017, 8388607
    %v2019 = vor.u32 %v2018, 8388608
    %v2020 = vsub.s32 0, %v2019
    %v2021 = vadd.s32 %v2016, 1
    %vm2022 = vcmp.gt.s32.totalorder %v2021, 0
    %v2023 = vsel %vm2022, %v2021, 0
    %v2024 = vshrl.u32 %v2023, 5
    %v2025 = vand.u32 %v2023, 31
    %v2026 = vsub.s32 32, %v2025
    %v2027 = vshrl.u32 683565275, %v2026
    %v2028 = vshll.u32 683565275, %v2025
    %v2029 = vshrl.u32 2475754826, %v2026
    %v2030 = vor.u32 %v2028, %v2029
    %v2031 = vshll.u32 2475754826, %v2025
    %v2032 = vshrl.u32 2131351028, %v2026
    %v2033 = vor.u32 %v2031, %v2032
    %v2034 = vshll.u32 2131351028, %v2025
    %v2035 = vshrl.u32 2102212464, %v2026
    %v2036 = vor.u32 %v2034, %v2035
    %v2037 = vshll.u32 2102212464, %v2025
    %v2038 = vshrl.u32 920167782, %v2026
    %v2039 = vor.u32 %v2037, %v2038
    %v2040 = vshll.u32 920167782, %v2025
    %v2041 = vshrl.u32 1326507024, %v2026
    %v2042 = vor.u32 %v2040, %v2041
    %vm2043 = vcmp.lt.s32.totalorder %v2024, 1
    %vm2044 = vcmp.lt.s32.totalorder %v2024, 2
    %vm2045 = vcmp.lt.s32.totalorder %v2024, 3
    %vm2046 = vcmp.lt.s32.totalorder %v2024, 4
    %v2047 = vsel %vm2043, %v2027, %v2030
    %v2048 = vsel %vm2046, %v2036, 2102212464
    %v2049 = vsel %vm2045, %v2033, %v2048
    %v2050 = vsel %vm2044, %v2047, %v2049
    %v2051 = vsel %vm2043, %v2030, %v2033
    %v2052 = vsel %vm2046, %v2039, 920167782
    %v2053 = vsel %vm2045, %v2036, %v2052
    %v2054 = vsel %vm2044, %v2051, %v2053
    %v2055 = vsel %vm2043, %v2033, %v2036
    %v2056 = vsel %vm2046, %v2042, 1326507024
    %v2057 = vsel %vm2045, %v2039, %v2056
    %v2058 = vsel %vm2044, %v2055, %v2057
    %v2059 = vshll.u32 %v2019, 8
    %v2060 = vand.u32 %v2059, 65535
    %v2061 = vshrl.u32 %v2059, 16
    %v2062 = vand.u32 %v2058, 65535
    %v2063 = vshrl.u32 %v2058, 16
    %v2064 = vmul.u32 %v2060, %v2062
    %v2065 = vmul.u32 %v2060, %v2063
    %v2066 = vmul.u32 %v2061, %v2062
    %v2067 = vmul.u32 %v2061, %v2063
    %v2068 = vshll.u32 %v2065, 16
    %v2069 = vshrl.u32 %v2065, 16
    %v2070 = vshll.u32 %v2066, 16
    %v2071 = vshrl.u32 %v2066, 16
    %vm2072 = vc.u32 %v2064, %v2068
    %v2073 = vsel %vm2072, 1, 0
    %v2074 = vadd.s32 %v2064, %v2068
    %v2075 = vadd.s32 %v2067, %v2073
    %vm2076 = vc.u32 %v2074, %v2070
    %v2077 = vsel %vm2076, 1, 0
    %v2078 = vadd.s32 %v2074, %v2070
    %v2079 = vadd.s32 %v2075, %v2077
    %v2080 = vadd.s32 %v2079, %v2069
    %v2081 = vadd.s32 %v2080, %v2071
    %v2082 = vand.u32 %v2059, 65535
    %v2083 = vshrl.u32 %v2059, 16
    %v2084 = vand.u32 %v2054, 65535
    %v2085 = vshrl.u32 %v2054, 16
    %v2086 = vmul.u32 %v2082, %v2084
    %v2087 = vmul.u32 %v2082, %v2085
    %v2088 = vmul.u32 %v2083, %v2084
    %v2089 = vmul.u32 %v2083, %v2085
    %v2090 = vshll.u32 %v2087, 16
    %v2091 = vshrl.u32 %v2087, 16
    %v2092 = vshll.u32 %v2088, 16
    %v2093 = vshrl.u32 %v2088, 16
    %vm2094 = vc.u32 %v2086, %v2090
    %v2095 = vsel %vm2094, 1, 0
    %v2096 = vadd.s32 %v2086, %v2090
    %v2097 = vadd.s32 %v2089, %v2095
    %vm2098 = vc.u32 %v2096, %v2092
    %v2099 = vsel %vm2098, 1, 0
    %v2100 = vadd.s32 %v2096, %v2092
    %v2101 = vadd.s32 %v2097, %v2099
    %v2102 = vadd.s32 %v2101, %v2091
    %v2103 = vadd.s32 %v2102, %v2093
    %v2104 = vmul.u32 %v2059, %v2050
    %v2105 = vadd.s32 %v2081, %v2100
    %vm2106 = vc.u32 %v2081, %v2100
    %v2107 = vadd.s32 %v2103, 1
    %v2108 = vsel %vm2106, %v2107, %v2103
    %v2109 = vadd.s32 %v2104, %v2108
    %v2110 = vadd.s32 %v2109, 536870912
    %v2111 = vshrl.u32 %v2110, 30
    %v2112 = vshll.u32 %v2111, 30
    %v2113 = vsub.s32 %v2109, %v2112
    %vm2114 = vcmp.lt.s32.totalorder %v2113, 0
    %v2115 = vsub.s32 0, %v2113
    %v2116 = vsel %vm2114, %v2115, %v2113
    %v2117 = vclz %v2116
    %v2118 = vsub.s32 %v2117, 2
    %vm2119 = vcmp.gt.s32.totalorder 0, %v2118
    %v2120 = vsel %vm2119, 0, %v2118
    %v2121 = vsub.s32 32, %v2120
    %v2122 = vshll.u32 %v2113, %v2120
    %v2123 = vshrl.u32 %v2105, %v2121
    %v2124 = vor.u32 %v2122, %v2123
    %v2125 = vsub.s32 4294967266, %v2120
    %v2126 = vadd.s32 %v2125, 127
    %v2127 = vshll.u32 %v2126, 23
    %v2128 = vor.u32 4788187, %v2127
    %v2129 = vand.u32 2147483647, %v2128
    %v2131 = vcvt.s32.f32 %v2124
    %v2132 = vmul.f32 %v2131, %v2129
    %v2133 = vxor.u32 %v2132, 2147483648
    %v2134 = vsel %vm2013, %v2133, %v2132
    %v2135 = vsub.s32 4, %v2111
    %v2136 = vsel %vm2013, %v2135, %v2111
    %v2137 = vsel %vm2012, %v162, %v2134
    %v2138 = vsel %vm2012, 0, %v2136
    %v2139 = vmul.f32 %v2137, %v2137
    %v2140 = vmul.f32 %v2139, -0.001358992
    %v2141 = vadd.f32 %v2140, 0.041655596
    %v2142 = vmul.f32 %v2139, %v2141
    %v2143 = vadd.f32 %v2142, -0.4999988
    %v2144 = vmul.f32 %v2139, %v2143
    %v2145 = vadd.f32 1.0, %v2144
    %v2146 = vmul.f32 %v2137, %v2137
    %v2147 = vmul.f32 %v2146, -0.00019511016
    %v2148 = vadd.f32 %v2147, 0.008332121
    %v2149 = vmul.f32 %v2146, %v2148
    %v2150 = vadd.f32 %v2149, -0.16666654
    %v2151 = vmul.f32 %v2146, %v2150
    %v2152 = vadd.f32 %v2151, 1.0
    %v2153 = vmul.f32 %v2152, %v2137
    %vm2154 = vweird.f32 %v162
    %v2155 = vand.u32 %v2138, 3
    %vm2156 = vcmp.lt.s32.totalorder %v2155, 2
    %vm2157 = vcmp.eq.s32.totalorder %v2155, 0
    %v2158 = vxor.u32 %v2153, 2147483648
    %v2159 = vsel %vm2157, %v2145, %v2158
    %vm2160 = vcmp.eq.s32.totalorder %v2155, 2
    %v2161 = vxor.u32 %v2145, 2147483648
    %v2162 = vsel %vm2160, %v2161, %v2153
    %v2163 = vsel %vm2156, %v2159, %v2162
    %v2164 = vsel %vm2154, nan, %v2163
    %v2165 = vand.u32 2147483647, %v150
    %vm2166 = vcmp.le.f32.partialorder %v2165, 0.7853982
    %vm2167 = vcmp.lt.s32.totalorder %v150, 0
    %v2168 = vand.u32 %v150, 2139095040
    %v2169 = vshrl.u32 %v2168, 23
    %v2170 = vsub.s32 %v2169, 127
    %v2171 = vand.u32 2147483647, %v150
    %v2172 = vand.u32 %v2171, 8388607
    %v2173 = vor.u32 %v2172, 8388608
    %v2174 = vsub.s32 0, %v2173
    %v2175 = vadd.s32 %v2170, 1
    %vm2176 = vcmp.gt.s32.totalorder %v2175, 0
    %v2177 = vsel %vm2176, %v2175, 0
    %v2178 = vshrl.u32 %v2177, 5
    %v2179 = vand.u32 %v2177, 31
    %v2180 = vsub.s32 32, %v2179
    %v2181 = vshrl.u32 683565275, %v2180
    %v2182 = vshll.u32 683565275, %v2179
    %v2183 = vshrl.u32 2475754826, %v2180
    %v2184 = vor.u32 %v2182, %v2183
    %v2185 = vshll.u32 2475754826, %v2179
    %v2186 = vshrl.u32 2131351028, %v2180
    %v2187 = vor.u32 %v2185, %v2186
    %v2188 = vshll.u32 2131351028, %v2179
    %v2189 = vshrl.u32 2102212464, %v2180
    %v2190 = vor.u32 %v2188, %v2189
    %v2191 = vshll.u32 2102212464, %v2179
    %v2192 = vshrl.u32 920167782, %v2180
    %v2193 = vor.u32 %v2191, %v2192
    %v2194 = vshll.u32 920167782, %v2179
    %v2195 = vshrl.u32 1326507024, %v2180
    %v2196 = vor.u32 %v2194, %v2195
    %vm2197 = vcmp.lt.s32.totalorder %v2178, 1
    %vm2198 = vcmp.lt.s32.totalorder %v2178, 2
    %vm2199 = vcmp.lt.s32.totalorder %v2178, 3
    %vm2200 = vcmp.lt.s32.totalorder %v2178, 4
    %v2201 = vsel %vm2197, %v2181, %v2184
    %v2202 = vsel %vm2200, %v2190, 2102212464
    %v2203 = vsel %vm2199, %v2187, %v2202
    %v2204 = vsel %vm2198, %v2201, %v2203
    %v2205 = vsel %vm2197, %v2184, %v2187
    %v2206 = vsel %vm2200, %v2193, 920167782
    %v2207 = vsel %vm2199, %v2190, %v2206
    %v2208 = vsel %vm2198, %v2205, %v2207
    %v2209 = vsel %vm2197, %v2187, %v2190
    %v2210 = vsel %vm2200, %v2196, 1326507024
    %v2211 = vsel %vm2199, %v2193, %v2210
    %v2212 = vsel %vm2198, %v2209, %v2211
    %v2213 = vshll.u32 %v2173, 8
    %v2214 = vand.u32 %v2213, 65535
    %v2215 = vshrl.u32 %v2213, 16
    %v2216 = vand.u32 %v2212, 65535
    %v2217 = vshrl.u32 %v2212, 16
    %v2218 = vmul.u32 %v2214, %v2216
    %v2219 = vmul.u32 %v2214, %v2217
    %v2220 = vmul.u32 %v2215, %v2216
    %v2221 = vmul.u32 %v2215, %v2217
    %v2222 = vshll.u32 %v2219, 16
    %v2223 = vshrl.u32 %v2219, 16
    %v2224 = vshll.u32 %v2220, 16
    %v2225 = vshrl.u32 %v2220, 16
    %vm2226 = vc.u32 %v2218, %v2222
    %v2227 = vsel %vm2226, 1, 0
    %v2228 = vadd.s32 %v2218, %v2222
    %v2229 = vadd.s32 %v2221, %v2227
    %vm2230 = vc.u32 %v2228, %v2224
    %v2231 = vsel %vm2230, 1, 0
    %v2232 = vadd.s32 %v2228, %v2224
    %v2233 = vadd.s32 %v2229, %v2231
    %v2234 = vadd.s32 %v2233, %v2223
    %v2235 = vadd.s32 %v2234, %v2225
    %v2236 = vand.u32 %v2213, 65535
    %v2237 = vshrl.u32 %v2213, 16
    %v2238 = vand.u32 %v2208, 65535
    %v2239 = vshrl.u32 %v2208, 16
    %v2240 = vmul.u32 %v2236, %v2238
    %v2241 = vmul.u32 %v2236, %v2239
    %v2242 = vmul.u32 %v2237, %v2238
    %v2243 = vmul.u32 %v2237, %v2239
    %v2244 = vshll.u32 %v2241, 16
    %v2245 = vshrl.u32 %v2241, 16
    %v2246 = vshll.u32 %v2242, 16
    %v2247 = vshrl.u32 %v2242, 16
    %vm2248 = vc.u32 %v2240, %v2244
    %v2249 = vsel %vm2248, 1, 0
    %v2250 = vadd.s32 %v2240, %v2244
    %v2251 = vadd.s32 %v2243, %v2249
    %vm2252 = vc.u32 %v2250, %v2246
    %v2253 = vsel %vm2252, 1, 0
    %v2254 = vadd.s32 %v2250, %v2246
    %v2255 = vadd.s32 %v2251, %v2253
    %v2256 = vadd.s32 %v2255, %v2245
    %v2257 = vadd.s32 %v2256, %v2247
    %v2258 = vmul.u32 %v2213, %v2204
    %v2259 = vadd.s32 %v2235, %v2254
    %vm2260 = vc.u32 %v2235, %v2254
    %v2261 = vadd.s32 %v2257, 1
    %v2262 = vsel %vm2260, %v2261, %v2257
    %v2263 = vadd.s32 %v2258, %v2262
    %v2264 = vadd.s32 %v2263, 536870912
    %v2265 = vshrl.u32 %v2264, 30
    %v2266 = vshll.u32 %v2265, 30
    %v2267 = vsub.s32 %v2263, %v2266
    %vm2268 = vcmp.lt.s32.totalorder %v2267, 0
    %v2269 = vsub.s32 0, %v2267
    %v2270 = vsel %vm2268, %v2269, %v2267
    %v2271 = vclz %v2270
    %v2272 = vsub.s32 %v2271, 2
    %vm2273 = vcmp.gt.s32.totalorder 0, %v2272
    %v2274 = vsel %vm2273, 0, %v2272
    %v2275 = vsub.s32 32, %v2274
    %v2276 = vshll.u32 %v2267, %v2274
    %v2277 = vshrl.u32 %v2259, %v2275
    %v2278 = vor.u32 %v2276, %v2277
    %v2279 = vsub.s32 4294967266, %v2274
    %v2280 = vadd.s32 %v2279, 127
    %v2281 = vshll.u32 %v2280, 23
    %v2282 = vor.u32 4788187, %v2281
    %v2283 = vand.u32 2147483647, %v2282
    %v2285 = vcvt.s32.f32 %v2278
    %v2286 = vmul.f32 %v2285, %v2283
    %v2287 = vxor.u32 %v2286, 2147483648
    %v2288 = vsel %vm2167, %v2287, %v2286
    %v2289 = vsub.s32 4, %v2265
    %v2290 = vsel %vm2167, %v2289, %v2265
    %v2291 = vsel %vm2166, %v150, %v2288
    %v2292 = vsel %vm2166, 0, %v2290
    %v2293 = vmul.f32 %v2291, %v2291
    %v2294 = vmul.f32 %v2293, -0.001358992
    %v2295 = vadd.f32 %v2294, 0.041655596
    %v2296 = vmul.f32 %v2293, %v2295
    %v2297 = vadd.f32 %v2296, -0.4999988
    %v2298 = vmul.f32 %v2293, %v2297
    %v2299 = vadd.f32 1.0, %v2298
    %v2300 = vmul.f32 %v2291, %v2291
    %v2301 = vmul.f32 %v2300, -0.00019511016
    %v2302 = vadd.f32 %v2301, 0.008332121
    %v2303 = vmul.f32 %v2300, %v2302
    %v2304 = vadd.f32 %v2303, -0.16666654
    %v2305 = vmul.f32 %v2300, %v2304
    %v2306 = vadd.f32 %v2305, 1.0
    %v2307 = vmul.f32 %v2306, %v2291
    %vm2308 = vweird.f32 %v150
    %v2309 = vadd.s32 %v2292, 3
    %v2310 = vand.u32 %v2309, 3
    %vm2311 = vcmp.lt.s32.totalorder %v2310, 2
    %vm2312 = vcmp.eq.s32.totalorder %v2310, 0
    %v2313 = vxor.u32 %v2307, 2147483648
    %v2314 = vsel %vm2312, %v2299, %v2313
    %vm2315 = vcmp.eq.s32.totalorder %v2310, 2
    %v2316 = vxor.u32 %v2299, 2147483648
    %v2317 = vsel %vm2315, %v2316, %v2307
    %v2318 = vsel %vm2311, %v2314, %v2317
    %v2319 = vsel %vm2308, nan, %v2318
    %v2320 = vand.u32 2147483647, %v151
    %vm2321 = vcmp.le.f32.partialorder %v2320, 0.7853982
    %vm2322 = vcmp.lt.s32.totalorder %v151, 0
    %v2323 = vand.u32 %v151, 2139095040
    %v2324 = vshrl.u32 %v2323, 23
    %v2325 = vsub.s32 %v2324, 127
    %v2326 = vand.u32 2147483647, %v151
    %v2327 = vand.u32 %v2326, 8388607
    %v2328 = vor.u32 %v2327, 8388608
    %v2329 = vsub.s32 0, %v2328
    %v2330 = vadd.s32 %v2325, 1
    %vm2331 = vcmp.gt.s32.totalorder %v2330, 0
    %v2332 = vsel %vm2331, %v2330, 0
    %v2333 = vshrl.u32 %v2332, 5
    %v2334 = vand.u32 %v2332, 31
    %v2335 = vsub.s32 32, %v2334
    %v2336 = vshrl.u32 683565275, %v2335
    %v2337 = vshll.u32 683565275, %v2334
    %v2338 = vshrl.u32 2475754826, %v2335
    %v2339 = vor.u32 %v2337, %v2338
    %v2340 = vshll.u32 2475754826, %v2334
    %v2341 = vshrl.u32 2131351028, %v2335
    %v2342 = vor.u32 %v2340, %v2341
    %v2343 = vshll.u32 2131351028, %v2334
    %v2344 = vshrl.u32 2102212464, %v2335
    %v2345 = vor.u32 %v2343, %v2344
    %v2346 = vshll.u32 2102212464, %v2334
    %v2347 = vshrl.u32 920167782, %v2335
    %v2348 = vor.u32 %v2346, %v2347
    %v2349 = vshll.u32 920167782, %v2334
    %v2350 = vshrl.u32 1326507024, %v2335
    %v2351 = vor.u32 %v2349, %v2350
    %vm2352 = vcmp.lt.s32.totalorder %v2333, 1
    %vm2353 = vcmp.lt.s32.totalorder %v2333, 2
    %vm2354 = vcmp.lt.s32.totalorder %v2333, 3
    %vm2355 = vcmp.lt.s32.totalorder %v2333, 4
    %v2356 = vsel %vm2352, %v2336, %v2339
    %v2357 = vsel %vm2355, %v2345, 2102212464
    %v2358 = vsel %vm2354, %v2342, %v2357
    %v2359 = vsel %vm2353, %v2356, %v2358
    %v2360 = vsel %vm2352, %v2339, %v2342
    %v2361 = vsel %vm2355, %v2348, 920167782
    %v2362 = vsel %vm2354, %v2345, %v2361
    %v2363 = vsel %vm2353, %v2360, %v2362
    %v2364 = vsel %vm2352, %v2342, %v2345
    %v2365 = vsel %vm2355, %v2351, 1326507024
    %v2366 = vsel %vm2354, %v2348, %v2365
    %v2367 = vsel %vm2353, %v2364, %v2366
    %v2368 = vshll.u32 %v2328, 8
    %v2369 = vand.u32 %v2368, 65535
    %v2370 = vshrl.u32 %v2368, 16
    %v2371 = vand.u32 %v2367, 65535
    %v2372 = vshrl.u32 %v2367, 16
    %v2373 = vmul.u32 %v2369, %v2371
    %v2374 = vmul.u32 %v2369, %v2372
    %v2375 = vmul.u32 %v2370, %v2371
    %v2376 = vmul.u32 %v2370, %v2372
    %v2377 = vshll.u32 %v2374, 16
    %v2378 = vshrl.u32 %v2374, 16
    %v2379 = vshll.u32 %v2375, 16
    %v2380 = vshrl.u32 %v2375, 16
    %vm2381 = vc.u32 %v2373, %v2377
    %v2382 = vsel %vm2381, 1, 0
    %v2383 = vadd.s32 %v2373, %v2377
    %v2384 = vadd.s32 %v2376, %v2382
    %vm2385 = vc.u32 %v2383, %v2379
    %v2386 = vsel %vm2385, 1, 0
    %v2387 = vadd.s32 %v2383, %v2379
    %v2388 = vadd.s32 %v2384, %v2386
    %v2389 = vadd.s32 %v2388, %v2378
    %v2390 = vadd.s32 %v2389, %v2380
    %v2391 = vand.u32 %v2368, 65535
    %v2392 = vshrl.u32 %v2368, 16
    %v2393 = vand.u32 %v2363, 65535
    %v2394 = vshrl.u32 %v2363, 16
    %v2395 = vmul.u32 %v2391, %v2393
    %v2396 = vmul.u32 %v2391, %v2394
    %v2397 = vmul.u32 %v2392, %v2393
    %v2398 = vmul.u32 %v2392, %v2394
    %v2399 = vshll.u32 %v2396, 16
    %v2400 = vshrl.u32 %v2396, 16
    %v2401 = vshll.u32 %v2397, 16
    %v2402 = vshrl.u32 %v2397, 16
    %vm2403 = vc.u32 %v2395, %v2399
    %v2404 = vsel %vm2403, 1, 0
    %v2405 = vadd.s32 %v2395, %v2399
    %v2406 = vadd.s32 %v2398, %v2404
    %vm2407 = vc.u32 %v2405, %v2401
    %v2408 = vsel %vm2407, 1, 0
    %v2409 = vadd.s32 %v2405, %v2401
    %v2410 = vadd.s32 %v2406, %v2408
    %v2411 = vadd.s32 %v2410, %v2400
    %v2412 = vadd.s32 %v2411, %v2402
    %v2413 = vmul.u32 %v2368, %v2359
    %v2414 = vadd.s32 %v2390, %v2409
    %vm2415 = vc.u32 %v2390, %v2409
    %v2416 = vadd.s32 %v2412, 1
    %v2417 = vsel %vm2415, %v2416, %v2412
    %v2418 = vadd.s32 %v2413, %v2417
    %v2419 = vadd.s32 %v2418, 536870912
    %v2420 = vshrl.u32 %v2419, 30
    %v2421 = vshll.u32 %v2420, 30
    %v2422 = vsub.s32 %v2418, %v2421
    %vm2423 = vcmp.lt.s32.totalorder %v2422, 0
    %v2424 = vsub.s32 0, %v2422
    %v2425 = vsel %vm2423, %v2424, %v2422
    %v2426 = vclz %v2425
    %v2427 = vsub.s32 %v2426, 2
    %vm2428 = vcmp.gt.s32.totalorder 0, %v2427
    %v2429 = vsel %vm2428, 0, %v2427
    %v2430 = vsub.s32 32, %v2429
    %v2431 = vshll.u32 %v2422, %v2429
    %v2432 = vshrl.u32 %v2414, %v2430
    %v2433 = vor.u32 %v2431, %v2432
    %v2434 = vsub.s32 4294967266, %v2429
    %v2435 = vadd.s32 %v2434, 127
    %v2436 = vshll.u32 %v2435, 23
    %v2437 = vor.u32 4788187, %v2436
    %v2438 = vand.u32 2147483647, %v2437
    %v2440 = vcvt.s32.f32 %v2433
    %v2441 = vmul.f32 %v2440, %v2438
    %v2442 = vxor.u32 %v2441, 2147483648
    %v2443 = vsel %vm2322, %v2442, %v2441
    %v2444 = vsub.s32 4, %v2420
    %v2445 = vsel %vm2322, %v2444, %v2420
    %v2446 = vsel %vm2321, %v151, %v2443
    %v2447 = vsel %vm2321, 0, %v2445
    %v2448 = vmul.f32 %v2446, %v2446
    %v2449 = vmul.f32 %v2448, -0.001358992
    %v2450 = vadd.f32 %v2449, 0.041655596
    %v2451 = vmul.f32 %v2448, %v2450
    %v2452 = vadd.f32 %v2451, -0.4999988
    %v2453 = vmul.f32 %v2448, %v2452
    %v2454 = vadd.f32 1.0, %v2453
    %v2455 = vmul.f32 %v2446, %v2446
    %v2456 = vmul.f32 %v2455, -0.00019511016
    %v2457 = vadd.f32 %v2456, 0.008332121
    %v2458 = vmul.f32 %v2455, %v2457
    %v2459 = vadd.f32 %v2458, -0.16666654
    %v2460 = vmul.f32 %v2455, %v2459
    %v2461 = vadd.f32 %v2460, 1.0
    %v2462 = vmul.f32 %v2461, %v2446
    %vm2463 = vweird.f32 %v151
    %v2464 = vadd.s32 %v2447, 3
    %v2465 = vand.u32 %v2464, 3
    %vm2466 = vcmp.lt.s32.totalorder %v2465, 2
    %vm2467 = vcmp.eq.s32.totalorder %v2465, 0
    %v2468 = vxor.u32 %v2462, 2147483648
    %v2469 = vsel %vm2467, %v2454, %v2468
    %vm2470 = vcmp.eq.s32.totalorder %v2465, 2
    %v2471 = vxor.u32 %v2454, 2147483648
    %v2472 = vsel %vm2470, %v2471, %v2462
    %v2473 = vsel %vm2466, %v2469, %v2472
    %v2474 = vsel %vm2463, nan, %v2473
    %v2475 = vand.u32 2147483647, %v152
    %vm2476 = vcmp.le.f32.partialorder %v2475, 0.7853982
    %vm2477 = vcmp.lt.s32.totalorder %v152, 0
    %v2478 = vand.u32 %v152, 2139095040
    %v2479 = vshrl.u32 %v2478, 23
    %v2480 = vsub.s32 %v2479, 127
    %v2481 = vand.u32 2147483647, %v152
    %v2482 = vand.u32 %v2481, 8388607
    %v2483 = vor.u32 %v2482, 8388608
    %v2484 = vsub.s32 0, %v2483
    %v2485 = vadd.s32 %v2480, 1
    %vm2486 = vcmp.gt.s32.totalorder %v2485, 0
    %v2487 = vsel %vm2486, %v2485, 0
    %v2488 = vshrl.u32 %v2487, 5
    %v2489 = vand.u32 %v2487, 31
    %v2490 = vsub.s32 32, %v2489
    %v2491 = vshrl.u32 683565275, %v2490
    %v2492 = vshll.u32 683565275, %v2489
    %v2493 = vshrl.u32 2475754826, %v2490
    %v2494 = vor.u32 %v2492, %v2493
    %v2495 = vshll.u32 2475754826, %v2489
    %v2496 = vshrl.u32 2131351028, %v2490
    %v2497 = vor.u32 %v2495, %v2496
    %v2498 = vshll.u32 2131351028, %v2489
    %v2499 = vshrl.u32 2102212464, %v2490
    %v2500 = vor.u32 %v2498, %v2499
    %v2501 = vshll.u32 2102212464, %v2489
    %v2502 = vshrl.u32 920167782, %v2490
    %v2503 = vor.u32 %v2501, %v2502
    %v2504 = vshll.u32 920167782, %v2489
    %v2505 = vshrl.u32 1326507024, %v2490
    %v2506 = vor.u32 %v2504, %v2505
    %vm2507 = vcmp.lt.s32.totalorder %v2488, 1
    %vm2508 = vcmp.lt.s32.totalorder %v2488, 2
    %vm2509 = vcmp.lt.s32.totalorder %v2488, 3
    %vm2510 = vcmp.lt.s32.totalorder %v2488, 4
    %v2511 = vsel %vm2507, %v2491, %v2494
    %v2512 = vsel %vm2510, %v2500, 2102212464
    %v2513 = vsel %vm2509, %v2497, %v2512
    %v2514 = vsel %vm2508, %v2511, %v2513
    %v2515 = vsel %vm2507, %v2494, %v2497
    %v2516 = vsel %vm2510, %v2503, 920167782
    %v2517 = vsel %vm2509, %v2500, %v2516
    %v2518 = vsel %vm2508, %v2515, %v2517
    %v2519 = vsel %vm2507, %v2497, %v2500
    %v2520 = vsel %vm2510, %v2506, 1326507024
    %v2521 = vsel %vm2509, %v2503, %v2520
    %v2522 = vsel %vm2508, %v2519, %v2521
    %v2523 = vshll.u32 %v2483, 8
    %v2524 = vand.u32 %v2523, 65535
    %v2525 = vshrl.u32 %v2523, 16
    %v2526 = vand.u32 %v2522, 65535
    %v2527 = vshrl.u32 %v2522, 16
    %v2528 = vmul.u32 %v2524, %v2526
    %v2529 = vmul.u32 %v2524, %v2527
    %v2530 = vmul.u32 %v2525, %v2526
    %v2531 = vmul.u32 %v2525, %v2527
    %v2532 = vshll.u32 %v2529, 16
    %v2533 = vshrl.u32 %v2529, 16
    %v2534 = vshll.u32 %v2530, 16
    %v2535 = vshrl.u32 %v2530, 16
    %vm2536 = vc.u32 %v2528, %v2532
    %v2537 = vsel %vm2536, 1, 0
    %v2538 = vadd.s32 %v2528, %v2532
    %v2539 = vadd.s32 %v2531, %v2537
    %vm2540 = vc.u32 %v2538, %v2534
    %v2541 = vsel %vm2540, 1, 0
    %v2542 = vadd.s32 %v2538, %v2534
    %v2543 = vadd.s32 %v2539, %v2541
    %v2544 = vadd.s32 %v2543, %v2533
    %v2545 = vadd.s32 %v2544, %v2535
    %v2546 = vand.u32 %v2523, 65535
    %v2547 = vshrl.u32 %v2523, 16
    %v2548 = vand.u32 %v2518, 65535
    %v2549 = vshrl.u32 %v2518, 16
    %v2550 = vmul.u32 %v2546, %v2548
    %v2551 = vmul.u32 %v2546, %v2549
    %v2552 = vmul.u32 %v2547, %v2548
    %v2553 = vmul.u32 %v2547, %v2549
    %v2554 = vshll.u32 %v2551, 16
    %v2555 = vshrl.u32 %v2551, 16
    %v2556 = vshll.u32 %v2552, 16
    %v2557 = vshrl.u32 %v2552, 16
    %vm2558 = vc.u32 %v2550, %v2554
    %v2559 = vsel %vm2558, 1, 0
    %v2560 = vadd.s32 %v2550, %v2554
    %v2561 = vadd.s32 %v2553, %v2559
    %vm2562 = vc.u32 %v2560, %v2556
    %v2563 = vsel %vm2562, 1, 0
    %v2564 = vadd.s32 %v2560, %v2556
    %v2565 = vadd.s32 %v2561, %v2563
    %v2566 = vadd.s32 %v2565, %v2555
    %v2567 = vadd.s32 %v2566, %v2557
    %v2568 = vmul.u32 %v2523, %v2514
    %v2569 = vadd.s32 %v2545, %v2564
    %vm2570 = vc.u32 %v2545, %v2564
    %v2571 = vadd.s32 %v2567, 1
    %v2572 = vsel %vm2570, %v2571, %v2567
    %v2573 = vadd.s32 %v2568, %v2572
    %v2574 = vadd.s32 %v2573, 536870912
    %v2575 = vshrl.u32 %v2574, 30
    %v2576 = vshll.u32 %v2575, 30
    %v2577 = vsub.s32 %v2573, %v2576
    %vm2578 = vcmp.lt.s32.totalorder %v2577, 0
    %v2579 = vsub.s32 0, %v2577
    %v2580 = vsel %vm2578, %v2579, %v2577
    %v2581 = vclz %v2580
    %v2582 = vsub.s32 %v2581, 2
    %vm2583 = vcmp.gt.s32.totalorder 0, %v2582
    %v2584 = vsel %vm2583, 0, %v2582
    %v2585 = vsub.s32 32, %v2584
    %v2586 = vshll.u32 %v2577, %v2584
    %v2587 = vshrl.u32 %v2569, %v2585
    %v2588 = vor.u32 %v2586, %v2587
    %v2589 = vsub.s32 4294967266, %v2584
    %v2590 = vadd.s32 %v2589, 127
    %v2591 = vshll.u32 %v2590, 23
    %v2592 = vor.u32 4788187, %v2591
    %v2593 = vand.u32 2147483647, %v2592
    %v2595 = vcvt.s32.f32 %v2588
    %v2596 = vmul.f32 %v2595, %v2593
    %v2597 = vxor.u32 %v2596, 2147483648
    %v2598 = vsel %vm2477, %v2597, %v2596
    %v2599 = vsub.s32 4, %v2575
    %v2600 = vsel %vm2477, %v2599, %v2575
    %v2601 = vsel %vm2476, %v152, %v2598
    %v2602 = vsel %vm2476, 0, %v2600
    %v2603 = vmul.f32 %v2601, %v2601
    %v2604 = vmul.f32 %v2603, -0.001358992
    %v2605 = vadd.f32 %v2604, 0.041655596
    %v2606 = vmul.f32 %v2603, %v2605
    %v2607 = vadd.f32 %v2606, -0.4999988
    %v2608 = vmul.f32 %v2603, %v2607
    %v2609 = vadd.f32 1.0, %v2608
    %v2610 = vmul.f32 %v2601, %v2601
    %v2611 = vmul.f32 %v2610, -0.00019511016
    %v2612 = vadd.f32 %v2611, 0.008332121
    %v2613 = vmul.f32 %v2610, %v2612
    %v2614 = vadd.f32 %v2613, -0.16666654
    %v2615 = vmul.f32 %v2610, %v2614
    %v2616 = vadd.f32 %v2615, 1.0
    %v2617 = vmul.f32 %v2616, %v2601
    %vm2618 = vweird.f32 %v152
    %v2619 = vadd.s32 %v2602, 3
    %v2620 = vand.u32 %v2619, 3
    %vm2621 = vcmp.lt.s32.totalorder %v2620, 2
    %vm2622 = vcmp.eq.s32.totalorder %v2620, 0
    %v2623 = vxor.u32 %v2617, 2147483648
    %v2624 = vsel %vm2622, %v2609, %v2623
    %vm2625 = vcmp.eq.s32.totalorder %v2620, 2
    %v2626 = vxor.u32 %v2609, 2147483648
    %v2627 = vsel %vm2625, %v2626, %v2617
    %v2628 = vsel %vm2621, %v2624, %v2627
    %v2629 = vsel %vm2618, nan, %v2628
    %v2630 = vand.u32 2147483647, %v153
    %vm2631 = vcmp.le.f32.partialorder %v2630, 0.7853982
    %vm2632 = vcmp.lt.s32.totalorder %v153, 0
    %v2633 = vand.u32 %v153, 2139095040
    %v2634 = vshrl.u32 %v2633, 23
    %v2635 = vsub.s32 %v2634, 127
    %v2636 = vand.u32 2147483647, %v153
    %v2637 = vand.u32 %v2636, 8388607
    %v2638 = vor.u32 %v2637, 8388608
    %v2639 = vsub.s32 0, %v2638
    %v2640 = vadd.s32 %v2635, 1
    %vm2641 = vcmp.gt.s32.totalorder %v2640, 0
    %v2642 = vsel %vm2641, %v2640, 0
    %v2643 = vshrl.u32 %v2642, 5
    %v2644 = vand.u32 %v2642, 31
    %v2645 = vsub.s32 32, %v2644
    %v2646 = vshrl.u32 683565275, %v2645
    %v2647 = vshll.u32 683565275, %v2644
    %v2648 = vshrl.u32 2475754826, %v2645
    %v2649 = vor.u32 %v2647, %v2648
    %v2650 = vshll.u32 2475754826, %v2644
    %v2651 = vshrl.u32 2131351028, %v2645
    %v2652 = vor.u32 %v2650, %v2651
    %v2653 = vshll.u32 2131351028, %v2644
    %v2654 = vshrl.u32 2102212464, %v2645
    %v2655 = vor.u32 %v2653, %v2654
    %v2656 = vshll.u32 2102212464, %v2644
    %v2657 = vshrl.u32 920167782, %v2645
    %v2658 = vor.u32 %v2656, %v2657
    %v2659 = vshll.u32 920167782, %v2644
    %v2660 = vshrl.u32 1326507024, %v2645
    %v2661 = vor.u32 %v2659, %v2660
    %vm2662 = vcmp.lt.s32.totalorder %v2643, 1
    %vm2663 = vcmp.lt.s32.totalorder %v2643, 2
    %vm2664 = vcmp.lt.s32.totalorder %v2643, 3
    %vm2665 = vcmp.lt.s32.totalorder %v2643, 4
    %v2666 = vsel %vm2662, %v2646, %v2649
    %v2667 = vsel %vm2665, %v2655, 2102212464
    %v2668 = vsel %vm2664, %v2652, %v2667
    %v2669 = vsel %vm2663, %v2666, %v2668
    %v2670 = vsel %vm2662, %v2649, %v2652
    %v2671 = vsel %vm2665, %v2658, 920167782
    %v2672 = vsel %vm2664, %v2655, %v2671
    %v2673 = vsel %vm2663, %v2670, %v2672
    %v2674 = vsel %vm2662, %v2652, %v2655
    %v2675 = vsel %vm2665, %v2661, 1326507024
    %v2676 = vsel %vm2664, %v2658, %v2675
    %v2677 = vsel %vm2663, %v2674, %v2676
    %v2678 = vshll.u32 %v2638, 8
    %v2679 = vand.u32 %v2678, 65535
    %v2680 = vshrl.u32 %v2678, 16
    %v2681 = vand.u32 %v2677, 65535
    %v2682 = vshrl.u32 %v2677, 16
    %v2683 = vmul.u32 %v2679, %v2681
    %v2684 = vmul.u32 %v2679, %v2682
    %v2685 = vmul.u32 %v2680, %v2681
    %v2686 = vmul.u32 %v2680, %v2682
    %v2687 = vshll.u32 %v2684, 16
    %v2688 = vshrl.u32 %v2684, 16
    %v2689 = vshll.u32 %v2685, 16
    %v2690 = vshrl.u32 %v2685, 16
    %vm2691 = vc.u32 %v2683, %v2687
    %v2692 = vsel %vm2691, 1, 0
    %v2693 = vadd.s32 %v2683, %v2687
    %v2694 = vadd.s32 %v2686, %v2692
    %vm2695 = vc.u32 %v2693, %v2689
    %v2696 = vsel %vm2695, 1, 0
    %v2697 = vadd.s32 %v2693, %v2689
    %v2698 = vadd.s32 %v2694, %v2696
    %v2699 = vadd.s32 %v2698, %v2688
    %v2700 = vadd.s32 %v2699, %v2690
    %v2701 = vand.u32 %v2678, 65535
    %v2702 = vshrl.u32 %v2678, 16
    %v2703 = vand.u32 %v2673, 65535
    %v2704 = vshrl.u32 %v2673, 16
    %v2705 = vmul.u32 %v2701, %v2703
    %v2706 = vmul.u32 %v2701, %v2704
    %v2707 = vmul.u32 %v2702, %v2703
    %v2708 = vmul.u32 %v2702, %v2704
    %v2709 = vshll.u32 %v2706, 16
    %v2710 = vshrl.u32 %v2706, 16
    %v2711 = vshll.u32 %v2707, 16
    %v2712 = vshrl.u32 %v2707, 16
    %vm2713 = vc.u32 %v2705, %v2709
    %v2714 = vsel %vm2713, 1, 0
    %v2715 = vadd.s32 %v2705, %v2709
    %v2716 = vadd.s32 %v2708, %v2714
    %vm2717 = vc.u32 %v2715, %v2711
    %v2718 = vsel %vm2717, 1, 0
    %v2719 = vadd.s32 %v2715, %v2711
    %v2720 = vadd.s32 %v2716, %v2718
    %v2721 = vadd.s32 %v2720, %v2710
    %v2722 = vadd.s32 %v2721, %v2712
    %v2723 = vmul.u32 %v2678, %v2669
    %v2724 = vadd.s32 %v2700, %v2719
    %vm2725 = vc.u32 %v2700, %v2719
    %v2726 = vadd.s32 %v2722, 1
    %v2727 = vsel %vm2725, %v2726, %v2722
    %v2728 = vadd.s32 %v2723, %v2727
    %v2729 = vadd.s32 %v2728, 536870912
    %v2730 = vshrl.u32 %v2729, 30
    %v2731 = vshll.u32 %v2730, 30
    %v2732 = vsub.s32 %v2728, %v2731
    %vm2733 = vcmp.lt.s32.totalorder %v2732, 0
    %v2734 = vsub.s32 0, %v2732
    %v2735 = vsel %vm2733, %v2734, %v2732
    %v2736 = vclz %v2735
    %v2737 = vsub.s32 %v2736, 2
    %vm2738 = vcmp.gt.s32.totalorder 0, %v2737
    %v2739 = vsel %vm2738, 0, %v2737
    %v2740 = vsub.s32 32, %v2739
    %v2741 = vshll.u32 %v2732, %v2739
    %v2742 = vshrl.u32 %v2724, %v2740
    %v2743 = vor.u32 %v2741, %v2742
    %v2744 = vsub.s32 4294967266, %v2739
    %v2745 = vadd.s32 %v2744, 127
    %v2746 = vshll.u32 %v2745, 23
    %v2747 = vor.u32 4788187, %v2746
    %v2748 = vand.u32 2147483647, %v2747
    %v2750 = vcvt.s32.f32 %v2743
    %v2751 = vmul.f32 %v2750, %v2748
    %v2752 = vxor.u32 %v2751, 2147483648
    %v2753 = vsel %vm2632, %v2752, %v2751
    %v2754 = vsub.s32 4, %v2730
    %v2755 = vsel %vm2632, %v2754, %v2730
    %v2756 = vsel %vm2631, %v153, %v2753
    %v2757 = vsel %vm2631, 0, %v2755
    %v2758 = vmul.f32 %v2756, %v2756
    %v2759 = vmul.f32 %v2758, -0.001358992
    %v2760 = vadd.f32 %v2759, 0.041655596
    %v2761 = vmul.f32 %v2758, %v2760
    %v2762 = vadd.f32 %v2761, -0.4999988
    %v2763 = vmul.f32 %v2758, %v2762
    %v2764 = vadd.f32 1.0, %v2763
    %v2765 = vmul.f32 %v2756, %v2756
    %v2766 = vmul.f32 %v2765, -0.00019511016
    %v2767 = vadd.f32 %v2766, 0.008332121
    %v2768 = vmul.f32 %v2765, %v2767
    %v2769 = vadd.f32 %v2768, -0.16666654
    %v2770 = vmul.f32 %v2765, %v2769
    %v2771 = vadd.f32 %v2770, 1.0
    %v2772 = vmul.f32 %v2771, %v2756
    %vm2773 = vweird.f32 %v153
    %v2774 = vadd.s32 %v2757, 3
    %v2775 = vand.u32 %v2774, 3
    %vm2776 = vcmp.lt.s32.totalorder %v2775, 2
    %vm2777 = vcmp.eq.s32.totalorder %v2775, 0
    %v2778 = vxor.u32 %v2772, 2147483648
    %v2779 = vsel %vm2777, %v2764, %v2778
    %vm2780 = vcmp.eq.s32.totalorder %v2775, 2
    %v2781 = vxor.u32 %v2764, 2147483648
    %v2782 = vsel %vm2780, %v2781, %v2772
    %v2783 = vsel %vm2776, %v2779, %v2782
    %v2784 = vsel %vm2773, nan, %v2783
    %v2785 = vand.u32 2147483647, %v154
    %vm2786 = vcmp.le.f32.partialorder %v2785, 0.7853982
    %vm2787 = vcmp.lt.s32.totalorder %v154, 0
    %v2788 = vand.u32 %v154, 2139095040
    %v2789 = vshrl.u32 %v2788, 23
    %v2790 = vsub.s32 %v2789, 127
    %v2791 = vand.u32 2147483647, %v154
    %v2792 = vand.u32 %v2791, 8388607
    %v2793 = vor.u32 %v2792, 8388608
    %v2794 = vsub.s32 0, %v2793
    %v2795 = vadd.s32 %v2790, 1
    %vm2796 = vcmp.gt.s32.totalorder %v2795, 0
    %v2797 = vsel %vm2796, %v2795, 0
    %v2798 = vshrl.u32 %v2797, 5
    %v2799 = vand.u32 %v2797, 31
    %v2800 = vsub.s32 32, %v2799
    %v2801 = vshrl.u32 683565275, %v2800
    %v2802 = vshll.u32 683565275, %v2799
    %v2803 = vshrl.u32 2475754826, %v2800
    %v2804 = vor.u32 %v2802, %v2803
    %v2805 = vshll.u32 2475754826, %v2799
    %v2806 = vshrl.u32 2131351028, %v2800
    %v2807 = vor.u32 %v2805, %v2806
    %v2808 = vshll.u32 2131351028, %v2799
    %v2809 = vshrl.u32 2102212464, %v2800
    %v2810 = vor.u32 %v2808, %v2809
    %v2811 = vshll.u32 2102212464, %v2799
    %v2812 = vshrl.u32 920167782, %v2800
    %v2813 = vor.u32 %v2811, %v2812
    %v2814 = vshll.u32 920167782, %v2799
    %v2815 = vshrl.u32 1326507024, %v2800
    %v2816 = vor.u32 %v2814, %v2815
    %vm2817 = vcmp.lt.s32.totalorder %v2798, 1
    %vm2818 = vcmp.lt.s32.totalorder %v2798, 2
    %vm2819 = vcmp.lt.s32.totalorder %v2798, 3
    %vm2820 = vcmp.lt.s32.totalorder %v2798, 4
    %v2821 = vsel %vm2817, %v2801, %v2804
    %v2822 = vsel %vm2820, %v2810, 2102212464
    %v2823 = vsel %vm2819, %v2807, %v2822
    %v2824 = vsel %vm2818, %v2821, %v2823
    %v2825 = vsel %vm2817, %v2804, %v2807
    %v2826 = vsel %vm2820, %v2813, 920167782
    %v2827 = vsel %vm2819, %v2810, %v2826
    %v2828 = vsel %vm2818, %v2825, %v2827
    %v2829 = vsel %vm2817, %v2807, %v2810
    %v2830 = vsel %vm2820, %v2816, 1326507024
    %v2831 = vsel %vm2819, %v2813, %v2830
    %v2832 = vsel %vm2818, %v2829, %v2831
    %v2833 = vshll.u32 %v2793, 8
    %v2834 = vand.u32 %v2833, 65535
    %v2835 = vshrl.u32 %v2833, 16
    %v2836 = vand.u32 %v2832, 65535
    %v2837 = vshrl.u32 %v2832, 16
    %v2838 = vmul.u32 %v2834, %v2836
    %v2839 = vmul.u32 %v2834, %v2837
    %v2840 = vmul.u32 %v2835, %v2836
    %v2841 = vmul.u32 %v2835, %v2837
    %v2842 = vshll.u32 %v2839, 16
    %v2843 = vshrl.u32 %v2839, 16
    %v2844 = vshll.u32 %v2840, 16
    %v2845 = vshrl.u32 %v2840, 16
    %vm2846 = vc.u32 %v2838, %v2842
    %v2847 = vsel %vm2846, 1, 0
    %v2848 = vadd.s32 %v2838, %v2842
    %v2849 = vadd.s32 %v2841, %v2847
    %vm2850 = vc.u32 %v2848, %v2844
    %v2851 = vsel %vm2850, 1, 0
    %v2852 = vadd.s32 %v2848, %v2844
    %v2853 = vadd.s32 %v2849, %v2851
    %v2854 = vadd.s32 %v2853, %v2843
    %v2855 = vadd.s32 %v2854, %v2845
    %v2856 = vand.u32 %v2833, 65535
    %v2857 = vshrl.u32 %v2833, 16
    %v2858 = vand.u32 %v2828, 65535
    %v2859 = vshrl.u32 %v2828, 16
    %v2860 = vmul.u32 %v2856, %v2858
    %v2861 = vmul.u32 %v2856, %v2859
    %v2862 = vmul.u32 %v2857, %v2858
    %v2863 = vmul.u32 %v2857, %v2859
    %v2864 = vshll.u32 %v2861, 16
    %v2865 = vshrl.u32 %v2861, 16
    %v2866 = vshll.u32 %v2862, 16
    %v2867 = vshrl.u32 %v2862, 16
    %vm2868 = vc.u32 %v2860, %v2864
    %v2869 = vsel %vm2868, 1, 0
    %v2870 = vadd.s32 %v2860, %v2864
    %v2871 = vadd.s32 %v2863, %v2869
    %vm2872 = vc.u32 %v2870, %v2866
    %v2873 = vsel %vm2872, 1, 0
    %v2874 = vadd.s32 %v2870, %v2866
    %v2875 = vadd.s32 %v2871, %v2873
    %v2876 = vadd.s32 %v2875, %v2865
    %v2877 = vadd.s32 %v2876, %v2867
    %v2878 = vmul.u32 %v2833, %v2824
    %v2879 = vadd.s32 %v2855, %v2874
    %vm2880 = vc.u32 %v2855, %v2874
    %v2881 = vadd.s32 %v2877, 1
    %v2882 = vsel %vm2880, %v2881, %v2877
    %v2883 = vadd.s32 %v2878, %v2882
    %v2884 = vadd.s32 %v2883, 536870912
    %v2885 = vshrl.u32 %v2884, 30
    %v2886 = vshll.u32 %v2885, 30
    %v2887 = vsub.s32 %v2883, %v2886
    %vm2888 = vcmp.lt.s32.totalorder %v2887, 0
    %v2889 = vsub.s32 0, %v2887
    %v2890 = vsel %vm2888, %v2889, %v2887
    %v2891 = vclz %v2890
    %v2892 = vsub.s32 %v2891, 2
    %vm2893 = vcmp.gt.s32.totalorder 0, %v2892
    %v2894 = vsel %vm2893, 0, %v2892
    %v2895 = vsub.s32 32, %v2894
    %v2896 = vshll.u32 %v2887, %v2894
    %v2897 = vshrl.u32 %v2879, %v2895
    %v2898 = vor.u32 %v2896, %v2897
    %v2899 = vsub.s32 4294967266, %v2894
    %v2900 = vadd.s32 %v2899, 127
    %v2901 = vshll.u32 %v2900, 23
    %v2902 = vor.u32 4788187, %v2901
    %v2903 = vand.u32 2147483647, %v2902
    %v2905 = vcvt.s32.f32 %v2898
    %v2906 = vmul.f32 %v2905, %v2903
    %v2907 = vxor.u32 %v2906, 2147483648
    %v2908 = vsel %vm2787, %v2907, %v2906
    %v2909 = vsub.s32 4, %v2885
    %v2910 = vsel %vm2787, %v2909, %v2885
    %v2911 = vsel %vm2786, %v154, %v2908
    %v2912 = vsel %vm2786, 0, %v2910
    %v2913 = vmul.f32 %v2911, %v2911
    %v2914 = vmul.f32 %v2913, -0.001358992
    %v2915 = vadd.f32 %v2914, 0.041655596
    %v2916 = vmul.f32 %v2913, %v2915
    %v2917 = vadd.f32 %v2916, -0.4999988
    %v2918 = vmul.f32 %v2913, %v2917
    %v2919 = vadd.f32 1.0, %v2918
    %v2920 = vmul.f32 %v2911, %v2911
    %v2921 = vmul.f32 %v2920, -0.00019511016
    %v2922 = vadd.f32 %v2921, 0.008332121
    %v2923 = vmul.f32 %v2920, %v2922
    %v2924 = vadd.f32 %v2923, -0.16666654
    %v2925 = vmul.f32 %v2920, %v2924
    %v2926 = vadd.f32 %v2925, 1.0
    %v2927 = vmul.f32 %v2926, %v2911
    %vm2928 = vweird.f32 %v154
    %v2929 = vadd.s32 %v2912, 3
    %v2930 = vand.u32 %v2929, 3
    %vm2931 = vcmp.lt.s32.totalorder %v2930, 2
    %vm2932 = vcmp.eq.s32.totalorder %v2930, 0
    %v2933 = vxor.u32 %v2927, 2147483648
    %v2934 = vsel %vm2932, %v2919, %v2933
    %vm2935 = vcmp.eq.s32.totalorder %v2930, 2
    %v2936 = vxor.u32 %v2919, 2147483648
    %v2937 = vsel %vm2935, %v2936, %v2927
    %v2938 = vsel %vm2931, %v2934, %v2937
    %v2939 = vsel %vm2928, nan, %v2938
    %v2940 = vand.u32 2147483647, %v155
    %vm2941 = vcmp.le.f32.partialorder %v2940, 0.7853982
    %vm2942 = vcmp.lt.s32.totalorder %v155, 0
    %v2943 = vand.u32 %v155, 2139095040
    %v2944 = vshrl.u32 %v2943, 23
    %v2945 = vsub.s32 %v2944, 127
    %v2946 = vand.u32 2147483647, %v155
    %v2947 = vand.u32 %v2946, 8388607
    %v2948 = vor.u32 %v2947, 8388608
    %v2949 = vsub.s32 0, %v2948
    %v2950 = vadd.s32 %v2945, 1
    %vm2951 = vcmp.gt.s32.totalorder %v2950, 0
    %v2952 = vsel %vm2951, %v2950, 0
    %v2953 = vshrl.u32 %v2952, 5
    %v2954 = vand.u32 %v2952, 31
    %v2955 = vsub.s32 32, %v2954
    %v2956 = vshrl.u32 683565275, %v2955
    %v2957 = vshll.u32 683565275, %v2954
    %v2958 = vshrl.u32 2475754826, %v2955
    %v2959 = vor.u32 %v2957, %v2958
    %v2960 = vshll.u32 2475754826, %v2954
    %v2961 = vshrl.u32 2131351028, %v2955
    %v2962 = vor.u32 %v2960, %v2961
    %v2963 = vshll.u32 2131351028, %v2954
    %v2964 = vshrl.u32 2102212464, %v2955
    %v2965 = vor.u32 %v2963, %v2964
    %v2966 = vshll.u32 2102212464, %v2954
    %v2967 = vshrl.u32 920167782, %v2955
    %v2968 = vor.u32 %v2966, %v2967
    %v2969 = vshll.u32 920167782, %v2954
    %v2970 = vshrl.u32 1326507024, %v2955
    %v2971 = vor.u32 %v2969, %v2970
    %vm2972 = vcmp.lt.s32.totalorder %v2953, 1
    %vm2973 = vcmp.lt.s32.totalorder %v2953, 2
    %vm2974 = vcmp.lt.s32.totalorder %v2953, 3
    %vm2975 = vcmp.lt.s32.totalorder %v2953, 4
    %v2976 = vsel %vm2972, %v2956, %v2959
    %v2977 = vsel %vm2975, %v2965, 2102212464
    %v2978 = vsel %vm2974, %v2962, %v2977
    %v2979 = vsel %vm2973, %v2976, %v2978
    %v2980 = vsel %vm2972, %v2959, %v2962
    %v2981 = vsel %vm2975, %v2968, 920167782
    %v2982 = vsel %vm2974, %v2965, %v2981
    %v2983 = vsel %vm2973, %v2980, %v2982
    %v2984 = vsel %vm2972, %v2962, %v2965
    %v2985 = vsel %vm2975, %v2971, 1326507024
    %v2986 = vsel %vm2974, %v2968, %v2985
    %v2987 = vsel %vm2973, %v2984, %v2986
    %v2988 = vshll.u32 %v2948, 8
    %v2989 = vand.u32 %v2988, 65535
    %v2990 = vshrl.u32 %v2988, 16
    %v2991 = vand.u32 %v2987, 65535
    %v2992 = vshrl.u32 %v2987, 16
    %v2993 = vmul.u32 %v2989, %v2991
    %v2994 = vmul.u32 %v2989, %v2992
    %v2995 = vmul.u32 %v2990, %v2991
    %v2996 = vmul.u32 %v2990, %v2992
    %v2997 = vshll.u32 %v2994, 16
    %v2998 = vshrl.u32 %v2994, 16
    %v2999 = vshll.u32 %v2995, 16
    %v3000 = vshrl.u32 %v2995, 16
    %vm3001 = vc.u32 %v2993, %v2997
    %v3002 = vsel %vm3001, 1, 0
    %v3003 = vadd.s32 %v2993, %v2997
    %v3004 = vadd.s32 %v2996, %v3002
    %vm3005 = vc.u32 %v3003, %v2999
    %v3006 = vsel %vm3005, 1, 0
    %v3007 = vadd.s32 %v3003, %v2999
    %v3008 = vadd.s32 %v3004, %v3006
    %v3009 = vadd.s32 %v3008, %v2998
    %v3010 = vadd.s32 %v3009, %v3000
    %v3011 = vand.u32 %v2988, 65535
    %v3012 = vshrl.u32 %v2988, 16
    %v3013 = vand.u32 %v2983, 65535
    %v3014 = vshrl.u32 %v2983, 16
    %v3015 = vmul.u32 %v3011, %v3013
    %v3016 = vmul.u32 %v3011, %v3014
    %v3017 = vmul.u32 %v3012, %v3013
    %v3018 = vmul.u32 %v3012, %v3014
    %v3019 = vshll.u32 %v3016, 16
    %v3020 = vshrl.u32 %v3016, 16
    %v3021 = vshll.u32 %v3017, 16
    %v3022 = vshrl.u32 %v3017, 16
    %vm3023 = vc.u32 %v3015, %v3019
    %v3024 = vsel %vm3023, 1, 0
    %v3025 = vadd.s32 %v3015, %v3019
    %v3026 = vadd.s32 %v3018, %v3024
    %vm3027 = vc.u32 %v3025, %v3021
    %v3028 = vsel %vm3027, 1, 0
    %v3029 = vadd.s32 %v3025, %v3021
    %v3030 = vadd.s32 %v3026, %v3028
    %v3031 = vadd.s32 %v3030, %v3020
    %v3032 = vadd.s32 %v3031, %v3022
    %v3033 = vmul.u32 %v2988, %v2979
    %v3034 = vadd.s32 %v3010, %v3029
    %vm3035 = vc.u32 %v3010, %v3029
    %v3036 = vadd.s32 %v3032, 1
    %v3037 = vsel %vm3035, %v3036, %v3032
    %v3038 = vadd.s32 %v3033, %v3037
    %v3039 = vadd.s32 %v3038, 536870912
    %v3040 = vshrl.u32 %v3039, 30
    %v3041 = vshll.u32 %v3040, 30
    %v3042 = vsub.s32 %v3038, %v3041
    %vm3043 = vcmp.lt.s32.totalorder %v3042, 0
    %v3044 = vsub.s32 0, %v3042
    %v3045 = vsel %vm3043, %v3044, %v3042
    %v3046 = vclz %v3045
    %v3047 = vsub.s32 %v3046, 2
    %vm3048 = vcmp.gt.s32.totalorder 0, %v3047
    %v3049 = vsel %vm3048, 0, %v3047
    %v3050 = vsub.s32 32, %v3049
    %v3051 = vshll.u32 %v3042, %v3049
    %v3052 = vshrl.u32 %v3034, %v3050
    %v3053 = vor.u32 %v3051, %v3052
    %v3054 = vsub.s32 4294967266, %v3049
    %v3055 = vadd.s32 %v3054, 127
    %v3056 = vshll.u32 %v3055, 23
    %v3057 = vor.u32 4788187, %v3056
    %v3058 = vand.u32 2147483647, %v3057
    %v3060 = vcvt.s32.f32 %v3053
    %v3061 = vmul.f32 %v3060, %v3058
    %v3062 = vxor.u32 %v3061, 2147483648
    %v3063 = vsel %vm2942, %v3062, %v3061
    %v3064 = vsub.s32 4, %v3040
    %v3065 = vsel %vm2942, %v3064, %v3040
    %v3066 = vsel %vm2941, %v155, %v3063
    %v3067 = vsel %vm2941, 0, %v3065
    %v3068 = vmul.f32 %v3066, %v3066
    %v3069 = vmul.f32 %v3068, -0.001358992
    %v3070 = vadd.f32 %v3069, 0.041655596
    %v3071 = vmul.f32 %v3068, %v3070
    %v3072 = vadd.f32 %v3071, -0.4999988
    %v3073 = vmul.f32 %v3068, %v3072
    %v3074 = vadd.f32 1.0, %v3073
    %v3075 = vmul.f32 %v3066, %v3066
    %v3076 = vmul.f32 %v3075, -0.00019511016
    %v3077 = vadd.f32 %v3076, 0.008332121
    %v3078 = vmul.f32 %v3075, %v3077
    %v3079 = vadd.f32 %v3078, -0.16666654
    %v3080 = vmul.f32 %v3075, %v3079
    %v3081 = vadd.f32 %v3080, 1.0
    %v3082 = vmul.f32 %v3081, %v3066
    %vm3083 = vweird.f32 %v155
    %v3084 = vadd.s32 %v3067, 3
    %v3085 = vand.u32 %v3084, 3
    %vm3086 = vcmp.lt.s32.totalorder %v3085, 2
    %vm3087 = vcmp.eq.s32.totalorder %v3085, 0
    %v3088 = vxor.u32 %v3082, 2147483648
    %v3089 = vsel %vm3087, %v3074, %v3088
    %vm3090 = vcmp.eq.s32.totalorder %v3085, 2
    %v3091 = vxor.u32 %v3074, 2147483648
    %v3092 = vsel %vm3090, %v3091, %v3082
    %v3093 = vsel %vm3086, %v3089, %v3092
    %v3094 = vsel %vm3083, nan, %v3093
    %v3095 = vand.u32 2147483647, %v156
    %vm3096 = vcmp.le.f32.partialorder %v3095, 0.7853982
    %vm3097 = vcmp.lt.s32.totalorder %v156, 0
    %v3098 = vand.u32 %v156, 2139095040
    %v3099 = vshrl.u32 %v3098, 23
    %v3100 = vsub.s32 %v3099, 127
    %v3101 = vand.u32 2147483647, %v156
    %v3102 = vand.u32 %v3101, 8388607
    %v3103 = vor.u32 %v3102, 8388608
    %v3104 = vsub.s32 0, %v3103
    %v3105 = vadd.s32 %v3100, 1
    %vm3106 = vcmp.gt.s32.totalorder %v3105, 0
    %v3107 = vsel %vm3106, %v3105, 0
    %v3108 = vshrl.u32 %v3107, 5
    %v3109 = vand.u32 %v3107, 31
    %v3110 = vsub.s32 32, %v3109
    %v3111 = vshrl.u32 683565275, %v3110
    %v3112 = vshll.u32 683565275, %v3109
    %v3113 = vshrl.u32 2475754826, %v3110
    %v3114 = vor.u32 %v3112, %v3113
    %v3115 = vshll.u32 2475754826, %v3109
    %v3116 = vshrl.u32 2131351028, %v3110
    %v3117 = vor.u32 %v3115, %v3116
    %v3118 = vshll.u32 2131351028, %v3109
    %v3119 = vshrl.u32 2102212464, %v3110
    %v3120 = vor.u32 %v3118, %v3119
    %v3121 = vshll.u32 2102212464, %v3109
    %v3122 = vshrl.u32 920167782, %v3110
    %v3123 = vor.u32 %v3121, %v3122
    %v3124 = vshll.u32 920167782, %v3109
    %v3125 = vshrl.u32 1326507024, %v3110
    %v3126 = vor.u32 %v3124, %v3125
    %vm3127 = vcmp.lt.s32.totalorder %v3108, 1
    %vm3128 = vcmp.lt.s32.totalorder %v3108, 2
    %vm3129 = vcmp.lt.s32.totalorder %v3108, 3
    %vm3130 = vcmp.lt.s32.totalorder %v3108, 4
    %v3131 = vsel %vm3127, %v3111, %v3114
    %v3132 = vsel %vm3130, %v3120, 2102212464
    %v3133 = vsel %vm3129, %v3117, %v3132
    %v3134 = vsel %vm3128, %v3131, %v3133
    %v3135 = vsel %vm3127, %v3114, %v3117
    %v3136 = vsel %vm3130, %v3123, 920167782
    %v3137 = vsel %vm3129, %v3120, %v3136
    %v3138 = vsel %vm3128, %v3135, %v3137
    %v3139 = vsel %vm3127, %v3117, %v3120
    %v3140 = vsel %vm3130, %v3126, 1326507024
    %v3141 = vsel %vm3129, %v3123, %v3140
    %v3142 = vsel %vm3128, %v3139, %v3141
    %v3143 = vshll.u32 %v3103, 8
    %v3144 = vand.u32 %v3143, 65535
    %v3145 = vshrl.u32 %v3143, 16
    %v3146 = vand.u32 %v3142, 65535
    %v3147 = vshrl.u32 %v3142, 16
    %v3148 = vmul.u32 %v3144, %v3146
    %v3149 = vmul.u32 %v3144, %v3147
    %v3150 = vmul.u32 %v3145, %v3146
    %v3151 = vmul.u32 %v3145, %v3147
    %v3152 = vshll.u32 %v3149, 16
    %v3153 = vshrl.u32 %v3149, 16
    %v3154 = vshll.u32 %v3150, 16
    %v3155 = vshrl.u32 %v3150, 16
    %vm3156 = vc.u32 %v3148, %v3152
    %v3157 = vsel %vm3156, 1, 0
    %v3158 = vadd.s32 %v3148, %v3152
    %v3159 = vadd.s32 %v3151, %v3157
    %vm3160 = vc.u32 %v3158, %v3154
    %v3161 = vsel %vm3160, 1, 0
    %v3162 = vadd.s32 %v3158, %v3154
    %v3163 = vadd.s32 %v3159, %v3161
    %v3164 = vadd.s32 %v3163, %v3153
    %v3165 = vadd.s32 %v3164, %v3155
    %v3166 = vand.u32 %v3143, 65535
    %v3167 = vshrl.u32 %v3143, 16
    %v3168 = vand.u32 %v3138, 65535
    %v3169 = vshrl.u32 %v3138, 16
    %v3170 = vmul.u32 %v3166, %v3168
    %v3171 = vmul.u32 %v3166, %v3169
    %v3172 = vmul.u32 %v3167, %v3168
    %v3173 = vmul.u32 %v3167, %v3169
    %v3174 = vshll.u32 %v3171, 16
    %v3175 = vshrl.u32 %v3171, 16
    %v3176 = vshll.u32 %v3172, 16
    %v3177 = vshrl.u32 %v3172, 16
    %vm3178 = vc.u32 %v3170, %v3174
    %v3179 = vsel %vm3178, 1, 0
    %v3180 = vadd.s32 %v3170, %v3174
    %v3181 = vadd.s32 %v3173, %v3179
    %vm3182 = vc.u32 %v3180, %v3176
    %v3183 = vsel %vm3182, 1, 0
    %v3184 = vadd.s32 %v3180, %v3176
    %v3185 = vadd.s32 %v3181, %v3183
    %v3186 = vadd.s32 %v3185, %v3175
    %v3187 = vadd.s32 %v3186, %v3177
    %v3188 = vmul.u32 %v3143, %v3134
    %v3189 = vadd.s32 %v3165, %v3184
    %vm3190 = vc.u32 %v3165, %v3184
    %v3191 = vadd.s32 %v3187, 1
    %v3192 = vsel %vm3190, %v3191, %v3187
    %v3193 = vadd.s32 %v3188, %v3192
    %v3194 = vadd.s32 %v3193, 536870912
    %v3195 = vshrl.u32 %v3194, 30
    %v3196 = vshll.u32 %v3195, 30
    %v3197 = vsub.s32 %v3193, %v3196
    %vm3198 = vcmp.lt.s32.totalorder %v3197, 0
    %v3199 = vsub.s32 0, %v3197
    %v3200 = vsel %vm3198, %v3199, %v3197
    %v3201 = vclz %v3200
    %v3202 = vsub.s32 %v3201, 2
    %vm3203 = vcmp.gt.s32.totalorder 0, %v3202
    %v3204 = vsel %vm3203, 0, %v3202
    %v3205 = vsub.s32 32, %v3204
    %v3206 = vshll.u32 %v3197, %v3204
    %v3207 = vshrl.u32 %v3189, %v3205
    %v3208 = vor.u32 %v3206, %v3207
    %v3209 = vsub.s32 4294967266, %v3204
    %v3210 = vadd.s32 %v3209, 127
    %v3211 = vshll.u32 %v3210, 23
    %v3212 = vor.u32 4788187, %v3211
    %v3213 = vand.u32 2147483647, %v3212
    %v3215 = vcvt.s32.f32 %v3208
    %v3216 = vmul.f32 %v3215, %v3213
    %v3217 = vxor.u32 %v3216, 2147483648
    %v3218 = vsel %vm3097, %v3217, %v3216
    %v3219 = vsub.s32 4, %v3195
    %v3220 = vsel %vm3097, %v3219, %v3195
    %v3221 = vsel %vm3096, %v156, %v3218
    %v3222 = vsel %vm3096, 0, %v3220
    %v3223 = vmul.f32 %v3221, %v3221
    %v3224 = vmul.f32 %v3223, -0.001358992
    %v3225 = vadd.f32 %v3224, 0.041655596
    %v3226 = vmul.f32 %v3223, %v3225
    %v3227 = vadd.f32 %v3226, -0.4999988
    %v3228 = vmul.f32 %v3223, %v3227
    %v3229 = vadd.f32 1.0, %v3228
    %v3230 = vmul.f32 %v3221, %v3221
    %v3231 = vmul.f32 %v3230, -0.00019511016
    %v3232 = vadd.f32 %v3231, 0.008332121
    %v3233 = vmul.f32 %v3230, %v3232
    %v3234 = vadd.f32 %v3233, -0.16666654
    %v3235 = vmul.f32 %v3230, %v3234
    %v3236 = vadd.f32 %v3235, 1.0
    %v3237 = vmul.f32 %v3236, %v3221
    %vm3238 = vweird.f32 %v156
    %v3239 = vadd.s32 %v3222, 3
    %v3240 = vand.u32 %v3239, 3
    %vm3241 = vcmp.lt.s32.totalorder %v3240, 2
    %vm3242 = vcmp.eq.s32.totalorder %v3240, 0
    %v3243 = vxor.u32 %v3237, 2147483648
    %v3244 = vsel %vm3242, %v3229, %v3243
    %vm3245 = vcmp.eq.s32.totalorder %v3240, 2
    %v3246 = vxor.u32 %v3229, 2147483648
    %v3247 = vsel %vm3245, %v3246, %v3237
    %v3248 = vsel %vm3241, %v3244, %v3247
    %v3249 = vsel %vm3238, nan, %v3248
    %v3250 = vand.u32 2147483647, %v157
    %vm3251 = vcmp.le.f32.partialorder %v3250, 0.7853982
    %vm3252 = vcmp.lt.s32.totalorder %v157, 0
    %v3253 = vand.u32 %v157, 2139095040
    %v3254 = vshrl.u32 %v3253, 23
    %v3255 = vsub.s32 %v3254, 127
    %v3256 = vand.u32 2147483647, %v157
    %v3257 = vand.u32 %v3256, 8388607
    %v3258 = vor.u32 %v3257, 8388608
    %v3259 = vsub.s32 0, %v3258
    %v3260 = vadd.s32 %v3255, 1
    %vm3261 = vcmp.gt.s32.totalorder %v3260, 0
    %v3262 = vsel %vm3261, %v3260, 0
    %v3263 = vshrl.u32 %v3262, 5
    %v3264 = vand.u32 %v3262, 31
    %v3265 = vsub.s32 32, %v3264
    %v3266 = vshrl.u32 683565275, %v3265
    %v3267 = vshll.u32 683565275, %v3264
    %v3268 = vshrl.u32 2475754826, %v3265
    %v3269 = vor.u32 %v3267, %v3268
    %v3270 = vshll.u32 2475754826, %v3264
    %v3271 = vshrl.u32 2131351028, %v3265
    %v3272 = vor.u32 %v3270, %v3271
    %v3273 = vshll.u32 2131351028, %v3264
    %v3274 = vshrl.u32 2102212464, %v3265
    %v3275 = vor.u32 %v3273, %v3274
    %v3276 = vshll.u32 2102212464, %v3264
    %v3277 = vshrl.u32 920167782, %v3265
    %v3278 = vor.u32 %v3276, %v3277
    %v3279 = vshll.u32 920167782, %v3264
    %v3280 = vshrl.u32 1326507024, %v3265
    %v3281 = vor.u32 %v3279, %v3280
    %vm3282 = vcmp.lt.s32.totalorder %v3263, 1
    %vm3283 = vcmp.lt.s32.totalorder %v3263, 2
    %vm3284 = vcmp.lt.s32.totalorder %v3263, 3
    %vm3285 = vcmp.lt.s32.totalorder %v3263, 4
    %v3286 = vsel %vm3282, %v3266, %v3269
    %v3287 = vsel %vm3285, %v3275, 2102212464
    %v3288 = vsel %vm3284, %v3272, %v3287
    %v3289 = vsel %vm3283, %v3286, %v3288
    %v3290 = vsel %vm3282, %v3269, %v3272
    %v3291 = vsel %vm3285, %v3278, 920167782
    %v3292 = vsel %vm3284, %v3275, %v3291
    %v3293 = vsel %vm3283, %v3290, %v3292
    %v3294 = vsel %vm3282, %v3272, %v3275
    %v3295 = vsel %vm3285, %v3281, 1326507024
    %v3296 = vsel %vm3284, %v3278, %v3295
    %v3297 = vsel %vm3283, %v3294, %v3296
    %v3298 = vshll.u32 %v3258, 8
    %v3299 = vand.u32 %v3298, 65535
    %v3300 = vshrl.u32 %v3298, 16
    %v3301 = vand.u32 %v3297, 65535
    %v3302 = vshrl.u32 %v3297, 16
    %v3303 = vmul.u32 %v3299, %v3301
    %v3304 = vmul.u32 %v3299, %v3302
    %v3305 = vmul.u32 %v3300, %v3301
    %v3306 = vmul.u32 %v3300, %v3302
    %v3307 = vshll.u32 %v3304, 16
    %v3308 = vshrl.u32 %v3304, 16
    %v3309 = vshll.u32 %v3305, 16
    %v3310 = vshrl.u32 %v3305, 16
    %vm3311 = vc.u32 %v3303, %v3307
    %v3312 = vsel %vm3311, 1, 0
    %v3313 = vadd.s32 %v3303, %v3307
    %v3314 = vadd.s32 %v3306, %v3312
    %vm3315 = vc.u32 %v3313, %v3309
    %v3316 = vsel %vm3315, 1, 0
    %v3317 = vadd.s32 %v3313, %v3309
    %v3318 = vadd.s32 %v3314, %v3316
    %v3319 = vadd.s32 %v3318, %v3308
    %v3320 = vadd.s32 %v3319, %v3310
    %v3321 = vand.u32 %v3298, 65535
    %v3322 = vshrl.u32 %v3298, 16
    %v3323 = vand.u32 %v3293, 65535
    %v3324 = vshrl.u32 %v3293, 16
    %v3325 = vmul.u32 %v3321, %v3323
    %v3326 = vmul.u32 %v3321, %v3324
    %v3327 = vmul.u32 %v3322, %v3323
    %v3328 = vmul.u32 %v3322, %v3324
    %v3329 = vshll.u32 %v3326, 16
    %v3330 = vshrl.u32 %v3326, 16
    %v3331 = vshll.u32 %v3327, 16
    %v3332 = vshrl.u32 %v3327, 16
    %vm3333 = vc.u32 %v3325, %v3329
    %v3334 = vsel %vm3333, 1, 0
    %v3335 = vadd.s32 %v3325, %v3329
    %v3336 = vadd.s32 %v3328, %v3334
    %vm3337 = vc.u32 %v3335, %v3331
    %v3338 = vsel %vm3337, 1, 0
    %v3339 = vadd.s32 %v3335, %v3331
    %v3340 = vadd.s32 %v3336, %v3338
    %v3341 = vadd.s32 %v3340, %v3330
    %v3342 = vadd.s32 %v3341, %v3332
    %v3343 = vmul.u32 %v3298, %v3289
    %v3344 = vadd.s32 %v3320, %v3339
    %vm3345 = vc.u32 %v3320, %v3339
    %v3346 = vadd.s32 %v3342, 1
    %v3347 = vsel %vm3345, %v3346, %v3342
    %v3348 = vadd.s32 %v3343, %v3347
    %v3349 = vadd.s32 %v3348, 536870912
    %v3350 = vshrl.u32 %v3349, 30
    %v3351 = vshll.u32 %v3350, 30
    %v3352 = vsub.s32 %v3348, %v3351
    %vm3353 = vcmp.lt.s32.totalorder %v3352, 0
    %v3354 = vsub.s32 0, %v3352
    %v3355 = vsel %vm3353, %v3354, %v3352
    %v3356 = vclz %v3355
    %v3357 = vsub.s32 %v3356, 2
    %vm3358 = vcmp.gt.s32.totalorder 0, %v3357
    %v3359 = vsel %vm3358, 0, %v3357
    %v3360 = vsub.s32 32, %v3359
    %v3361 = vshll.u32 %v3352, %v3359
    %v3362 = vshrl.u32 %v3344, %v3360
    %v3363 = vor.u32 %v3361, %v3362
    %v3364 = vsub.s32 4294967266, %v3359
    %v3365 = vadd.s32 %v3364, 127
    %v3366 = vshll.u32 %v3365, 23
    %v3367 = vor.u32 4788187, %v3366
    %v3368 = vand.u32 2147483647, %v3367
    %v3370 = vcvt.s32.f32 %v3363
    %v3371 = vmul.f32 %v3370, %v3368
    %v3372 = vxor.u32 %v3371, 2147483648
    %v3373 = vsel %vm3252, %v3372, %v3371
    %v3374 = vsub.s32 4, %v3350
    %v3375 = vsel %vm3252, %v3374, %v3350
    %v3376 = vsel %vm3251, %v157, %v3373
    %v3377 = vsel %vm3251, 0, %v3375
    %v3378 = vmul.f32 %v3376, %v3376
    %v3379 = vmul.f32 %v3378, -0.001358992
    %v3380 = vadd.f32 %v3379, 0.041655596
    %v3381 = vmul.f32 %v3378, %v3380
    %v3382 = vadd.f32 %v3381, -0.4999988
    %v3383 = vmul.f32 %v3378, %v3382
    %v3384 = vadd.f32 1.0, %v3383
    %v3385 = vmul.f32 %v3376, %v3376
    %v3386 = vmul.f32 %v3385, -0.00019511016
    %v3387 = vadd.f32 %v3386, 0.008332121
    %v3388 = vmul.f32 %v3385, %v3387
    %v3389 = vadd.f32 %v3388, -0.16666654
    %v3390 = vmul.f32 %v3385, %v3389
    %v3391 = vadd.f32 %v3390, 1.0
    %v3392 = vmul.f32 %v3391, %v3376
    %vm3393 = vweird.f32 %v157
    %v3394 = vadd.s32 %v3377, 3
    %v3395 = vand.u32 %v3394, 3
    %vm3396 = vcmp.lt.s32.totalorder %v3395, 2
    %vm3397 = vcmp.eq.s32.totalorder %v3395, 0
    %v3398 = vxor.u32 %v3392, 2147483648
    %v3399 = vsel %vm3397, %v3384, %v3398
    %vm3400 = vcmp.eq.s32.totalorder %v3395, 2
    %v3401 = vxor.u32 %v3384, 2147483648
    %v3402 = vsel %vm3400, %v3401, %v3392
    %v3403 = vsel %vm3396, %v3399, %v3402
    %v3404 = vsel %vm3393, nan, %v3403
    %v3405 = vand.u32 2147483647, %v158
    %vm3406 = vcmp.le.f32.partialorder %v3405, 0.7853982
    %vm3407 = vcmp.lt.s32.totalorder %v158, 0
    %v3408 = vand.u32 %v158, 2139095040
    %v3409 = vshrl.u32 %v3408, 23
    %v3410 = vsub.s32 %v3409, 127
    %v3411 = vand.u32 2147483647, %v158
    %v3412 = vand.u32 %v3411, 8388607
    %v3413 = vor.u32 %v3412, 8388608
    %v3414 = vsub.s32 0, %v3413
    %v3415 = vadd.s32 %v3410, 1
    %vm3416 = vcmp.gt.s32.totalorder %v3415, 0
    %v3417 = vsel %vm3416, %v3415, 0
    %v3418 = vshrl.u32 %v3417, 5
    %v3419 = vand.u32 %v3417, 31
    %v3420 = vsub.s32 32, %v3419
    %v3421 = vshrl.u32 683565275, %v3420
    %v3422 = vshll.u32 683565275, %v3419
    %v3423 = vshrl.u32 2475754826, %v3420
    %v3424 = vor.u32 %v3422, %v3423
    %v3425 = vshll.u32 2475754826, %v3419
    %v3426 = vshrl.u32 2131351028, %v3420
    %v3427 = vor.u32 %v3425, %v3426
    %v3428 = vshll.u32 2131351028, %v3419
    %v3429 = vshrl.u32 2102212464, %v3420
    %v3430 = vor.u32 %v3428, %v3429
    %v3431 = vshll.u32 2102212464, %v3419
    %v3432 = vshrl.u32 920167782, %v3420
    %v3433 = vor.u32 %v3431, %v3432
    %v3434 = vshll.u32 920167782, %v3419
    %v3435 = vshrl.u32 1326507024, %v3420
    %v3436 = vor.u32 %v3434, %v3435
    %vm3437 = vcmp.lt.s32.totalorder %v3418, 1
    %vm3438 = vcmp.lt.s32.totalorder %v3418, 2
    %vm3439 = vcmp.lt.s32.totalorder %v3418, 3
    %vm3440 = vcmp.lt.s32.totalorder %v3418, 4
    %v3441 = vsel %vm3437, %v3421, %v3424
    %v3442 = vsel %vm3440, %v3430, 2102212464
    %v3443 = vsel %vm3439, %v3427, %v3442
    %v3444 = vsel %vm3438, %v3441, %v3443
    %v3445 = vsel %vm3437, %v3424, %v3427
    %v3446 = vsel %vm3440, %v3433, 920167782
    %v3447 = vsel %vm3439, %v3430, %v3446
    %v3448 = vsel %vm3438, %v3445, %v3447
    %v3449 = vsel %vm3437, %v3427, %v3430
    %v3450 = vsel %vm3440, %v3436, 1326507024
    %v3451 = vsel %vm3439, %v3433, %v3450
    %v3452 = vsel %vm3438, %v3449, %v3451
    %v3453 = vshll.u32 %v3413, 8
    %v3454 = vand.u32 %v3453, 65535
    %v3455 = vshrl.u32 %v3453, 16
    %v3456 = vand.u32 %v3452, 65535
    %v3457 = vshrl.u32 %v3452, 16
    %v3458 = vmul.u32 %v3454, %v3456
    %v3459 = vmul.u32 %v3454, %v3457
    %v3460 = vmul.u32 %v3455, %v3456
    %v3461 = vmul.u32 %v3455, %v3457
    %v3462 = vshll.u32 %v3459, 16
    %v3463 = vshrl.u32 %v3459, 16
    %v3464 = vshll.u32 %v3460, 16
    %v3465 = vshrl.u32 %v3460, 16
    %vm3466 = vc.u32 %v3458, %v3462
    %v3467 = vsel %vm3466, 1, 0
    %v3468 = vadd.s32 %v3458, %v3462
    %v3469 = vadd.s32 %v3461, %v3467
    %vm3470 = vc.u32 %v3468, %v3464
    %v3471 = vsel %vm3470, 1, 0
    %v3472 = vadd.s32 %v3468, %v3464
    %v3473 = vadd.s32 %v3469, %v3471
    %v3474 = vadd.s32 %v3473, %v3463
    %v3475 = vadd.s32 %v3474, %v3465
    %v3476 = vand.u32 %v3453, 65535
    %v3477 = vshrl.u32 %v3453, 16
    %v3478 = vand.u32 %v3448, 65535
    %v3479 = vshrl.u32 %v3448, 16
    %v3480 = vmul.u32 %v3476, %v3478
    %v3481 = vmul.u32 %v3476, %v3479
    %v3482 = vmul.u32 %v3477, %v3478
    %v3483 = vmul.u32 %v3477, %v3479
    %v3484 = vshll.u32 %v3481, 16
    %v3485 = vshrl.u32 %v3481, 16
    %v3486 = vshll.u32 %v3482, 16
    %v3487 = vshrl.u32 %v3482, 16
    %vm3488 = vc.u32 %v3480, %v3484
    %v3489 = vsel %vm3488, 1, 0
    %v3490 = vadd.s32 %v3480, %v3484
    %v3491 = vadd.s32 %v3483, %v3489
    %vm3492 = vc.u32 %v3490, %v3486
    %v3493 = vsel %vm3492, 1, 0
    %v3494 = vadd.s32 %v3490, %v3486
    %v3495 = vadd.s32 %v3491, %v3493
    %v3496 = vadd.s32 %v3495, %v3485
    %v3497 = vadd.s32 %v3496, %v3487
    %v3498 = vmul.u32 %v3453, %v3444
    %v3499 = vadd.s32 %v3475, %v3494
    %vm3500 = vc.u32 %v3475, %v3494
    %v3501 = vadd.s32 %v3497, 1
    %v3502 = vsel %vm3500, %v3501, %v3497
    %v3503 = vadd.s32 %v3498, %v3502
    %v3504 = vadd.s32 %v3503, 536870912
    %v3505 = vshrl.u32 %v3504, 30
    %v3506 = vshll.u32 %v3505, 30
    %v3507 = vsub.s32 %v3503, %v3506
    %vm3508 = vcmp.lt.s32.totalorder %v3507, 0
    %v3509 = vsub.s32 0, %v3507
    %v3510 = vsel %vm3508, %v3509, %v3507
    %v3511 = vclz %v3510
    %v3512 = vsub.s32 %v3511, 2
    %vm3513 = vcmp.gt.s32.totalorder 0, %v3512
    %v3514 = vsel %vm3513, 0, %v3512
    %v3515 = vsub.s32 32, %v3514
    %v3516 = vshll.u32 %v3507, %v3514
    %v3517 = vshrl.u32 %v3499, %v3515
    %v3518 = vor.u32 %v3516, %v3517
    %v3519 = vsub.s32 4294967266, %v3514
    %v3520 = vadd.s32 %v3519, 127
    %v3521 = vshll.u32 %v3520, 23
    %v3522 = vor.u32 4788187, %v3521
    %v3523 = vand.u32 2147483647, %v3522
    %v3525 = vcvt.s32.f32 %v3518
    %v3526 = vmul.f32 %v3525, %v3523
    %v3527 = vxor.u32 %v3526, 2147483648
    %v3528 = vsel %vm3407, %v3527, %v3526
    %v3529 = vsub.s32 4, %v3505
    %v3530 = vsel %vm3407, %v3529, %v3505
    %v3531 = vsel %vm3406, %v158, %v3528
    %v3532 = vsel %vm3406, 0, %v3530
    %v3533 = vmul.f32 %v3531, %v3531
    %v3534 = vmul.f32 %v3533, -0.001358992
    %v3535 = vadd.f32 %v3534, 0.041655596
    %v3536 = vmul.f32 %v3533, %v3535
    %v3537 = vadd.f32 %v3536, -0.4999988
    %v3538 = vmul.f32 %v3533, %v3537
    %v3539 = vadd.f32 1.0, %v3538
    %v3540 = vmul.f32 %v3531, %v3531
    %v3541 = vmul.f32 %v3540, -0.00019511016
    %v3542 = vadd.f32 %v3541, 0.008332121
    %v3543 = vmul.f32 %v3540, %v3542
    %v3544 = vadd.f32 %v3543, -0.16666654
    %v3545 = vmul.f32 %v3540, %v3544
    %v3546 = vadd.f32 %v3545, 1.0
    %v3547 = vmul.f32 %v3546, %v3531
    %vm3548 = vweird.f32 %v158
    %v3549 = vadd.s32 %v3532, 3
    %v3550 = vand.u32 %v3549, 3
    %vm3551 = vcmp.lt.s32.totalorder %v3550, 2
    %vm3552 = vcmp.eq.s32.totalorder %v3550, 0
    %v3553 = vxor.u32 %v3547, 2147483648
    %v3554 = vsel %vm3552, %v3539, %v3553
    %vm3555 = vcmp.eq.s32.totalorder %v3550, 2
    %v3556 = vxor.u32 %v3539, 2147483648
    %v3557 = vsel %vm3555, %v3556, %v3547
    %v3558 = vsel %vm3551, %v3554, %v3557
    %v3559 = vsel %vm3548, nan, %v3558
    %v3560 = vand.u32 2147483647, %v159
    %vm3561 = vcmp.le.f32.partialorder %v3560, 0.7853982
    %vm3562 = vcmp.lt.s32.totalorder %v159, 0
    %v3563 = vand.u32 %v159, 2139095040
    %v3564 = vshrl.u32 %v3563, 23
    %v3565 = vsub.s32 %v3564, 127
    %v3566 = vand.u32 2147483647, %v159
    %v3567 = vand.u32 %v3566, 8388607
    %v3568 = vor.u32 %v3567, 8388608
    %v3569 = vsub.s32 0, %v3568
    %v3570 = vadd.s32 %v3565, 1
    %vm3571 = vcmp.gt.s32.totalorder %v3570, 0
    %v3572 = vsel %vm3571, %v3570, 0
    %v3573 = vshrl.u32 %v3572, 5
    %v3574 = vand.u32 %v3572, 31
    %v3575 = vsub.s32 32, %v3574
    %v3576 = vshrl.u32 683565275, %v3575
    %v3577 = vshll.u32 683565275, %v3574
    %v3578 = vshrl.u32 2475754826, %v3575
    %v3579 = vor.u32 %v3577, %v3578
    %v3580 = vshll.u32 2475754826, %v3574
    %v3581 = vshrl.u32 2131351028, %v3575
    %v3582 = vor.u32 %v3580, %v3581
    %v3583 = vshll.u32 2131351028, %v3574
    %v3584 = vshrl.u32 2102212464, %v3575
    %v3585 = vor.u32 %v3583, %v3584
    %v3586 = vshll.u32 2102212464, %v3574
    %v3587 = vshrl.u32 920167782, %v3575
    %v3588 = vor.u32 %v3586, %v3587
    %v3589 = vshll.u32 920167782, %v3574
    %v3590 = vshrl.u32 1326507024, %v3575
    %v3591 = vor.u32 %v3589, %v3590
    %vm3592 = vcmp.lt.s32.totalorder %v3573, 1
    %vm3593 = vcmp.lt.s32.totalorder %v3573, 2
    %vm3594 = vcmp.lt.s32.totalorder %v3573, 3
    %vm3595 = vcmp.lt.s32.totalorder %v3573, 4
    %v3596 = vsel %vm3592, %v3576, %v3579
    %v3597 = vsel %vm3595, %v3585, 2102212464
    %v3598 = vsel %vm3594, %v3582, %v3597
    %v3599 = vsel %vm3593, %v3596, %v3598
    %v3600 = vsel %vm3592, %v3579, %v3582
    %v3601 = vsel %vm3595, %v3588, 920167782
    %v3602 = vsel %vm3594, %v3585, %v3601
    %v3603 = vsel %vm3593, %v3600, %v3602
    %v3604 = vsel %vm3592, %v3582, %v3585
    %v3605 = vsel %vm3595, %v3591, 1326507024
    %v3606 = vsel %vm3594, %v3588, %v3605
    %v3607 = vsel %vm3593, %v3604, %v3606
    %v3608 = vshll.u32 %v3568, 8
    %v3609 = vand.u32 %v3608, 65535
    %v3610 = vshrl.u32 %v3608, 16
    %v3611 = vand.u32 %v3607, 65535
    %v3612 = vshrl.u32 %v3607, 16
    %v3613 = vmul.u32 %v3609, %v3611
    %v3614 = vmul.u32 %v3609, %v3612
    %v3615 = vmul.u32 %v3610, %v3611
    %v3616 = vmul.u32 %v3610, %v3612
    %v3617 = vshll.u32 %v3614, 16
    %v3618 = vshrl.u32 %v3614, 16
    %v3619 = vshll.u32 %v3615, 16
    %v3620 = vshrl.u32 %v3615, 16
    %vm3621 = vc.u32 %v3613, %v3617
    %v3622 = vsel %vm3621, 1, 0
    %v3623 = vadd.s32 %v3613, %v3617
    %v3624 = vadd.s32 %v3616, %v3622
    %vm3625 = vc.u32 %v3623, %v3619
    %v3626 = vsel %vm3625, 1, 0
    %v3627 = vadd.s32 %v3623, %v3619
    %v3628 = vadd.s32 %v3624, %v3626
    %v3629 = vadd.s32 %v3628, %v3618
    %v3630 = vadd.s32 %v3629, %v3620
    %v3631 = vand.u32 %v3608, 65535
    %v3632 = vshrl.u32 %v3608, 16
    %v3633 = vand.u32 %v3603, 65535
    %v3634 = vshrl.u32 %v3603, 16
    %v3635 = vmul.u32 %v3631, %v3633
    %v3636 = vmul.u32 %v3631, %v3634
    %v3637 = vmul.u32 %v3632, %v3633
    %v3638 = vmul.u32 %v3632, %v3634
    %v3639 = vshll.u32 %v3636, 16
    %v3640 = vshrl.u32 %v3636, 16
    %v3641 = vshll.u32 %v3637, 16
    %v3642 = vshrl.u32 %v3637, 16
    %vm3643 = vc.u32 %v3635, %v3639
    %v3644 = vsel %vm3643, 1, 0
    %v3645 = vadd.s32 %v3635, %v3639
    %v3646 = vadd.s32 %v3638, %v3644
    %vm3647 = vc.u32 %v3645, %v3641
    %v3648 = vsel %vm3647, 1, 0
    %v3649 = vadd.s32 %v3645, %v3641
    %v3650 = vadd.s32 %v3646, %v3648
    %v3651 = vadd.s32 %v3650, %v3640
    %v3652 = vadd.s32 %v3651, %v3642
    %v3653 = vmul.u32 %v3608, %v3599
    %v3654 = vadd.s32 %v3630, %v3649
    %vm3655 = vc.u32 %v3630, %v3649
    %v3656 = vadd.s32 %v3652, 1
    %v3657 = vsel %vm3655, %v3656, %v3652
    %v3658 = vadd.s32 %v3653, %v3657
    %v3659 = vadd.s32 %v3658, 536870912
    %v3660 = vshrl.u32 %v3659, 30
    %v3661 = vshll.u32 %v3660, 30
    %v3662 = vsub.s32 %v3658, %v3661
    %vm3663 = vcmp.lt.s32.totalorder %v3662, 0
    %v3664 = vsub.s32 0, %v3662
    %v3665 = vsel %vm3663, %v3664, %v3662
    %v3666 = vclz %v3665
    %v3667 = vsub.s32 %v3666, 2
    %vm3668 = vcmp.gt.s32.totalorder 0, %v3667
    %v3669 = vsel %vm3668, 0, %v3667
    %v3670 = vsub.s32 32, %v3669
    %v3671 = vshll.u32 %v3662, %v3669
    %v3672 = vshrl.u32 %v3654, %v3670
    %v3673 = vor.u32 %v3671, %v3672
    %v3674 = vsub.s32 4294967266, %v3669
    %v3675 = vadd.s32 %v3674, 127
    %v3676 = vshll.u32 %v3675, 23
    %v3677 = vor.u32 4788187, %v3676
    %v3678 = vand.u32 2147483647, %v3677
    %v3680 = vcvt.s32.f32 %v3673
    %v3681 = vmul.f32 %v3680, %v3678
    %v3682 = vxor.u32 %v3681, 2147483648
    %v3683 = vsel %vm3562, %v3682, %v3681
    %v3684 = vsub.s32 4, %v3660
    %v3685 = vsel %vm3562, %v3684, %v3660
    %v3686 = vsel %vm3561, %v159, %v3683
    %v3687 = vsel %vm3561, 0, %v3685
    %v3688 = vmul.f32 %v3686, %v3686
    %v3689 = vmul.f32 %v3688, -0.001358992
    %v3690 = vadd.f32 %v3689, 0.041655596
    %v3691 = vmul.f32 %v3688, %v3690
    %v3692 = vadd.f32 %v3691, -0.4999988
    %v3693 = vmul.f32 %v3688, %v3692
    %v3694 = vadd.f32 1.0, %v3693
    %v3695 = vmul.f32 %v3686, %v3686
    %v3696 = vmul.f32 %v3695, -0.00019511016
    %v3697 = vadd.f32 %v3696, 0.008332121
    %v3698 = vmul.f32 %v3695, %v3697
    %v3699 = vadd.f32 %v3698, -0.16666654
    %v3700 = vmul.f32 %v3695, %v3699
    %v3701 = vadd.f32 %v3700, 1.0
    %v3702 = vmul.f32 %v3701, %v3686
    %vm3703 = vweird.f32 %v159
    %v3704 = vadd.s32 %v3687, 3
    %v3705 = vand.u32 %v3704, 3
    %vm3706 = vcmp.lt.s32.totalorder %v3705, 2
    %vm3707 = vcmp.eq.s32.totalorder %v3705, 0
    %v3708 = vxor.u32 %v3702, 2147483648
    %v3709 = vsel %vm3707, %v3694, %v3708
    %vm3710 = vcmp.eq.s32.totalorder %v3705, 2
    %v3711 = vxor.u32 %v3694, 2147483648
    %v3712 = vsel %vm3710, %v3711, %v3702
    %v3713 = vsel %vm3706, %v3709, %v3712
    %v3714 = vsel %vm3703, nan, %v3713
    %v3715 = vand.u32 2147483647, %v160
    %vm3716 = vcmp.le.f32.partialorder %v3715, 0.7853982
    %vm3717 = vcmp.lt.s32.totalorder %v160, 0
    %v3718 = vand.u32 %v160, 2139095040
    %v3719 = vshrl.u32 %v3718, 23
    %v3720 = vsub.s32 %v3719, 127
    %v3721 = vand.u32 2147483647, %v160
    %v3722 = vand.u32 %v3721, 8388607
    %v3723 = vor.u32 %v3722, 8388608
    %v3724 = vsub.s32 0, %v3723
    %v3725 = vadd.s32 %v3720, 1
    %vm3726 = vcmp.gt.s32.totalorder %v3725, 0
    %v3727 = vsel %vm3726, %v3725, 0
    %v3728 = vshrl.u32 %v3727, 5
    %v3729 = vand.u32 %v3727, 31
    %v3730 = vsub.s32 32, %v3729
    %v3731 = vshrl.u32 683565275, %v3730
    %v3732 = vshll.u32 683565275, %v3729
    %v3733 = vshrl.u32 2475754826, %v3730
    %v3734 = vor.u32 %v3732, %v3733
    %v3735 = vshll.u32 2475754826, %v3729
    %v3736 = vshrl.u32 2131351028, %v3730
    %v3737 = vor.u32 %v3735, %v3736
    %v3738 = vshll.u32 2131351028, %v3729
    %v3739 = vshrl.u32 2102212464, %v3730
    %v3740 = vor.u32 %v3738, %v3739
    %v3741 = vshll.u32 2102212464, %v3729
    %v3742 = vshrl.u32 920167782, %v3730
    %v3743 = vor.u32 %v3741, %v3742
    %v3744 = vshll.u32 920167782, %v3729
    %v3745 = vshrl.u32 1326507024, %v3730
    %v3746 = vor.u32 %v3744, %v3745
    %vm3747 = vcmp.lt.s32.totalorder %v3728, 1
    %vm3748 = vcmp.lt.s32.totalorder %v3728, 2
    %vm3749 = vcmp.lt.s32.totalorder %v3728, 3
    %vm3750 = vcmp.lt.s32.totalorder %v3728, 4
    %v3751 = vsel %vm3747, %v3731, %v3734
    %v3752 = vsel %vm3750, %v3740, 2102212464
    %v3753 = vsel %vm3749, %v3737, %v3752
    %v3754 = vsel %vm3748, %v3751, %v3753
    %v3755 = vsel %vm3747, %v3734, %v3737
    %v3756 = vsel %vm3750, %v3743, 920167782
    %v3757 = vsel %vm3749, %v3740, %v3756
    %v3758 = vsel %vm3748, %v3755, %v3757
    %v3759 = vsel %vm3747, %v3737, %v3740
    %v3760 = vsel %vm3750, %v3746, 1326507024
    %v3761 = vsel %vm3749, %v3743, %v3760
    %v3762 = vsel %vm3748, %v3759, %v3761
    %v3763 = vshll.u32 %v3723, 8
    %v3764 = vand.u32 %v3763, 65535
    %v3765 = vshrl.u32 %v3763, 16
    %v3766 = vand.u32 %v3762, 65535
    %v3767 = vshrl.u32 %v3762, 16
    %v3768 = vmul.u32 %v3764, %v3766
    %v3769 = vmul.u32 %v3764, %v3767
    %v3770 = vmul.u32 %v3765, %v3766
    %v3771 = vmul.u32 %v3765, %v3767
    %v3772 = vshll.u32 %v3769, 16
    %v3773 = vshrl.u32 %v3769, 16
    %v3774 = vshll.u32 %v3770, 16
    %v3775 = vshrl.u32 %v3770, 16
    %vm3776 = vc.u32 %v3768, %v3772
    %v3777 = vsel %vm3776, 1, 0
    %v3778 = vadd.s32 %v3768, %v3772
    %v3779 = vadd.s32 %v3771, %v3777
    %vm3780 = vc.u32 %v3778, %v3774
    %v3781 = vsel %vm3780, 1, 0
    %v3782 = vadd.s32 %v3778, %v3774
    %v3783 = vadd.s32 %v3779, %v3781
    %v3784 = vadd.s32 %v3783, %v3773
    %v3785 = vadd.s32 %v3784, %v3775
    %v3786 = vand.u32 %v3763, 65535
    %v3787 = vshrl.u32 %v3763, 16
    %v3788 = vand.u32 %v3758, 65535
    %v3789 = vshrl.u32 %v3758, 16
    %v3790 = vmul.u32 %v3786, %v3788
    %v3791 = vmul.u32 %v3786, %v3789
    %v3792 = vmul.u32 %v3787, %v3788
    %v3793 = vmul.u32 %v3787, %v3789
    %v3794 = vshll.u32 %v3791, 16
    %v3795 = vshrl.u32 %v3791, 16
    %v3796 = vshll.u32 %v3792, 16
    %v3797 = vshrl.u32 %v3792, 16
    %vm3798 = vc.u32 %v3790, %v3794
    %v3799 = vsel %vm3798, 1, 0
    %v3800 = vadd.s32 %v3790, %v3794
    %v3801 = vadd.s32 %v3793, %v3799
    %vm3802 = vc.u32 %v3800, %v3796
    %v3803 = vsel %vm3802, 1, 0
    %v3804 = vadd.s32 %v3800, %v3796
    %v3805 = vadd.s32 %v3801, %v3803
    %v3806 = vadd.s32 %v3805, %v3795
    %v3807 = vadd.s32 %v3806, %v3797
    %v3808 = vmul.u32 %v3763, %v3754
    %v3809 = vadd.s32 %v3785, %v3804
    %vm3810 = vc.u32 %v3785, %v3804
    %v3811 = vadd.s32 %v3807, 1
    %v3812 = vsel %vm3810, %v3811, %v3807
    %v3813 = vadd.s32 %v3808, %v3812
    %v3814 = vadd.s32 %v3813, 536870912
    %v3815 = vshrl.u32 %v3814, 30
    %v3816 = vshll.u32 %v3815, 30
    %v3817 = vsub.s32 %v3813, %v3816
    %vm3818 = vcmp.lt.s32.totalorder %v3817, 0
    %v3819 = vsub.s32 0, %v3817
    %v3820 = vsel %vm3818, %v3819, %v3817
    %v3821 = vclz %v3820
    %v3822 = vsub.s32 %v3821, 2
    %vm3823 = vcmp.gt.s32.totalorder 0, %v3822
    %v3824 = vsel %vm3823, 0, %v3822
    %v3825 = vsub.s32 32, %v3824
    %v3826 = vshll.u32 %v3817, %v3824
    %v3827 = vshrl.u32 %v3809, %v3825
    %v3828 = vor.u32 %v3826, %v3827
    %v3829 = vsub.s32 4294967266, %v3824
    %v3830 = vadd.s32 %v3829, 127
    %v3831 = vshll.u32 %v3830, 23
    %v3832 = vor.u32 4788187, %v3831
    %v3833 = vand.u32 2147483647, %v3832
    %v3835 = vcvt.s32.f32 %v3828
    %v3836 = vmul.f32 %v3835, %v3833
    %v3837 = vxor.u32 %v3836, 2147483648
    %v3838 = vsel %vm3717, %v3837, %v3836
    %v3839 = vsub.s32 4, %v3815
    %v3840 = vsel %vm3717, %v3839, %v3815
    %v3841 = vsel %vm3716, %v160, %v3838
    %v3842 = vsel %vm3716, 0, %v3840
    %v3843 = vmul.f32 %v3841, %v3841
    %v3844 = vmul.f32 %v3843, -0.001358992
    %v3845 = vadd.f32 %v3844, 0.041655596
    %v3846 = vmul.f32 %v3843, %v3845
    %v3847 = vadd.f32 %v3846, -0.4999988
    %v3848 = vmul.f32 %v3843, %v3847
    %v3849 = vadd.f32 1.0, %v3848
    %v3850 = vmul.f32 %v3841, %v3841
    %v3851 = vmul.f32 %v3850, -0.00019511016
    %v3852 = vadd.f32 %v3851, 0.008332121
    %v3853 = vmul.f32 %v3850, %v3852
    %v3854 = vadd.f32 %v3853, -0.16666654
    %v3855 = vmul.f32 %v3850, %v3854
    %v3856 = vadd.f32 %v3855, 1.0
    %v3857 = vmul.f32 %v3856, %v3841
    %vm3858 = vweird.f32 %v160
    %v3859 = vadd.s32 %v3842, 3
    %v3860 = vand.u32 %v3859, 3
    %vm3861 = vcmp.lt.s32.totalorder %v3860, 2
    %vm3862 = vcmp.eq.s32.totalorder %v3860, 0
    %v3863 = vxor.u32 %v3857, 2147483648
    %v3864 = vsel %vm3862, %v3849, %v3863
    %vm3865 = vcmp.eq.s32.totalorder %v3860, 2
    %v3866 = vxor.u32 %v3849, 2147483648
    %v3867 = vsel %vm3865, %v3866, %v3857
    %v3868 = vsel %vm3861, %v3864, %v3867
    %v3869 = vsel %vm3858, nan, %v3868
    %v3870 = vand.u32 2147483647, %v161
    %vm3871 = vcmp.le.f32.partialorder %v3870, 0.7853982
    %vm3872 = vcmp.lt.s32.totalorder %v161, 0
    %v3873 = vand.u32 %v161, 2139095040
    %v3874 = vshrl.u32 %v3873, 23
    %v3875 = vsub.s32 %v3874, 127
    %v3876 = vand.u32 2147483647, %v161
    %v3877 = vand.u32 %v3876, 8388607
    %v3878 = vor.u32 %v3877, 8388608
    %v3879 = vsub.s32 0, %v3878
    %v3880 = vadd.s32 %v3875, 1
    %vm3881 = vcmp.gt.s32.totalorder %v3880, 0
    %v3882 = vsel %vm3881, %v3880, 0
    %v3883 = vshrl.u32 %v3882, 5
    %v3884 = vand.u32 %v3882, 31
    %v3885 = vsub.s32 32, %v3884
    %v3886 = vshrl.u32 683565275, %v3885
    %v3887 = vshll.u32 683565275, %v3884
    %v3888 = vshrl.u32 2475754826, %v3885
    %v3889 = vor.u32 %v3887, %v3888
    %v3890 = vshll.u32 2475754826, %v3884
    %v3891 = vshrl.u32 2131351028, %v3885
    %v3892 = vor.u32 %v3890, %v3891
    %v3893 = vshll.u32 2131351028, %v3884
    %v3894 = vshrl.u32 2102212464, %v3885
    %v3895 = vor.u32 %v3893, %v3894
    %v3896 = vshll.u32 2102212464, %v3884
    %v3897 = vshrl.u32 920167782, %v3885
    %v3898 = vor.u32 %v3896, %v3897
    %v3899 = vshll.u32 920167782, %v3884
    %v3900 = vshrl.u32 1326507024, %v3885
    %v3901 = vor.u32 %v3899, %v3900
    %vm3902 = vcmp.lt.s32.totalorder %v3883, 1
    %vm3903 = vcmp.lt.s32.totalorder %v3883, 2
    %vm3904 = vcmp.lt.s32.totalorder %v3883, 3
    %vm3905 = vcmp.lt.s32.totalorder %v3883, 4
    %v3906 = vsel %vm3902, %v3886, %v3889
    %v3907 = vsel %vm3905, %v3895, 2102212464
    %v3908 = vsel %vm3904, %v3892, %v3907
    %v3909 = vsel %vm3903, %v3906, %v3908
    %v3910 = vsel %vm3902, %v3889, %v3892
    %v3911 = vsel %vm3905, %v3898, 920167782
    %v3912 = vsel %vm3904, %v3895, %v3911
    %v3913 = vsel %vm3903, %v3910, %v3912
    %v3914 = vsel %vm3902, %v3892, %v3895
    %v3915 = vsel %vm3905, %v3901, 1326507024
    %v3916 = vsel %vm3904, %v3898, %v3915
    %v3917 = vsel %vm3903, %v3914, %v3916
    %v3918 = vshll.u32 %v3878, 8
    %v3919 = vand.u32 %v3918, 65535
    %v3920 = vshrl.u32 %v3918, 16
    %v3921 = vand.u32 %v3917, 65535
    %v3922 = vshrl.u32 %v3917, 16
    %v3923 = vmul.u32 %v3919, %v3921
    %v3924 = vmul.u32 %v3919, %v3922
    %v3925 = vmul.u32 %v3920, %v3921
    %v3926 = vmul.u32 %v3920, %v3922
    %v3927 = vshll.u32 %v3924, 16
    %v3928 = vshrl.u32 %v3924, 16
    %v3929 = vshll.u32 %v3925, 16
    %v3930 = vshrl.u32 %v3925, 16
    %vm3931 = vc.u32 %v3923, %v3927
    %v3932 = vsel %vm3931, 1, 0
    %v3933 = vadd.s32 %v3923, %v3927
    %v3934 = vadd.s32 %v3926, %v3932
    %vm3935 = vc.u32 %v3933, %v3929
    %v3936 = vsel %vm3935, 1, 0
    %v3937 = vadd.s32 %v3933, %v3929
    %v3938 = vadd.s32 %v3934, %v3936
    %v3939 = vadd.s32 %v3938, %v3928
    %v3940 = vadd.s32 %v3939, %v3930
    %v3941 = vand.u32 %v3918, 65535
    %v3942 = vshrl.u32 %v3918, 16
    %v3943 = vand.u32 %v3913, 65535
    %v3944 = vshrl.u32 %v3913, 16
    %v3945 = vmul.u32 %v3941, %v3943
    %v3946 = vmul.u32 %v3941, %v3944
    %v3947 = vmul.u32 %v3942, %v3943
    %v3948 = vmul.u32 %v3942, %v3944
    %v3949 = vshll.u32 %v3946, 16
    %v3950 = vshrl.u32 %v3946, 16
    %v3951 = vshll.u32 %v3947, 16
    %v3952 = vshrl.u32 %v3947, 16
    %vm3953 = vc.u32 %v3945, %v3949
    %v3954 = vsel %vm3953, 1, 0
    %v3955 = vadd.s32 %v3945, %v3949
    %v3956 = vadd.s32 %v3948, %v3954
    %vm3957 = vc.u32 %v3955, %v3951
    %v3958 = vsel %vm3957, 1, 0
    %v3959 = vadd.s32 %v3955, %v3951
    %v3960 = vadd.s32 %v3956, %v3958
    %v3961 = vadd.s32 %v3960, %v3950
    %v3962 = vadd.s32 %v3961, %v3952
    %v3963 = vmul.u32 %v3918, %v3909
    %v3964 = vadd.s32 %v3940, %v3959
    %vm3965 = vc.u32 %v3940, %v3959
    %v3966 = vadd.s32 %v3962, 1
    %v3967 = vsel %vm3965, %v3966, %v3962
    %v3968 = vadd.s32 %v3963, %v3967
    %v3969 = vadd.s32 %v3968, 536870912
    %v3970 = vshrl.u32 %v3969, 30
    %v3971 = vshll.u32 %v3970, 30
    %v3972 = vsub.s32 %v3968, %v3971
    %vm3973 = vcmp.lt.s32.totalorder %v3972, 0
    %v3974 = vsub.s32 0, %v3972
    %v3975 = vsel %vm3973, %v3974, %v3972
    %v3976 = vclz %v3975
    %v3977 = vsub.s32 %v3976, 2
    %vm3978 = vcmp.gt.s32.totalorder 0, %v3977
    %v3979 = vsel %vm3978, 0, %v3977
    %v3980 = vsub.s32 32, %v3979
    %v3981 = vshll.u32 %v3972, %v3979
    %v3982 = vshrl.u32 %v3964, %v3980
    %v3983 = vor.u32 %v3981, %v3982
    %v3984 = vsub.s32 4294967266, %v3979
    %v3985 = vadd.s32 %v3984, 127
    %v3986 = vshll.u32 %v3985, 23
    %v3987 = vor.u32 4788187, %v3986
    %v3988 = vand.u32 2147483647, %v3987
    %v3990 = vcvt.s32.f32 %v3983
    %v3991 = vmul.f32 %v3990, %v3988
    %v3992 = vxor.u32 %v3991, 2147483648
    %v3993 = vsel %vm3872, %v3992, %v3991
    %v3994 = vsub.s32 4, %v3970
    %v3995 = vsel %vm3872, %v3994, %v3970
    %v3996 = vsel %vm3871, %v161, %v3993
    %v3997 = vsel %vm3871, 0, %v3995
    %v3998 = vmul.f32 %v3996, %v3996
    %v3999 = vmul.f32 %v3998, -0.001358992
    %v4000 = vadd.f32 %v3999, 0.041655596
    %v4001 = vmul.f32 %v3998, %v4000
    %v4002 = vadd.f32 %v4001, -0.4999988
    %v4003 = vmul.f32 %v3998, %v4002
    %v4004 = vadd.f32 1.0, %v4003
    %v4005 = vmul.f32 %v3996, %v3996
    %v4006 = vmul.f32 %v4005, -0.00019511016
    %v4007 = vadd.f32 %v4006, 0.008332121
    %v4008 = vmul.f32 %v4005, %v4007
    %v4009 = vadd.f32 %v4008, -0.16666654
    %v4010 = vmul.f32 %v4005, %v4009
    %v4011 = vadd.f32 %v4010, 1.0
    %v4012 = vmul.f32 %v4011, %v3996
    %vm4013 = vweird.f32 %v161
    %v4014 = vadd.s32 %v3997, 3
    %v4015 = vand.u32 %v4014, 3
    %vm4016 = vcmp.lt.s32.totalorder %v4015, 2
    %vm4017 = vcmp.eq.s32.totalorder %v4015, 0
    %v4018 = vxor.u32 %v4012, 2147483648
    %v4019 = vsel %vm4017, %v4004, %v4018
    %vm4020 = vcmp.eq.s32.totalorder %v4015, 2
    %v4021 = vxor.u32 %v4004, 2147483648
    %v4022 = vsel %vm4020, %v4021, %v4012
    %v4023 = vsel %vm4016, %v4019, %v4022
    %v4024 = vsel %vm4013, nan, %v4023
    %v4025 = vand.u32 2147483647, %v162
    %vm4026 = vcmp.le.f32.partialorder %v4025, 0.7853982
    %vm4027 = vcmp.lt.s32.totalorder %v162, 0
    %v4028 = vand.u32 %v162, 2139095040
    %v4029 = vshrl.u32 %v4028, 23
    %v4030 = vsub.s32 %v4029, 127
    %v4031 = vand.u32 2147483647, %v162
    %v4032 = vand.u32 %v4031, 8388607
    %v4033 = vor.u32 %v4032, 8388608
    %v4034 = vsub.s32 0, %v4033
    %v4035 = vadd.s32 %v4030, 1
    %vm4036 = vcmp.gt.s32.totalorder %v4035, 0
    %v4037 = vsel %vm4036, %v4035, 0
    %v4038 = vshrl.u32 %v4037, 5
    %v4039 = vand.u32 %v4037, 31
    %v4040 = vsub.s32 32, %v4039
    %v4041 = vshrl.u32 683565275, %v4040
    %v4042 = vshll.u32 683565275, %v4039
    %v4043 = vshrl.u32 2475754826, %v4040
    %v4044 = vor.u32 %v4042, %v4043
    %v4045 = vshll.u32 2475754826, %v4039
    %v4046 = vshrl.u32 2131351028, %v4040
    %v4047 = vor.u32 %v4045, %v4046
    %v4048 = vshll.u32 2131351028, %v4039
    %v4049 = vshrl.u32 2102212464, %v4040
    %v4050 = vor.u32 %v4048, %v4049
    %v4051 = vshll.u32 2102212464, %v4039
    %v4052 = vshrl.u32 920167782, %v4040
    %v4053 = vor.u32 %v4051, %v4052
    %v4054 = vshll.u32 920167782, %v4039
    %v4055 = vshrl.u32 1326507024, %v4040
    %v4056 = vor.u32 %v4054, %v4055
    %vm4057 = vcmp.lt.s32.totalorder %v4038, 1
    %vm4058 = vcmp.lt.s32.totalorder %v4038, 2
    %vm4059 = vcmp.lt.s32.totalorder %v4038, 3
    %vm4060 = vcmp.lt.s32.totalorder %v4038, 4
    %v4061 = vsel %vm4057, %v4041, %v4044
    %v4062 = vsel %vm4060, %v4050, 2102212464
    %v4063 = vsel %vm4059, %v4047, %v4062
    %v4064 = vsel %vm4058, %v4061, %v4063
    %v4065 = vsel %vm4057, %v4044, %v4047
    %v4066 = vsel %vm4060, %v4053, 920167782
    %v4067 = vsel %vm4059, %v4050, %v4066
    %v4068 = vsel %vm4058, %v4065, %v4067
    %v4069 = vsel %vm4057, %v4047, %v4050
    %v4070 = vsel %vm4060, %v4056, 1326507024
    %v4071 = vsel %vm4059, %v4053, %v4070
    %v4072 = vsel %vm4058, %v4069, %v4071
    %v4073 = vshll.u32 %v4033, 8
    %v4074 = vand.u32 %v4073, 65535
    %v4075 = vshrl.u32 %v4073, 16
    %v4076 = vand.u32 %v4072, 65535
    %v4077 = vshrl.u32 %v4072, 16
    %v4078 = vmul.u32 %v4074, %v4076
    %v4079 = vmul.u32 %v4074, %v4077
    %v4080 = vmul.u32 %v4075, %v4076
    %v4081 = vmul.u32 %v4075, %v4077
    %v4082 = vshll.u32 %v4079, 16
    %v4083 = vshrl.u32 %v4079, 16
    %v4084 = vshll.u32 %v4080, 16
    %v4085 = vshrl.u32 %v4080, 16
    %vm4086 = vc.u32 %v4078, %v4082
    %v4087 = vsel %vm4086, 1, 0
    %v4088 = vadd.s32 %v4078, %v4082
    %v4089 = vadd.s32 %v4081, %v4087
    %vm4090 = vc.u32 %v4088, %v4084
    %v4091 = vsel %vm4090, 1, 0
    %v4092 = vadd.s32 %v4088, %v4084
    %v4093 = vadd.s32 %v4089, %v4091
    %v4094 = vadd.s32 %v4093, %v4083
    %v4095 = vadd.s32 %v4094, %v4085
    %v4096 = vand.u32 %v4073, 65535
    %v4097 = vshrl.u32 %v4073, 16
    %v4098 = vand.u32 %v4068, 65535
    %v4099 = vshrl.u32 %v4068, 16
    %v4100 = vmul.u32 %v4096, %v4098
    %v4101 = vmul.u32 %v4096, %v4099
    %v4102 = vmul.u32 %v4097, %v4098
    %v4103 = vmul.u32 %v4097, %v4099
    %v4104 = vshll.u32 %v4101, 16
    %v4105 = vshrl.u32 %v4101, 16
    %v4106 = vshll.u32 %v4102, 16
    %v4107 = vshrl.u32 %v4102, 16
    %vm4108 = vc.u32 %v4100, %v4104
    %v4109 = vsel %vm4108, 1, 0
    %v4110 = vadd.s32 %v4100, %v4104
    %v4111 = vadd.s32 %v4103, %v4109
    %vm4112 = vc.u32 %v4110, %v4106
    %v4113 = vsel %vm4112, 1, 0
    %v4114 = vadd.s32 %v4110, %v4106
    %v4115 = vadd.s32 %v4111, %v4113
    %v4116 = vadd.s32 %v4115, %v4105
    %v4117 = vadd.s32 %v4116, %v4107
    %v4118 = vmul.u32 %v4073, %v4064
    %v4119 = vadd.s32 %v4095, %v4114
    %vm4120 = vc.u32 %v4095, %v4114
    %v4121 = vadd.s32 %v4117, 1
    %v4122 = vsel %vm4120, %v4121, %v4117
    %v4123 = vadd.s32 %v4118, %v4122
    %v4124 = vadd.s32 %v4123, 536870912
    %v4125 = vshrl.u32 %v4124, 30
    %v4126 = vshll.u32 %v4125, 30
    %v4127 = vsub.s32 %v4123, %v4126
    %vm4128 = vcmp.lt.s32.totalorder %v4127, 0
    %v4129 = vsub.s32 0, %v4127
    %v4130 = vsel %vm4128, %v4129, %v4127
    %v4131 = vclz %v4130
    %v4132 = vsub.s32 %v4131, 2
    %vm4133 = vcmp.gt.s32.totalorder 0, %v4132
    %v4134 = vsel %vm4133, 0, %v4132
    %v4135 = vsub.s32 32, %v4134
    %v4136 = vshll.u32 %v4127, %v4134
    %v4137 = vshrl.u32 %v4119, %v4135
    %v4138 = vor.u32 %v4136, %v4137
    %v4139 = vsub.s32 4294967266, %v4134
    %v4140 = vadd.s32 %v4139, 127
    %v4141 = vshll.u32 %v4140, 23
    %v4142 = vor.u32 4788187, %v4141
    %v4143 = vand.u32 2147483647, %v4142
    %v4145 = vcvt.s32.f32 %v4138
    %v4146 = vmul.f32 %v4145, %v4143
    %v4147 = vxor.u32 %v4146, 2147483648
    %v4148 = vsel %vm4027, %v4147, %v4146
    %v4149 = vsub.s32 4, %v4125
    %v4150 = vsel %vm4027, %v4149, %v4125
    %v4151 = vsel %vm4026, %v162, %v4148
    %v4152 = vsel %vm4026, 0, %v4150
    %v4153 = vmul.f32 %v4151, %v4151
    %v4154 = vmul.f32 %v4153, -0.001358992
    %v4155 = vadd.f32 %v4154, 0.041655596
    %v4156 = vmul.f32 %v4153, %v4155
    %v4157 = vadd.f32 %v4156, -0.4999988
    %v4158 = vmul.f32 %v4153, %v4157
    %v4159 = vadd.f32 1.0, %v4158
    %v4160 = vmul.f32 %v4151, %v4151
    %v4161 = vmul.f32 %v4160, -0.00019511016
    %v4162 = vadd.f32 %v4161, 0.008332121
    %v4163 = vmul.f32 %v4160, %v4162
    %v4164 = vadd.f32 %v4163, -0.16666654
    %v4165 = vmul.f32 %v4160, %v4164
    %v4166 = vadd.f32 %v4165, 1.0
    %v4167 = vmul.f32 %v4166, %v4151
    %vm4168 = vweird.f32 %v162
    %v4169 = vadd.s32 %v4152, 3
    %v4170 = vand.u32 %v4169, 3
    %vm4171 = vcmp.lt.s32.totalorder %v4170, 2
    %vm4172 = vcmp.eq.s32.totalorder %v4170, 0
    %v4173 = vxor.u32 %v4167, 2147483648
    %v4174 = vsel %vm4172, %v4159, %v4173
    %vm4175 = vcmp.eq.s32.totalorder %v4170, 2
    %v4176 = vxor.u32 %v4159, 2147483648
    %v4177 = vsel %vm4175, %v4176, %v4167
    %v4178 = vsel %vm4171, %v4174, %v4177
    %v4179 = vsel %vm4168, nan, %v4178
    %4193 = vrot.lane.b32.xlu0 %v2319, 64
    %v4194 = vpop.permute.xlu0 %4193
    %4195 = vrot.lane.b32.xlu0 %v2474, 64
    %v4196 = vpop.permute.xlu0 %4195
    %4197 = vrot.lane.b32.xlu0 %v2629, 64
    %v4198 = vpop.permute.xlu0 %4197
    %4199 = vrot.lane.b32.xlu0 %v2784, 64
    %v4200 = vpop.permute.xlu0 %4199
    %4201 = vrot.lane.b32.xlu0 %v2939, 64
    %v4202 = vpop.permute.xlu0 %4201
    %4203 = vrot.lane.b32.xlu0 %v3094, 64
    %v4204 = vpop.permute.xlu0 %4203
    %4205 = vrot.lane.b32.xlu0 %v3249, 64
    %v4206 = vpop.permute.xlu0 %4205
    %4207 = vrot.lane.b32.xlu0 %v3404, 64
    %v4208 = vpop.permute.xlu0 %4207
    %4209 = vrot.lane.b32.xlu0 %v3559, 64
    %v4210 = vpop.permute.xlu0 %4209
    %4211 = vrot.lane.b32.xlu0 %v3714, 64
    %v4212 = vpop.permute.xlu0 %4211
    %4213 = vrot.lane.b32.xlu0 %v3869, 64
    %v4214 = vpop.permute.xlu0 %4213
    %4215 = vrot.lane.b32.xlu0 %v4024, 64
    %v4216 = vpop.permute.xlu0 %4215
    %4217 = vrot.lane.b32.xlu0 %v4179, 64
    %v4218 = vpop.permute.xlu0 %4217
    %vm4232 = vcmask 523264
    %v4233 = vsel %vm4232, %v316, %v4194
    %v4234 = vsel %vm4232, %v470, %v4196
    %v4235 = vsel %vm4232, %v624, %v4198
    %v4236 = vsel %vm4232, %v778, %v4200
    %v4237 = vsel %vm4232, %v932, %v4202
    %v4238 = vsel %vm4232, %v1086, %v4204
    %v4239 = vsel %vm4232, %v1240, %v4206
    %v4240 = vsel %vm4232, %v1394, %v4208
    %v4241 = vsel %vm4232, %v1548, %v4210
    %v4242 = vsel %vm4232, %v1702, %v4212
    %v4243 = vsel %vm4232, %v1856, %v4214
    %v4244 = vsel %vm4232, %v2010, %v4216
    %v4245 = vsel %vm4232, %v2164, %v4218
    %v4246 = vpack.c.bf16 %v4234, %v4233
    %v4247 = vpack.c.bf16 %v4236, %v4235
    %v4248 = vpack.c.bf16 %v4238, %v4237
    %v4249 = vpack.c.bf16 %v4240, %v4239
    %v4250 = vpack.c.bf16 %v4242, %v4241
    %v4251 = vpack.c.bf16 %v4244, %v4243
    %v4252 = vpack.c.bf16 %v4245, %v4245
    %v4253 = vld [vmem:[#allocation2] sm:$0xf]
    %v4254 = vld [vmem:[#allocation2 + $0x4] sm:$0xf]
    %v4255 = vld [vmem:[#allocation2 + $0x8] sm:$0xf]
    %v4256 = vld [vmem:[#allocation2 + $0xc] sm:$0xf]
    %v4257 = vld [vmem:[#allocation2 + $0x10] sm:$0xf]
    %v4258 = vld [vmem:[#allocation2 + $0x14] sm:$0xf]
    %v4259 = vld [vmem:[#allocation2 + $0x18] sm:$0xf]
    %v4260 = vld [vmem:[#allocation2 + $0x1c] sm:$0xf]
    %v4261 = vld [vmem:[#allocation2 + $0x20] sm:$0xf]
    %v4262 = vld [vmem:[#allocation2 + $0x24] sm:$0xf]
    %v4263 = vld [vmem:[#allocation2 + $0x28] sm:$0xf]
    %v4264 = vld [vmem:[#allocation2 + $0x2c] sm:$0xf]
    %v4265 = vld [vmem:[#allocation2 + $0x30] sm:$0xf]
    %v4266 = vld [vmem:[#allocation2 + $0x34] sm:$0xf]
    %v4267 = vld [vmem:[#allocation2 + $0x38] sm:$0xf]
    %v4268 = vld [vmem:[#allocation2 + $0x3c] sm:$0xf]
    %v4269 = vld [vmem:[%s3] sm:$0x1]
    %v4271 = vperm.slane %v4269, 0
    %v4289 = vunpack.c.l.b16 %v4253
    %v4290 = vunpack.c.l.b16 %v4254
    %v4291 = vunpack.c.l.b16 %v4255
    %v4292 = vunpack.c.l.b16 %v4256
    %v4293 = vunpack.c.l.b16 %v4257
    %v4294 = vunpack.c.l.b16 %v4258
    %v4295 = vunpack.c.l.b16 %v4259
    %v4296 = vunpack.c.l.b16 %v4260
    %v4297 = vunpack.c.l.b16 %v4261
    %v4298 = vunpack.c.l.b16 %v4262
    %v4299 = vunpack.c.l.b16 %v4263
    %v4300 = vunpack.c.l.b16 %v4264
    %v4301 = vunpack.c.l.b16 %v4265
    %v4302 = vunpack.c.l.b16 %v4266
    %v4303 = vunpack.c.l.b16 %v4267
    %v4304 = vunpack.c.l.b16 %v4268
    %v4305 = vpack.c.b16 %v4290, %v4289
    %v4306 = vpack.c.b16 %v4292, %v4291
    %v4307 = vpack.c.b16 %v4294, %v4293
    %v4308 = vpack.c.b16 %v4296, %v4295
    %v4309 = vpack.c.b16 %v4298, %v4297
    %v4310 = vpack.c.b16 %v4300, %v4299
    %v4311 = vpack.c.b16 %v4302, %v4301
    %v4312 = vpack.c.b16 %v4304, %v4303
    %4321 = vmatpush.bf16.msra.mxu0 %v4312
    %4322 = vmatpush.bf16.msra.mxu0 %v4311
    %4323 = vmatpush.bf16.msra.mxu0 %v4310
    %4324 = vmatpush.bf16.msra.mxu0 %v4309
    %4325 = vmatpush.bf16.msra.mxu0 %v4308
    %4326 = vmatpush.bf16.msra.mxu0 %v4307
    %4327 = vmatpush.bf16.msra.mxu0 %v4306
    %4328 = vmatpush.bf16.msra.mxu0 %v4305
    %4329 = vmatmul.bf16.gmra.mxu0 %v4246
    %v4330 = vpop.f32.mrf.mxu0
    %v4331 = vadd.f32 %v4271, %v4330
    %v4332 = vpop.f32.mrf.mxu0
    %v4333 = vadd.f32 %v4271, %v4332
    %4334 = vmatmul.bf16.gmra.mxu0 %v4247
    %v4335 = vpop.f32.mrf.mxu0
    %v4336 = vadd.f32 %v4271, %v4335
    %v4337 = vpop.f32.mrf.mxu0
    %v4338 = vadd.f32 %v4271, %v4337
    %4339 = vmatmul.bf16.gmra.mxu0 %v4248
    %v4340 = vpop.f32.mrf.mxu0
    %v4341 = vadd.f32 %v4271, %v4340
    %v4342 = vpop.f32.mrf.mxu0
    %v4343 = vadd.f32 %v4271, %v4342
    %4344 = vmatmul.bf16.gmra.mxu0 %v4249
    %v4345 = vpop.f32.mrf.mxu0
    %v4346 = vadd.f32 %v4271, %v4345
    %v4347 = vpop.f32.mrf.mxu0
    %v4348 = vadd.f32 %v4271, %v4347
    %4349 = vmatmul.bf16.gmra.mxu0 %v4250
    %v4350 = vpop.f32.mrf.mxu0
    %v4351 = vadd.f32 %v4271, %v4350
    %v4352 = vpop.f32.mrf.mxu0
    %v4353 = vadd.f32 %v4271, %v4352
    %4354 = vmatmul.bf16.gmra.mxu0 %v4251
    %v4355 = vpop.f32.mrf.mxu0
    %v4356 = vadd.f32 %v4271, %v4355
    %v4357 = vpop.f32.mrf.mxu0
    %v4358 = vadd.f32 %v4271, %v4357
    %4359 = vmatmul.bf16.gmra.mxu0 %v4252
    %v4360 = vpop.f32.mrf.mxu0
    %v4361 = vadd.f32 %v4271, %v4360
    %v4362 = vpop.f32.mrf.mxu0
    %4363 = vdwg.mxu0
    %v4364 = vtanh.pop %v4331
    %v4365 = vtanh.pop %v4333
    %v4366 = vtanh.pop %v4336
    %v4367 = vtanh.pop %v4338
    %v4368 = vtanh.pop %v4341
    %v4369 = vtanh.pop %v4343
    %v4370 = vtanh.pop %v4346
    %v4371 = vtanh.pop %v4348
    %v4372 = vtanh.pop %v4351
    %v4373 = vtanh.pop %v4353
    %v4374 = vtanh.pop %v4356
    %v4375 = vtanh.pop %v4358
    %v4376 = vtanh.pop %v4361
    %v4377 = vpack.c.bf16 %v4365, %v4364
    %v4378 = vpack.c.bf16 %v4367, %v4366
    %v4379 = vpack.c.bf16 %v4369, %v4368
    %v4380 = vpack.c.bf16 %v4371, %v4370
    %v4381 = vpack.c.bf16 %v4373, %v4372
    %v4382 = vpack.c.bf16 %v4375, %v4374
    %v4383 = vpack.c.bf16 %v4376, %v4376
    %s4384 = scalar_lea.vmem [#allocation2], 64
    %v4385 = vld [vmem:[%s4384] sm:$0xf]
    %v4386 = vld [vmem:[%s4384 + $0x4] sm:$0xf]
    %v4387 = vld [vmem:[%s4384 + $0x8] sm:$0xf]
    %v4388 = vld [vmem:[%s4384 + $0xc] sm:$0xf]
    %v4389 = vld [vmem:[%s4384 + $0x10] sm:$0xf]
    %v4390 = vld [vmem:[%s4384 + $0x14] sm:$0xf]
    %v4391 = vld [vmem:[%s4384 + $0x18] sm:$0xf]
    %v4392 = vld [vmem:[%s4384 + $0x1c] sm:$0xf]
    %v4393 = vld [vmem:[%s4384 + $0x20] sm:$0xf]
    %v4394 = vld [vmem:[%s4384 + $0x24] sm:$0xf]
    %v4395 = vld [vmem:[%s4384 + $0x28] sm:$0xf]
    %v4396 = vld [vmem:[%s4384 + $0x2c] sm:$0xf]
    %v4397 = vld [vmem:[%s4384 + $0x30] sm:$0xf]
    %v4398 = vld [vmem:[%s4384 + $0x34] sm:$0xf]
    %v4399 = vld [vmem:[%s4384 + $0x38] sm:$0xf]
    %v4400 = vld [vmem:[%s4384 + $0x3c] sm:$0xf]
    %s4401 = scalar_lea.vmem %s3, 1
    %v4402 = vld [vmem:[%s4401] sm:$0x1]
    %v4404 = vperm.slane %v4402, 0
    %v4422 = vunpack.c.l.b16 %v4385
    %v4423 = vunpack.c.l.b16 %v4386
    %v4424 = vunpack.c.l.b16 %v4387
    %v4425 = vunpack.c.l.b16 %v4388
    %v4426 = vunpack.c.l.b16 %v4389
    %v4427 = vunpack.c.l.b16 %v4390
    %v4428 = vunpack.c.l.b16 %v4391
    %v4429 = vunpack.c.l.b16 %v4392
    %v4430 = vunpack.c.l.b16 %v4393
    %v4431 = vunpack.c.l.b16 %v4394
    %v4432 = vunpack.c.l.b16 %v4395
    %v4433 = vunpack.c.l.b16 %v4396
    %v4434 = vunpack.c.l.b16 %v4397
    %v4435 = vunpack.c.l.b16 %v4398
    %v4436 = vunpack.c.l.b16 %v4399
    %v4437 = vunpack.c.l.b16 %v4400
    %v4438 = vpack.c.b16 %v4423, %v4422
    %v4439 = vpack.c.b16 %v4425, %v4424
    %v4440 = vpack.c.b16 %v4427, %v4426
    %v4441 = vpack.c.b16 %v4429, %v4428
    %v4442 = vpack.c.b16 %v4431, %v4430
    %v4443 = vpack.c.b16 %v4433, %v4432
    %v4444 = vpack.c.b16 %v4435, %v4434
    %v4445 = vpack.c.b16 %v4437, %v4436
    %4454 = vmatpush.bf16.msra.mxu0 %v4445
    %4455 = vmatpush.bf16.msra.mxu0 %v4444
    %4456 = vmatpush.bf16.msra.mxu0 %v4443
    %4457 = vmatpush.bf16.msra.mxu0 %v4442
    %4458 = vmatpush.bf16.msra.mxu0 %v4441
    %4459 = vmatpush.bf16.msra.mxu0 %v4440
    %4460 = vmatpush.bf16.msra.mxu0 %v4439
    %4461 = vmatpush.bf16.msra.mxu0 %v4438
    %4462 = vmatmul.bf16.gmra.mxu0 %v4377
    %v4463 = vpop.f32.mrf.mxu0
    %v4464 = vadd.f32 %v4404, %v4463
    %v4465 = vpop.f32.mrf.mxu0
    %v4466 = vadd.f32 %v4404, %v4465
    %4467 = vmatmul.bf16.gmra.mxu0 %v4378
    %v4468 = vpop.f32.mrf.mxu0
    %v4469 = vadd.f32 %v4404, %v4468
    %v4470 = vpop.f32.mrf.mxu0
    %v4471 = vadd.f32 %v4404, %v4470
    %4472 = vmatmul.bf16.gmra.mxu0 %v4379
    %v4473 = vpop.f32.mrf.mxu0
    %v4474 = vadd.f32 %v4404, %v4473
    %v4475 = vpop.f32.mrf.mxu0
    %v4476 = vadd.f32 %v4404, %v4475
    %4477 = vmatmul.bf16.gmra.mxu0 %v4380
    %v4478 = vpop.f32.mrf.mxu0
    %v4479 = vadd.f32 %v4404, %v4478
    %v4480 = vpop.f32.mrf.mxu0
    %v4481 = vadd.f32 %v4404, %v4480
    %4482 = vmatmul.bf16.gmra.mxu0 %v4381
    %v4483 = vpop.f32.mrf.mxu0
    %v4484 = vadd.f32 %v4404, %v4483
    %v4485 = vpop.f32.mrf.mxu0
    %v4486 = vadd.f32 %v4404, %v4485
    %4487 = vmatmul.bf16.gmra.mxu0 %v4382
    %v4488 = vpop.f32.mrf.mxu0
    %v4489 = vadd.f32 %v4404, %v4488
    %v4490 = vpop.f32.mrf.mxu0
    %v4491 = vadd.f32 %v4404, %v4490
    %4492 = vmatmul.bf16.gmra.mxu0 %v4383
    %v4493 = vpop.f32.mrf.mxu0
    %v4494 = vadd.f32 %v4404, %v4493
    %v4495 = vpop.f32.mrf.mxu0
    %4496 = vdwg.mxu0
    %v4497 = vtanh.pop %v4464
    %v4498 = vtanh.pop %v4466
    %v4499 = vtanh.pop %v4469
    %v4500 = vtanh.pop %v4471
    %v4501 = vtanh.pop %v4474
    %v4502 = vtanh.pop %v4476
    %v4503 = vtanh.pop %v4479
    %v4504 = vtanh.pop %v4481
    %v4505 = vtanh.pop %v4484
    %v4506 = vtanh.pop %v4486
    %v4507 = vtanh.pop %v4489
    %v4508 = vtanh.pop %v4491
    %v4509 = vtanh.pop %v4494
    %v4510 = vpack.c.bf16 %v4498, %v4497
    %v4511 = vpack.c.bf16 %v4500, %v4499
    %v4512 = vpack.c.bf16 %v4502, %v4501
    %v4513 = vpack.c.bf16 %v4504, %v4503
    %v4514 = vpack.c.bf16 %v4506, %v4505
    %v4515 = vpack.c.bf16 %v4508, %v4507
    %v4516 = vpack.c.bf16 %v4509, %v4509
    %s4517 = scalar_lea.vmem [#allocation2], 128
    %v4518 = vld [vmem:[%s4517] sm:$0xf]
    %v4519 = vld [vmem:[%s4517 + $0x4] sm:$0xf]
    %v4520 = vld [vmem:[%s4517 + $0x8] sm:$0xf]
    %v4521 = vld [vmem:[%s4517 + $0xc] sm:$0xf]
    %v4522 = vld [vmem:[%s4517 + $0x10] sm:$0xf]
    %v4523 = vld [vmem:[%s4517 + $0x14] sm:$0xf]
    %v4524 = vld [vmem:[%s4517 + $0x18] sm:$0xf]
    %v4525 = vld [vmem:[%s4517 + $0x1c] sm:$0xf]
    %v4526 = vld [vmem:[%s4517 + $0x20] sm:$0xf]
    %v4527 = vld [vmem:[%s4517 + $0x24] sm:$0xf]
    %v4528 = vld [vmem:[%s4517 + $0x28] sm:$0xf]
    %v4529 = vld [vmem:[%s4517 + $0x2c] sm:$0xf]
    %v4530 = vld [vmem:[%s4517 + $0x30] sm:$0xf]
    %v4531 = vld [vmem:[%s4517 + $0x34] sm:$0xf]
    %v4532 = vld [vmem:[%s4517 + $0x38] sm:$0xf]
    %v4533 = vld [vmem:[%s4517 + $0x3c] sm:$0xf]
    %s4534 = scalar_lea.vmem %s3, 2
    %v4535 = vld [vmem:[%s4534] sm:$0x1]
    %v4537 = vperm.slane %v4535, 0
    %v4555 = vunpack.c.l.b16 %v4518
    %v4556 = vunpack.c.l.b16 %v4519
    %v4557 = vunpack.c.l.b16 %v4520
    %v4558 = vunpack.c.l.b16 %v4521
    %v4559 = vunpack.c.l.b16 %v4522
    %v4560 = vunpack.c.l.b16 %v4523
    %v4561 = vunpack.c.l.b16 %v4524
    %v4562 = vunpack.c.l.b16 %v4525
    %v4563 = vunpack.c.l.b16 %v4526
    %v4564 = vunpack.c.l.b16 %v4527
    %v4565 = vunpack.c.l.b16 %v4528
    %v4566 = vunpack.c.l.b16 %v4529
    %v4567 = vunpack.c.l.b16 %v4530
    %v4568 = vunpack.c.l.b16 %v4531
    %v4569 = vunpack.c.l.b16 %v4532
    %v4570 = vunpack.c.l.b16 %v4533
    %v4571 = vpack.c.b16 %v4556, %v4555
    %v4572 = vpack.c.b16 %v4558, %v4557
    %v4573 = vpack.c.b16 %v4560, %v4559
    %v4574 = vpack.c.b16 %v4562, %v4561
    %v4575 = vpack.c.b16 %v4564, %v4563
    %v4576 = vpack.c.b16 %v4566, %v4565
    %v4577 = vpack.c.b16 %v4568, %v4567
    %v4578 = vpack.c.b16 %v4570, %v4569
    %4587 = vmatpush.bf16.msra.mxu0 %v4578
    %4588 = vmatpush.bf16.msra.mxu0 %v4577
    %4589 = vmatpush.bf16.msra.mxu0 %v4576
    %4590 = vmatpush.bf16.msra.mxu0 %v4575
    %4591 = vmatpush.bf16.msra.mxu0 %v4574
    %4592 = vmatpush.bf16.msra.mxu0 %v4573
    %4593 = vmatpush.bf16.msra.mxu0 %v4572
    %4594 = vmatpush.bf16.msra.mxu0 %v4571
    %4595 = vmatmul.bf16.gmra.mxu0 %v4510
    %v4596 = vpop.f32.mrf.mxu0
    %v4597 = vadd.f32 %v4537, %v4596
    %v4598 = vpop.f32.mrf.mxu0
    %v4599 = vadd.f32 %v4537, %v4598
    %4600 = vmatmul.bf16.gmra.mxu0 %v4511
    %v4601 = vpop.f32.mrf.mxu0
    %v4602 = vadd.f32 %v4537, %v4601
    %v4603 = vpop.f32.mrf.mxu0
    %v4604 = vadd.f32 %v4537, %v4603
    %4605 = vmatmul.bf16.gmra.mxu0 %v4512
    %v4606 = vpop.f32.mrf.mxu0
    %v4607 = vadd.f32 %v4537, %v4606
    %v4608 = vpop.f32.mrf.mxu0
    %v4609 = vadd.f32 %v4537, %v4608
    %4610 = vmatmul.bf16.gmra.mxu0 %v4513
    %v4611 = vpop.f32.mrf.mxu0
    %v4612 = vadd.f32 %v4537, %v4611
    %v4613 = vpop.f32.mrf.mxu0
    %v4614 = vadd.f32 %v4537, %v4613
    %4615 = vmatmul.bf16.gmra.mxu0 %v4514
    %v4616 = vpop.f32.mrf.mxu0
    %v4617 = vadd.f32 %v4537, %v4616
    %v4618 = vpop.f32.mrf.mxu0
    %v4619 = vadd.f32 %v4537, %v4618
    %4620 = vmatmul.bf16.gmra.mxu0 %v4515
    %v4621 = vpop.f32.mrf.mxu0
    %v4622 = vadd.f32 %v4537, %v4621
    %v4623 = vpop.f32.mrf.mxu0
    %v4624 = vadd.f32 %v4537, %v4623
    %4625 = vmatmul.bf16.gmra.mxu0 %v4516
    %v4626 = vpop.f32.mrf.mxu0
    %v4627 = vadd.f32 %v4537, %v4626
    %v4628 = vpop.f32.mrf.mxu0
    %4629 = vdwg.mxu0
    %v4630 = vtanh.pop %v4597
    %v4631 = vtanh.pop %v4599
    %v4632 = vtanh.pop %v4602
    %v4633 = vtanh.pop %v4604
    %v4634 = vtanh.pop %v4607
    %v4635 = vtanh.pop %v4609
    %v4636 = vtanh.pop %v4612
    %v4637 = vtanh.pop %v4614
    %v4638 = vtanh.pop %v4617
    %v4639 = vtanh.pop %v4619
    %v4640 = vtanh.pop %v4622
    %v4641 = vtanh.pop %v4624
    %v4642 = vtanh.pop %v4627
    %v4643 = vpack.c.bf16 %v4631, %v4630
    %v4644 = vpack.c.bf16 %v4633, %v4632
    %v4645 = vpack.c.bf16 %v4635, %v4634
    %v4646 = vpack.c.bf16 %v4637, %v4636
    %v4647 = vpack.c.bf16 %v4639, %v4638
    %v4648 = vpack.c.bf16 %v4641, %v4640
    %v4649 = vpack.c.bf16 %v4642, %v4642
    %v4650 = vld [vmem:[%s4] sm:$0xf]
    %v4651 = vld [vmem:[%s4 + $0x4] sm:$0xf]
    %v4652 = vld [vmem:[%s4 + $0x8] sm:$0xf]
    %v4653 = vld [vmem:[%s4 + $0xc] sm:$0xf]
    %v4654 = vld [vmem:[%s4 + $0x10] sm:$0xf]
    %v4655 = vld [vmem:[%s4 + $0x14] sm:$0xf]
    %v4656 = vld [vmem:[%s4 + $0x18] sm:$0xf]
    %v4657 = vld [vmem:[%s4 + $0x1c] sm:$0xf]
    %v4658 = vld [vmem:[%s4 + $0x20] sm:$0xf]
    %v4659 = vld [vmem:[%s4 + $0x24] sm:$0xf]
    %v4660 = vld [vmem:[%s4 + $0x28] sm:$0xf]
    %v4661 = vld [vmem:[%s4 + $0x2c] sm:$0xf]
    %v4662 = vld [vmem:[%s4 + $0x30] sm:$0xf]
    %v4663 = vld [vmem:[%s4 + $0x34] sm:$0xf]
    %v4664 = vld [vmem:[%s4 + $0x38] sm:$0xf]
    %v4665 = vld [vmem:[%s4 + $0x3c] sm:$0xf]
    %v4666 = vld [vmem:[%s5] sm:$0x1]
    %v4668 = vperm.slane %v4666, 0
    %v4686 = vunpack.c.l.b16 %v4650
    %v4687 = vunpack.c.l.b16 %v4651
    %v4688 = vunpack.c.l.b16 %v4652
    %v4689 = vunpack.c.l.b16 %v4653
    %v4690 = vunpack.c.l.b16 %v4654
    %v4691 = vunpack.c.l.b16 %v4655
    %v4692 = vunpack.c.l.b16 %v4656
    %v4693 = vunpack.c.l.b16 %v4657
    %v4694 = vunpack.c.l.b16 %v4658
    %v4695 = vunpack.c.l.b16 %v4659
    %v4696 = vunpack.c.l.b16 %v4660
    %v4697 = vunpack.c.l.b16 %v4661
    %v4698 = vunpack.c.l.b16 %v4662
    %v4699 = vunpack.c.l.b16 %v4663
    %v4700 = vunpack.c.l.b16 %v4664
    %v4701 = vunpack.c.l.b16 %v4665
    %v4702 = vpack.c.b16 %v4687, %v4686
    %v4703 = vpack.c.b16 %v4689, %v4688
    %v4704 = vpack.c.b16 %v4691, %v4690
    %v4705 = vpack.c.b16 %v4693, %v4692
    %v4706 = vpack.c.b16 %v4695, %v4694
    %v4707 = vpack.c.b16 %v4697, %v4696
    %v4708 = vpack.c.b16 %v4699, %v4698
    %v4709 = vpack.c.b16 %v4701, %v4700
    %4718 = vmatpush.bf16.msra.mxu0 %v4709
    %4719 = vmatpush.bf16.msra.mxu0 %v4708
    %4720 = vmatpush.bf16.msra.mxu0 %v4707
    %4721 = vmatpush.bf16.msra.mxu0 %v4706
    %4722 = vmatpush.bf16.msra.mxu0 %v4705
    %4723 = vmatpush.bf16.msra.mxu0 %v4704
    %4724 = vmatpush.bf16.msra.mxu0 %v4703
    %4725 = vmatpush.bf16.msra.mxu0 %v4702
    %4726 = vmatmul.bf16.gmra.mxu0 %v4643
    %v4727 = vpop.f32.mrf.mxu0
    %v4728 = vadd.f32 %v4668, %v4727
    %v4729 = vpop.f32.mrf.mxu0
    %v4730 = vadd.f32 %v4668, %v4729
    %4731 = vmatmul.bf16.gmra.mxu0 %v4644
    %v4732 = vpop.f32.mrf.mxu0
    %v4733 = vadd.f32 %v4668, %v4732
    %v4734 = vpop.f32.mrf.mxu0
    %v4735 = vadd.f32 %v4668, %v4734
    %4736 = vmatmul.bf16.gmra.mxu0 %v4645
    %v4737 = vpop.f32.mrf.mxu0
    %v4738 = vadd.f32 %v4668, %v4737
    %v4739 = vpop.f32.mrf.mxu0
    %v4740 = vadd.f32 %v4668, %v4739
    %4741 = vmatmul.bf16.gmra.mxu0 %v4646
    %v4742 = vpop.f32.mrf.mxu0
    %v4743 = vadd.f32 %v4668, %v4742
    %v4744 = vpop.f32.mrf.mxu0
    %v4745 = vadd.f32 %v4668, %v4744
    %4746 = vmatmul.bf16.gmra.mxu0 %v4647
    %v4747 = vpop.f32.mrf.mxu0
    %v4748 = vadd.f32 %v4668, %v4747
    %v4749 = vpop.f32.mrf.mxu0
    %v4750 = vadd.f32 %v4668, %v4749
    %4751 = vmatmul.bf16.gmra.mxu0 %v4648
    %v4752 = vpop.f32.mrf.mxu0
    %v4753 = vadd.f32 %v4668, %v4752
    %v4754 = vpop.f32.mrf.mxu0
    %v4755 = vadd.f32 %v4668, %v4754
    %4756 = vmatmul.bf16.gmra.mxu0 %v4649
    %v4757 = vpop.f32.mrf.mxu0
    %v4758 = vadd.f32 %v4668, %v4757
    %v4759 = vpop.f32.mrf.mxu0
    %4760 = vdwg.mxu0
    %4761 = vst [vmem:[#allocation5] sm:$0xff] %v4728
    %4762 = vst [vmem:[#allocation5 + $0x8] sm:$0xff] %v4730
    %4763 = vst [vmem:[#allocation5 + $0x10] sm:$0xff] %v4733
    %4764 = vst [vmem:[#allocation5 + $0x18] sm:$0xff] %v4735
    %4765 = vst [vmem:[#allocation5 + $0x20] sm:$0xff] %v4738
    %4766 = vst [vmem:[#allocation5 + $0x28] sm:$0xff] %v4740
    %4767 = vst [vmem:[#allocation5 + $0x30] sm:$0xff] %v4743
    %4768 = vst [vmem:[#allocation5 + $0x38] sm:$0xff] %v4745
    %4769 = vst [vmem:[#allocation5 + $0x40] sm:$0xff] %v4748
    %4770 = vst [vmem:[#allocation5 + $0x48] sm:$0xff] %v4750
    %4771 = vst [vmem:[#allocation5 + $0x50] sm:$0xff] %v4753
    %4772 = vst [vmem:[#allocation5 + $0x58] sm:$0xff] %v4755
    %4773 = vst [vmem:[#allocation5 + $0x60] sm:$0xff] %v4758
    // Predicated region
    $region30: #{tpu_custom_call.1} parent=1 // pred_check
      _
    $region31: #{tpu_custom_call.1} parent=1 // pred_check_branch
      %4775 = sbr.rel (0) target = $region33
    $region32: #{tpu_custom_call.1} parent=1 // pred_region
      %4777 = vsyncadd [#allocation4], 0
      %s4778 = sshll.u32 [#allocation5], 4
      %s4779 = int_to_ptr.vmem [resolvable:$true] %s4778
      %s4780 = sshll.u32 %s6, 4
      %s4781 = int_to_ptr.hbm [resolvable:$true] %s4780
      %4786 = dma.vmem_to_hbm [thread:$0]  %s4779, 1664, %s4781, [#allocation4], 128, 128, 8
    $region33: #{tpu_custom_call.1} parent=1 // pred_fallthru
      _
    // Predicated region
    $region34: #{tpu_custom_call.1} parent=1 // pred_check
      _
    $region35: #{tpu_custom_call.1} parent=1 // pred_check_branch
      %4788 = sbr.rel (0) target = $region37
    $region36: #{tpu_custom_call.1} parent=1 // pred_region
      %4790 = dma.done [#allocation4], 1664
    $region37: #{tpu_custom_call.1} parent=1 // pred_fallthru
      _
    %4791 = vsyncpa [#allocation3], 1
    %4792 = vsyncpa [#allocation4], 1

// kernel: tpu_custom_call.1
$region0: #{tpu_custom_call.1}
  #allocation0 [shape = 'u32[]', space=smem, size = 0x4, offset = 0x4, fixed_abs, tag = 'smem constant byte address 0x4 - core index']
  #allocation1 [shape = 'u32[72,128]{1,0:T(1,128)}', space=vmem, size = 0x9000, scoped, tag = 'internal scratch']
  %s0 = inlined_call_operand.hbm [shape: f32[104,128], index: 0, kind: input, shape index: {}]
  %s1 = inlined_call_operand.hbm [shape: f32[8,64], index: 1, kind: input, shape index: {}]
  %s2 = inlined_call_operand.hbm [shape: bf16[3,128,128], index: 2, kind: input, shape index: {}]
  %s3 = inlined_call_operand.hbm [shape: f32[3,1,128], index: 3, kind: input, shape index: {}]
  %s4 = inlined_call_operand.hbm [shape: bf16[128,128], index: 4, kind: input, shape index: {}]
  %s5 = inlined_call_operand.vmem [shape: f32[1,128], index: 5, kind: input, shape index: {}]
  %s6 = inlined_call_operand.hbm [shape: f32[104,128], index: 6, kind: output, shape index: {}]
  %s7 = sld [smem:[#allocation0]]
  $region54: #{tpu_custom_call.1} parent=0
    _
  %s9 = ssub.s32 1, %s7
  %s10 = scalar_select 0, %s9, %s7
  $region1: #{tpu_custom_call.1} parent=0
    #allocation2 [shape = 'u8[53248]{0}', space=vmem, size = 0xd000, scoped, tag = 'input window, operand 0, single buffered']
    #allocation3 [shape = 's32[1]{0}', space=sflag, size = 0x4, scoped, tag = 'scoped memory for tpu_custom_call.1']
    #allocation4 [shape = 's32[1]{0}', space=sflag, size = 0x4, scoped, tag = 'scoped memory for tpu_custom_call.1']
    #allocation5 [shape = 'u8[4096]{0}', space=vmem, size = 0x1000, scoped, tag = 'input window, operand 1, single buffered']
    #allocation6 [shape = 's32[1]{0}', space=sflag, size = 0x4, scoped, tag = 'scoped memory for tpu_custom_call.1']
    #allocation7 [shape = 'u8[98304]{0}', space=vmem, size = 0x18000, scoped, tag = 'input window, operand 2, single buffered']
    #allocation8 [shape = 'u8[1536]{0}', space=vmem, size = 0x800, scoped, tag = 'input window, operand 3, single buffered']
    #allocation9 [shape = 's32[1]{0}', space=sflag, size = 0x4, scoped, tag = 'scoped memory for tpu_custom_call.1']
    #allocation10 [shape = 'u8[32768]{0}', space=vmem, size = 0x8000, scoped, tag = 'input window, operand 4, single buffered']
    #allocation11 [shape = 'u8[53248]{0}', space=vmem, size = 0xd000, scoped, tag = 'output window, operand 0, single buffered']
    %11 = vsyncpa [#allocation3], 0
    %12 = vsyncpa [#allocation6], 0
    %13 = vsyncpa [#allocation9], 0
    %14 = vsyncpa [#allocation4], 0
    // Predicated region
    $region2: #{tpu_custom_call.1} parent=1 // pred_check
      _
    $region3: #{tpu_custom_call.1} parent=1 // pred_check_branch
      %16 = sbr.rel (0) target = $region5
    $region4: #{tpu_custom_call.1} parent=1 // pred_region
      %18 = vsyncadd [#allocation3], 0
      %s19 = sshll.u32 %s0, 4
      %s20 = int_to_ptr.hbm [resolvable:$true] %s19
      %s21 = sshll.u32 [#allocation2], 4
      %s22 = int_to_ptr.vmem [resolvable:$true] %s21
      %27 = dma.hbm_to_vmem [thread:$0]  %s20, 1664, %s22, [#allocation3], 128, 128, 8
    $region5: #{tpu_custom_call.1} parent=1 // pred_fallthru
      _
    // Predicated region
    $region6: #{tpu_custom_call.1} parent=1 // pred_check
      _
    $region7: #{tpu_custom_call.1} parent=1 // pred_check_branch
      %29 = sbr.rel (0) target = $region9
    $region8: #{tpu_custom_call.1} parent=1 // pred_region
      %31 = vsyncadd [#allocation6], 0
      %s33 = sshll.u32 %s1, 4
      %s34 = int_to_ptr.hbm [resolvable:$true] %s33
      %s35 = sshll.u32 [#allocation5], 4
      %s36 = int_to_ptr.vmem [resolvable:$true] %s35
      %38 = dma.hbm_to_vmem [thread:$0]  %s34, 128, %s36, [#allocation6]
    $region9: #{tpu_custom_call.1} parent=1 // pred_fallthru
      _
    // Predicated region
    $region10: #{tpu_custom_call.1} parent=1 // pred_check
      _
    $region11: #{tpu_custom_call.1} parent=1 // pred_check_branch
      %40 = sbr.rel (0) target = $region13
    $region12: #{tpu_custom_call.1} parent=1 // pred_region
      %42 = vsyncadd [#allocation6], 0
      %s43 = sshll.u32 %s2, 4
      %s44 = int_to_ptr.hbm [resolvable:$true] %s43
      %s45 = sshll.u32 [#allocation7], 4
      %s46 = int_to_ptr.vmem [resolvable:$true] %s45
      %51 = dma.hbm_to_vmem [thread:$0]  %s44, 3072, %s46, [#allocation6], 64, 64, 4
    $region13: #{tpu_custom_call.1} parent=1 // pred_fallthru
      _
    // Predicated region
    $region14: #{tpu_custom_call.1} parent=1 // pred_check
      _
    $region15: #{tpu_custom_call.1} parent=1 // pred_check_branch
      %53 = sbr.rel (0) target = $region17
    $region16: #{tpu_custom_call.1} parent=1 // pred_region
      %55 = vsyncadd [#allocation9], 0
      %s56 = sshll.u32 %s3, 4
      %s57 = int_to_ptr.hbm [resolvable:$true] %s56
      %s58 = sshll.u32 [#allocation8], 4
      %s59 = int_to_ptr.vmem [resolvable:$true] %s58
      %64 = dma.hbm_to_vmem [thread:$0]  %s57, 48, %s59, [#allocation9], 16, 16, 1
    $region17: #{tpu_custom_call.1} parent=1 // pred_fallthru
      _
    // Predicated region
    $region18: #{tpu_custom_call.1} parent=1 // pred_check
      _
    $region19: #{tpu_custom_call.1} parent=1 // pred_check_branch
      %66 = sbr.rel (0) target = $region21
    $region20: #{tpu_custom_call.1} parent=1 // pred_region
      %68 = vsyncadd [#allocation9], 0
      %s69 = sshll.u32 %s4, 4
      %s70 = int_to_ptr.hbm [resolvable:$true] %s69
      %s71 = sshll.u32 [#allocation10], 4
      %s72 = int_to_ptr.vmem [resolvable:$true] %s71
      %77 = dma.hbm_to_vmem [thread:$0]  %s70, 1024, %s72, [#allocation9], 64, 64, 4
    $region21: #{tpu_custom_call.1} parent=1 // pred_fallthru
      _
    // Predicated region
    $region22: #{tpu_custom_call.1} parent=1 // pred_check
      _
    $region23: #{tpu_custom_call.1} parent=1 // pred_check_branch
      %79 = sbr.rel (0) target = $region25
    $region24: #{tpu_custom_call.1} parent=1 // pred_region
      _
    $region25: #{tpu_custom_call.1} parent=1 // pred_fallthru
      _
    // Predicated region
    $region26: #{tpu_custom_call.1} parent=1 // pred_check
      _
    $region27: #{tpu_custom_call.1} parent=1 // pred_check_branch
      %81 = sbr.rel (0) target = $region29
    $region28: #{tpu_custom_call.1} parent=1 // pred_region
      %83 = dma.done [#allocation3], 1664
    $region29: #{tpu_custom_call.1} parent=1 // pred_fallthru
      _
    // Predicated region
    $region30: #{tpu_custom_call.1} parent=1 // pred_check
      _
    $region31: #{tpu_custom_call.1} parent=1 // pred_check_branch
      %85 = sbr.rel (0) target = $region33
    $region32: #{tpu_custom_call.1} parent=1 // pred_region
      %87 = dma.done [#allocation6], 128
    $region33: #{tpu_custom_call.1} parent=1 // pred_fallthru
      _
    // Predicated region
    $region34: #{tpu_custom_call.1} parent=1 // pred_check
      _
    $region35: #{tpu_custom_call.1} parent=1 // pred_check_branch
      %89 = sbr.rel (0) target = $region37
    $region36: #{tpu_custom_call.1} parent=1 // pred_region
      %91 = dma.done [#allocation6], 3072
    $region37: #{tpu_custom_call.1} parent=1 // pred_fallthru
      _
    // Predicated region
    $region38: #{tpu_custom_call.1} parent=1 // pred_check
      _
    $region39: #{tpu_custom_call.1} parent=1 // pred_check_branch
      %93 = sbr.rel (0) target = $region41
    $region40: #{tpu_custom_call.1} parent=1 // pred_region
      %95 = dma.done [#allocation9], 48
    $region41: #{tpu_custom_call.1} parent=1 // pred_fallthru
      _
    // Predicated region
    $region42: #{tpu_custom_call.1} parent=1 // pred_check
      _
    $region43: #{tpu_custom_call.1} parent=1 // pred_check_branch
      %97 = sbr.rel (0) target = $region45
    $region44: #{tpu_custom_call.1} parent=1 // pred_region
      %99 = dma.done [#allocation9], 1024
    $region45: #{tpu_custom_call.1} parent=1 // pred_fallthru
      _
    %v100 = vld [vmem:[#allocation2] sm:$0xff]
    %v101 = vld [vmem:[#allocation2 + $0x8] sm:$0xff]
    %v102 = vld [vmem:[#allocation2 + $0x10] sm:$0xff]
    %v103 = vld [vmem:[#allocation2 + $0x18] sm:$0xff]
    %v104 = vld [vmem:[#allocation2 + $0x20] sm:$0xff]
    %v105 = vld [vmem:[#allocation2 + $0x28] sm:$0xff]
    %v106 = vld [vmem:[#allocation2 + $0x30] sm:$0xff]
    %v107 = vld [vmem:[#allocation2 + $0x38] sm:$0xff]
    %v108 = vld [vmem:[#allocation2 + $0x40] sm:$0xff]
    %v109 = vld [vmem:[#allocation2 + $0x48] sm:$0xff]
    %v110 = vld [vmem:[#allocation2 + $0x50] sm:$0xff]
    %v111 = vld [vmem:[#allocation2 + $0x58] sm:$0xff]
    %v112 = vld [vmem:[#allocation2 + $0x60] sm:$0xff]
    %v113 = vpack.c.bf16 %v101, %v100
    %v114 = vpack.c.bf16 %v103, %v102
    %v115 = vpack.c.bf16 %v105, %v104
    %v116 = vpack.c.bf16 %v107, %v106
    %v117 = vpack.c.bf16 %v109, %v108
    %v118 = vpack.c.bf16 %v111, %v110
    %v119 = vpack.c.bf16 %v112, %v112
    %v120 = vld [vmem:[#allocation7] sm:$0xf]
    %v121 = vld [vmem:[#allocation7 + $0x4] sm:$0xf]
    %v122 = vld [vmem:[#allocation7 + $0x8] sm:$0xf]
    %v123 = vld [vmem:[#allocation7 + $0xc] sm:$0xf]
    %v124 = vld [vmem:[#allocation7 + $0x10] sm:$0xf]
    %v125 = vld [vmem:[#allocation7 + $0x14] sm:$0xf]
    %v126 = vld [vmem:[#allocation7 + $0x18] sm:$0xf]
    %v127 = vld [vmem:[#allocation7 + $0x1c] sm:$0xf]
    %v128 = vld [vmem:[#allocation7 + $0x20] sm:$0xf]
    %v129 = vld [vmem:[#allocation7 + $0x24] sm:$0xf]
    %v130 = vld [vmem:[#allocation7 + $0x28] sm:$0xf]
    %v131 = vld [vmem:[#allocation7 + $0x2c] sm:$0xf]
    %v132 = vld [vmem:[#allocation7 + $0x30] sm:$0xf]
    %v133 = vld [vmem:[#allocation7 + $0x34] sm:$0xf]
    %v134 = vld [vmem:[#allocation7 + $0x38] sm:$0xf]
    %v135 = vld [vmem:[#allocation7 + $0x3c] sm:$0xf]
    %v136 = vld [vmem:[#allocation8] sm:$0x1]
    %v138 = vperm.slane %v136, 0
    %v156 = vunpack.c.l.b16 %v120
    %v157 = vunpack.c.l.b16 %v121
    %v158 = vunpack.c.l.b16 %v122
    %v159 = vunpack.c.l.b16 %v123
    %v160 = vunpack.c.l.b16 %v124
    %v161 = vunpack.c.l.b16 %v125
    %v162 = vunpack.c.l.b16 %v126
    %v163 = vunpack.c.l.b16 %v127
    %v164 = vunpack.c.l.b16 %v128
    %v165 = vunpack.c.l.b16 %v129
    %v166 = vunpack.c.l.b16 %v130
    %v167 = vunpack.c.l.b16 %v131
    %v168 = vunpack.c.l.b16 %v132
    %v169 = vunpack.c.l.b16 %v133
    %v170 = vunpack.c.l.b16 %v134
    %v171 = vunpack.c.l.b16 %v135
    %v172 = vpack.c.b16 %v157, %v156
    %v173 = vpack.c.b16 %v159, %v158
    %v174 = vpack.c.b16 %v161, %v160
    %v175 = vpack.c.b16 %v163, %v162
    %v176 = vpack.c.b16 %v165, %v164
    %v177 = vpack.c.b16 %v167, %v166
    %v178 = vpack.c.b16 %v169, %v168
    %v179 = vpack.c.b16 %v171, %v170
    %188 = vmatpush.bf16.msra.mxu0 %v179
    %189 = vmatpush.bf16.msra.mxu0 %v178
    %190 = vmatpush.bf16.msra.mxu0 %v177
    %191 = vmatpush.bf16.msra.mxu0 %v176
    %192 = vmatpush.bf16.msra.mxu0 %v175
    %193 = vmatpush.bf16.msra.mxu0 %v174
    %194 = vmatpush.bf16.msra.mxu0 %v173
    %195 = vmatpush.bf16.msra.mxu0 %v172
    %196 = vmatmul.bf16.gmra.mxu0 %v113
    %v197 = vpop.f32.mrf.mxu0
    %v198 = vadd.f32 %v138, %v197
    %v199 = vpop.f32.mrf.mxu0
    %v200 = vadd.f32 %v138, %v199
    %201 = vmatmul.bf16.gmra.mxu0 %v114
    %v202 = vpop.f32.mrf.mxu0
    %v203 = vadd.f32 %v138, %v202
    %v204 = vpop.f32.mrf.mxu0
    %v205 = vadd.f32 %v138, %v204
    %206 = vmatmul.bf16.gmra.mxu0 %v115
    %v207 = vpop.f32.mrf.mxu0
    %v208 = vadd.f32 %v138, %v207
    %v209 = vpop.f32.mrf.mxu0
    %v210 = vadd.f32 %v138, %v209
    %211 = vmatmul.bf16.gmra.mxu0 %v116
    %v212 = vpop.f32.mrf.mxu0
    %v213 = vadd.f32 %v138, %v212
    %v214 = vpop.f32.mrf.mxu0
    %v215 = vadd.f32 %v138, %v214
    %216 = vmatmul.bf16.gmra.mxu0 %v117
    %v217 = vpop.f32.mrf.mxu0
    %v218 = vadd.f32 %v138, %v217
    %v219 = vpop.f32.mrf.mxu0
    %v220 = vadd.f32 %v138, %v219
    %221 = vmatmul.bf16.gmra.mxu0 %v118
    %v222 = vpop.f32.mrf.mxu0
    %v223 = vadd.f32 %v138, %v222
    %v224 = vpop.f32.mrf.mxu0
    %v225 = vadd.f32 %v138, %v224
    %226 = vmatmul.bf16.gmra.mxu0 %v119
    %v227 = vpop.f32.mrf.mxu0
    %v228 = vadd.f32 %v138, %v227
    %v229 = vpop.f32.mrf.mxu0
    %230 = vdwg.mxu0
    %v231 = vtanh.pop %v198
    %v232 = vtanh.pop %v200
    %v233 = vtanh.pop %v203
    %v234 = vtanh.pop %v205
    %v235 = vtanh.pop %v208
    %v236 = vtanh.pop %v210
    %v237 = vtanh.pop %v213
    %v238 = vtanh.pop %v215
    %v239 = vtanh.pop %v218
    %v240 = vtanh.pop %v220
    %v241 = vtanh.pop %v223
    %v242 = vtanh.pop %v225
    %v243 = vtanh.pop %v228
    %v244 = vpack.c.bf16 %v232, %v231
    %v245 = vpack.c.bf16 %v234, %v233
    %v246 = vpack.c.bf16 %v236, %v235
    %v247 = vpack.c.bf16 %v238, %v237
    %v248 = vpack.c.bf16 %v240, %v239
    %v249 = vpack.c.bf16 %v242, %v241
    %v250 = vpack.c.bf16 %v243, %v243
    %s251 = scalar_lea.vmem [#allocation7], 64
    %v252 = vld [vmem:[%s251] sm:$0xf]
    %v253 = vld [vmem:[%s251 + $0x4] sm:$0xf]
    %v254 = vld [vmem:[%s251 + $0x8] sm:$0xf]
    %v255 = vld [vmem:[%s251 + $0xc] sm:$0xf]
    %v256 = vld [vmem:[%s251 + $0x10] sm:$0xf]
    %v257 = vld [vmem:[%s251 + $0x14] sm:$0xf]
    %v258 = vld [vmem:[%s251 + $0x18] sm:$0xf]
    %v259 = vld [vmem:[%s251 + $0x1c] sm:$0xf]
    %v260 = vld [vmem:[%s251 + $0x20] sm:$0xf]
    %v261 = vld [vmem:[%s251 + $0x24] sm:$0xf]
    %v262 = vld [vmem:[%s251 + $0x28] sm:$0xf]
    %v263 = vld [vmem:[%s251 + $0x2c] sm:$0xf]
    %v264 = vld [vmem:[%s251 + $0x30] sm:$0xf]
    %v265 = vld [vmem:[%s251 + $0x34] sm:$0xf]
    %v266 = vld [vmem:[%s251 + $0x38] sm:$0xf]
    %v267 = vld [vmem:[%s251 + $0x3c] sm:$0xf]
    %s268 = scalar_lea.vmem [#allocation8], 1
    %v269 = vld [vmem:[%s268] sm:$0x1]
    %v271 = vperm.slane %v269, 0
    %v289 = vunpack.c.l.b16 %v252
    %v290 = vunpack.c.l.b16 %v253
    %v291 = vunpack.c.l.b16 %v254
    %v292 = vunpack.c.l.b16 %v255
    %v293 = vunpack.c.l.b16 %v256
    %v294 = vunpack.c.l.b16 %v257
    %v295 = vunpack.c.l.b16 %v258
    %v296 = vunpack.c.l.b16 %v259
    %v297 = vunpack.c.l.b16 %v260
    %v298 = vunpack.c.l.b16 %v261
    %v299 = vunpack.c.l.b16 %v262
    %v300 = vunpack.c.l.b16 %v263
    %v301 = vunpack.c.l.b16 %v264
    %v302 = vunpack.c.l.b16 %v265
    %v303 = vunpack.c.l.b16 %v266
    %v304 = vunpack.c.l.b16 %v267
    %v305 = vpack.c.b16 %v290, %v289
    %v306 = vpack.c.b16 %v292, %v291
    %v307 = vpack.c.b16 %v294, %v293
    %v308 = vpack.c.b16 %v296, %v295
    %v309 = vpack.c.b16 %v298, %v297
    %v310 = vpack.c.b16 %v300, %v299
    %v311 = vpack.c.b16 %v302, %v301
    %v312 = vpack.c.b16 %v304, %v303
    %321 = vmatpush.bf16.msra.mxu0 %v312
    %322 = vmatpush.bf16.msra.mxu0 %v311
    %323 = vmatpush.bf16.msra.mxu0 %v310
    %324 = vmatpush.bf16.msra.mxu0 %v309
    %325 = vmatpush.bf16.msra.mxu0 %v308
    %326 = vmatpush.bf16.msra.mxu0 %v307
    %327 = vmatpush.bf16.msra.mxu0 %v306
    %328 = vmatpush.bf16.msra.mxu0 %v305
    %329 = vmatmul.bf16.gmra.mxu0 %v244
    %v330 = vpop.f32.mrf.mxu0
    %v331 = vadd.f32 %v271, %v330
    %v332 = vpop.f32.mrf.mxu0
    %v333 = vadd.f32 %v271, %v332
    %334 = vmatmul.bf16.gmra.mxu0 %v245
    %v335 = vpop.f32.mrf.mxu0
    %v336 = vadd.f32 %v271, %v335
    %v337 = vpop.f32.mrf.mxu0
    %v338 = vadd.f32 %v271, %v337
    %339 = vmatmul.bf16.gmra.mxu0 %v246
    %v340 = vpop.f32.mrf.mxu0
    %v341 = vadd.f32 %v271, %v340
    %v342 = vpop.f32.mrf.mxu0
    %v343 = vadd.f32 %v271, %v342
    %344 = vmatmul.bf16.gmra.mxu0 %v247
    %v345 = vpop.f32.mrf.mxu0
    %v346 = vadd.f32 %v271, %v345
    %v347 = vpop.f32.mrf.mxu0
    %v348 = vadd.f32 %v271, %v347
    %349 = vmatmul.bf16.gmra.mxu0 %v248
    %v350 = vpop.f32.mrf.mxu0
    %v351 = vadd.f32 %v271, %v350
    %v352 = vpop.f32.mrf.mxu0
    %v353 = vadd.f32 %v271, %v352
    %354 = vmatmul.bf16.gmra.mxu0 %v249
    %v355 = vpop.f32.mrf.mxu0
    %v356 = vadd.f32 %v271, %v355
    %v357 = vpop.f32.mrf.mxu0
    %v358 = vadd.f32 %v271, %v357
    %359 = vmatmul.bf16.gmra.mxu0 %v250
    %v360 = vpop.f32.mrf.mxu0
    %v361 = vadd.f32 %v271, %v360
    %v362 = vpop.f32.mrf.mxu0
    %363 = vdwg.mxu0
    %v364 = vtanh.pop %v331
    %v365 = vtanh.pop %v333
    %v366 = vtanh.pop %v336
    %v367 = vtanh.pop %v338
    %v368 = vtanh.pop %v341
    %v369 = vtanh.pop %v343
    %v370 = vtanh.pop %v346
    %v371 = vtanh.pop %v348
    %v372 = vtanh.pop %v351
    %v373 = vtanh.pop %v353
    %v374 = vtanh.pop %v356
    %v375 = vtanh.pop %v358
    %v376 = vtanh.pop %v361
    %v377 = vpack.c.bf16 %v365, %v364
    %v378 = vpack.c.bf16 %v367, %v366
    %v379 = vpack.c.bf16 %v369, %v368
    %v380 = vpack.c.bf16 %v371, %v370
    %v381 = vpack.c.bf16 %v373, %v372
    %v382 = vpack.c.bf16 %v375, %v374
    %v383 = vpack.c.bf16 %v376, %v376
    %s384 = scalar_lea.vmem [#allocation7], 128
    %v385 = vld [vmem:[%s384] sm:$0xf]
    %v386 = vld [vmem:[%s384 + $0x4] sm:$0xf]
    %v387 = vld [vmem:[%s384 + $0x8] sm:$0xf]
    %v388 = vld [vmem:[%s384 + $0xc] sm:$0xf]
    %v389 = vld [vmem:[%s384 + $0x10] sm:$0xf]
    %v390 = vld [vmem:[%s384 + $0x14] sm:$0xf]
    %v391 = vld [vmem:[%s384 + $0x18] sm:$0xf]
    %v392 = vld [vmem:[%s384 + $0x1c] sm:$0xf]
    %v393 = vld [vmem:[%s384 + $0x20] sm:$0xf]
    %v394 = vld [vmem:[%s384 + $0x24] sm:$0xf]
    %v395 = vld [vmem:[%s384 + $0x28] sm:$0xf]
    %v396 = vld [vmem:[%s384 + $0x2c] sm:$0xf]
    %v397 = vld [vmem:[%s384 + $0x30] sm:$0xf]
    %v398 = vld [vmem:[%s384 + $0x34] sm:$0xf]
    %v399 = vld [vmem:[%s384 + $0x38] sm:$0xf]
    %v400 = vld [vmem:[%s384 + $0x3c] sm:$0xf]
    %s401 = scalar_lea.vmem [#allocation8], 2
    %v402 = vld [vmem:[%s401] sm:$0x1]
    %v404 = vperm.slane %v402, 0
    %v422 = vunpack.c.l.b16 %v385
    %v423 = vunpack.c.l.b16 %v386
    %v424 = vunpack.c.l.b16 %v387
    %v425 = vunpack.c.l.b16 %v388
    %v426 = vunpack.c.l.b16 %v389
    %v427 = vunpack.c.l.b16 %v390
    %v428 = vunpack.c.l.b16 %v391
    %v429 = vunpack.c.l.b16 %v392
    %v430 = vunpack.c.l.b16 %v393
    %v431 = vunpack.c.l.b16 %v394
    %v432 = vunpack.c.l.b16 %v395
    %v433 = vunpack.c.l.b16 %v396
    %v434 = vunpack.c.l.b16 %v397
    %v435 = vunpack.c.l.b16 %v398
    %v436 = vunpack.c.l.b16 %v399
    %v437 = vunpack.c.l.b16 %v400
    %v438 = vpack.c.b16 %v423, %v422
    %v439 = vpack.c.b16 %v425, %v424
    %v440 = vpack.c.b16 %v427, %v426
    %v441 = vpack.c.b16 %v429, %v428
    %v442 = vpack.c.b16 %v431, %v430
    %v443 = vpack.c.b16 %v433, %v432
    %v444 = vpack.c.b16 %v435, %v434
    %v445 = vpack.c.b16 %v437, %v436
    %454 = vmatpush.bf16.msra.mxu0 %v445
    %455 = vmatpush.bf16.msra.mxu0 %v444
    %456 = vmatpush.bf16.msra.mxu0 %v443
    %457 = vmatpush.bf16.msra.mxu0 %v442
    %458 = vmatpush.bf16.msra.mxu0 %v441
    %459 = vmatpush.bf16.msra.mxu0 %v440
    %460 = vmatpush.bf16.msra.mxu0 %v439
    %461 = vmatpush.bf16.msra.mxu0 %v438
    %462 = vmatmul.bf16.gmra.mxu0 %v377
    %v463 = vpop.f32.mrf.mxu0
    %v464 = vadd.f32 %v404, %v463
    %v465 = vpop.f32.mrf.mxu0
    %v466 = vadd.f32 %v404, %v465
    %467 = vmatmul.bf16.gmra.mxu0 %v378
    %v468 = vpop.f32.mrf.mxu0
    %v469 = vadd.f32 %v404, %v468
    %v470 = vpop.f32.mrf.mxu0
    %v471 = vadd.f32 %v404, %v470
    %472 = vmatmul.bf16.gmra.mxu0 %v379
    %v473 = vpop.f32.mrf.mxu0
    %v474 = vadd.f32 %v404, %v473
    %v475 = vpop.f32.mrf.mxu0
    %v476 = vadd.f32 %v404, %v475
    %477 = vmatmul.bf16.gmra.mxu0 %v380
    %v478 = vpop.f32.mrf.mxu0
    %v479 = vadd.f32 %v404, %v478
    %v480 = vpop.f32.mrf.mxu0
    %v481 = vadd.f32 %v404, %v480
    %482 = vmatmul.bf16.gmra.mxu0 %v381
    %v483 = vpop.f32.mrf.mxu0
    %v484 = vadd.f32 %v404, %v483
    %v485 = vpop.f32.mrf.mxu0
    %v486 = vadd.f32 %v404, %v485
    %487 = vmatmul.bf16.gmra.mxu0 %v382
    %v488 = vpop.f32.mrf.mxu0
    %v489 = vadd.f32 %v404, %v488
    %v490 = vpop.f32.mrf.mxu0
    %v491 = vadd.f32 %v404, %v490
    %492 = vmatmul.bf16.gmra.mxu0 %v383
    %v493 = vpop.f32.mrf.mxu0
    %v494 = vadd.f32 %v404, %v493
    %v495 = vpop.f32.mrf.mxu0
    %496 = vdwg.mxu0
    %v497 = vtanh.pop %v464
    %v498 = vtanh.pop %v466
    %v499 = vtanh.pop %v469
    %v500 = vtanh.pop %v471
    %v501 = vtanh.pop %v474
    %v502 = vtanh.pop %v476
    %v503 = vtanh.pop %v479
    %v504 = vtanh.pop %v481
    %v505 = vtanh.pop %v484
    %v506 = vtanh.pop %v486
    %v507 = vtanh.pop %v489
    %v508 = vtanh.pop %v491
    %v509 = vtanh.pop %v494
    %v510 = vpack.c.bf16 %v498, %v497
    %v511 = vpack.c.bf16 %v500, %v499
    %v512 = vpack.c.bf16 %v502, %v501
    %v513 = vpack.c.bf16 %v504, %v503
    %v514 = vpack.c.bf16 %v506, %v505
    %v515 = vpack.c.bf16 %v508, %v507
    %v516 = vpack.c.bf16 %v509, %v509
    %v517 = vld [vmem:[#allocation10] sm:$0xf]
    %v518 = vld [vmem:[#allocation10 + $0x4] sm:$0xf]
    %v519 = vld [vmem:[#allocation10 + $0x8] sm:$0xf]
    %v520 = vld [vmem:[#allocation10 + $0xc] sm:$0xf]
    %v521 = vld [vmem:[#allocation10 + $0x10] sm:$0xf]
    %v522 = vld [vmem:[#allocation10 + $0x14] sm:$0xf]
    %v523 = vld [vmem:[#allocation10 + $0x18] sm:$0xf]
    %v524 = vld [vmem:[#allocation10 + $0x1c] sm:$0xf]
    %v525 = vld [vmem:[#allocation10 + $0x20] sm:$0xf]
    %v526 = vld [vmem:[#allocation10 + $0x24] sm:$0xf]
    %v527 = vld [vmem:[#allocation10 + $0x28] sm:$0xf]
    %v528 = vld [vmem:[#allocation10 + $0x2c] sm:$0xf]
    %v529 = vld [vmem:[#allocation10 + $0x30] sm:$0xf]
    %v530 = vld [vmem:[#allocation10 + $0x34] sm:$0xf]
    %v531 = vld [vmem:[#allocation10 + $0x38] sm:$0xf]
    %v532 = vld [vmem:[#allocation10 + $0x3c] sm:$0xf]
    %v533 = vld [vmem:[%s5] sm:$0x1]
    %v535 = vperm.slane %v533, 0
    %v553 = vunpack.c.l.b16 %v517
    %v554 = vunpack.c.l.b16 %v518
    %v555 = vunpack.c.l.b16 %v519
    %v556 = vunpack.c.l.b16 %v520
    %v557 = vunpack.c.l.b16 %v521
    %v558 = vunpack.c.l.b16 %v522
    %v559 = vunpack.c.l.b16 %v523
    %v560 = vunpack.c.l.b16 %v524
    %v561 = vunpack.c.l.b16 %v525
    %v562 = vunpack.c.l.b16 %v526
    %v563 = vunpack.c.l.b16 %v527
    %v564 = vunpack.c.l.b16 %v528
    %v565 = vunpack.c.l.b16 %v529
    %v566 = vunpack.c.l.b16 %v530
    %v567 = vunpack.c.l.b16 %v531
    %v568 = vunpack.c.l.b16 %v532
    %v569 = vpack.c.b16 %v554, %v553
    %v570 = vpack.c.b16 %v556, %v555
    %v571 = vpack.c.b16 %v558, %v557
    %v572 = vpack.c.b16 %v560, %v559
    %v573 = vpack.c.b16 %v562, %v561
    %v574 = vpack.c.b16 %v564, %v563
    %v575 = vpack.c.b16 %v566, %v565
    %v576 = vpack.c.b16 %v568, %v567
    %585 = vmatpush.bf16.msra.mxu0 %v576
    %586 = vmatpush.bf16.msra.mxu0 %v575
    %587 = vmatpush.bf16.msra.mxu0 %v574
    %588 = vmatpush.bf16.msra.mxu0 %v573
    %589 = vmatpush.bf16.msra.mxu0 %v572
    %590 = vmatpush.bf16.msra.mxu0 %v571
    %591 = vmatpush.bf16.msra.mxu0 %v570
    %592 = vmatpush.bf16.msra.mxu0 %v569
    %593 = vmatmul.bf16.gmra.mxu0 %v510
    %v594 = vpop.f32.mrf.mxu0
    %v595 = vadd.f32 %v535, %v594
    %v596 = vpop.f32.mrf.mxu0
    %v597 = vadd.f32 %v535, %v596
    %598 = vmatmul.bf16.gmra.mxu0 %v511
    %v599 = vpop.f32.mrf.mxu0
    %v600 = vadd.f32 %v535, %v599
    %v601 = vpop.f32.mrf.mxu0
    %v602 = vadd.f32 %v535, %v601
    %603 = vmatmul.bf16.gmra.mxu0 %v512
    %v604 = vpop.f32.mrf.mxu0
    %v605 = vadd.f32 %v535, %v604
    %v606 = vpop.f32.mrf.mxu0
    %v607 = vadd.f32 %v535, %v606
    %608 = vmatmul.bf16.gmra.mxu0 %v513
    %v609 = vpop.f32.mrf.mxu0
    %v610 = vadd.f32 %v535, %v609
    %v611 = vpop.f32.mrf.mxu0
    %v612 = vadd.f32 %v535, %v611
    %613 = vmatmul.bf16.gmra.mxu0 %v514
    %v614 = vpop.f32.mrf.mxu0
    %v615 = vadd.f32 %v535, %v614
    %v616 = vpop.f32.mrf.mxu0
    %v617 = vadd.f32 %v535, %v616
    %618 = vmatmul.bf16.gmra.mxu0 %v515
    %v619 = vpop.f32.mrf.mxu0
    %v620 = vadd.f32 %v535, %v619
    %v621 = vpop.f32.mrf.mxu0
    %v622 = vadd.f32 %v535, %v621
    %623 = vmatmul.bf16.gmra.mxu0 %v516
    %v624 = vpop.f32.mrf.mxu0
    %v625 = vadd.f32 %v535, %v624
    %v626 = vpop.f32.mrf.mxu0
    %627 = vdwg.mxu0
    %628 = vst [vmem:[#allocation11] sm:$0xff] %v595
    %629 = vst [vmem:[#allocation11 + $0x8] sm:$0xff] %v597
    %630 = vst [vmem:[#allocation11 + $0x10] sm:$0xff] %v600
    %631 = vst [vmem:[#allocation11 + $0x18] sm:$0xff] %v602
    %632 = vst [vmem:[#allocation11 + $0x20] sm:$0xff] %v605
    %633 = vst [vmem:[#allocation11 + $0x28] sm:$0xff] %v607
    %634 = vst [vmem:[#allocation11 + $0x30] sm:$0xff] %v610
    %635 = vst [vmem:[#allocation11 + $0x38] sm:$0xff] %v612
    %636 = vst [vmem:[#allocation11 + $0x40] sm:$0xff] %v615
    %637 = vst [vmem:[#allocation11 + $0x48] sm:$0xff] %v617
    %638 = vst [vmem:[#allocation11 + $0x50] sm:$0xff] %v620
    %639 = vst [vmem:[#allocation11 + $0x58] sm:$0xff] %v622
    %640 = vst [vmem:[#allocation11 + $0x60] sm:$0xff] %v625
    // Predicated region
    $region46: #{tpu_custom_call.1} parent=1 // pred_check
      _
    $region47: #{tpu_custom_call.1} parent=1 // pred_check_branch
      %642 = sbr.rel (0) target = $region49
    $region48: #{tpu_custom_call.1} parent=1 // pred_region
      %644 = vsyncadd [#allocation4], 0
      %s645 = sshll.u32 [#allocation11], 4
      %s646 = int_to_ptr.vmem [resolvable:$true] %s645
      %s647 = sshll.u32 %s6, 4
      %s648 = int_to_ptr.hbm [resolvable:$true] %s647
      %653 = dma.vmem_to_hbm [thread:$0]  %s646, 1664, %s648, [#allocation4], 128, 128, 8
    $region49: #{tpu_custom_call.1} parent=1 // pred_fallthru
      _
    // Predicated region
    $region50: #{tpu_custom_call.1} parent=1 // pred_check
      _
    $region51: #{tpu_custom_call.1} parent=1 // pred_check_branch
      %655 = sbr.rel (0) target = $region53
    $region52: #{tpu_custom_call.1} parent=1 // pred_region
      %657 = dma.done [#allocation4], 1664
    $region53: #{tpu_custom_call.1} parent=1 // pred_fallthru
      _
    %658 = vsyncpa [#allocation3], 1
    %659 = vsyncpa [#allocation6], 1
    %660 = vsyncpa [#allocation9], 1
    %661 = vsyncpa [#allocation4], 1

</llo_original>
